<compile_context>
chip_gen: v7x
topology: tpu7x:2x2x1
jax: 0.10.0
libtpu: 0.0.40
codegen_flags: <defaults>
</compile_context>

<pallas_src>
import functools
import math

import jax
import jax.numpy as jnp
from jax import lax
from jax.experimental import pallas as pl
from jax.experimental.pallas import tpu as pltpu

EPS = 1e-6  # timm uses nn.LayerNorm(eps=1e-6)

# Flipped to False at runtime if this jax/libtpu rejects single-buffered specs.
_SINGLE_BUFFER_WEIGHTS = [True]


def _layernorm(x, g, b):
    mu = jnp.mean(x, axis=-1, keepdims=True)
    var = jnp.mean(jnp.square(x - mu), axis=-1, keepdims=True)
    return (x - mu) * lax.rsqrt(var + EPS) * g + b


def _vit_block_kernel(x_ref, ln1_g, ln1_b, qkv_w, qkv_b, proj_w, proj_b,
                      ln2_g, ln2_b, fc1_w, fc1_b, fc2_w, fc2_b,
                      fin_g, fin_b, o_ref, acc_ref,
                      *, num_heads, head_dim, n_true, apply_final_norm):
    """One transformer block for one batch element (token block (1, Np, D))."""
    x = x_ref[0]                               # (Np, D) f32 residual stream
    Np, D = x.shape
    hd = head_dim

    # ------------------------------ attention ------------------------------
    xn = _layernorm(x, ln1_g[...], ln1_b[...]).astype(jnp.bfloat16)

    # Padded key columns -> additive -inf bias, computed once (hoisted out of
    # the head loop).  Safe because n_true >= 1 (every row has a real key).
    if n_true != Np:
        key_mask = lax.broadcasted_iota(jnp.int32, (1, Np), 1) < n_true
        mask_bias = jnp.where(key_mask, 0.0, -jnp.inf).astype(jnp.float32)
    else:
        mask_bias = None

    acc_ref[...] = jnp.zeros_like(acc_ref)

    def head_body(h, carry):
        # qkv_w / proj_w are pre-split per head -> only major-dim dynamic ref
        # indexing (cheap, layout-preserving).  1/sqrt(hd) is pre-folded into
        # the Q columns of qkv_w / qkv_b.
        qkv_h = jnp.dot(xn, qkv_w[h],
                        preferred_element_type=jnp.float32) + qkv_b[h]
        qh = qkv_h[:, 0:hd].astype(jnp.bfloat16)
        kh = qkv_h[:, hd:2 * hd].astype(jnp.bfloat16)
        vh = qkv_h[:, 2 * hd:3 * hd].astype(jnp.bfloat16)
        # contract last dims of both operands -> no explicit kh.T / relayout
        s = lax.dot_general(qh, kh, (((1,), (1,)), ((), ())),
                            preferred_element_type=jnp.float32)      # (Np, Np)
        if mask_bias is not None:
            s = s + mask_bias
        s = s - jnp.max(s, axis=-1, keepdims=True)
        p = jnp.exp(s)
        p = p * pl.reciprocal(jnp.sum(p, axis=-1, keepdims=True), approx=True)
        o_h = jnp.dot(p.astype(jnp.bfloat16), vh,
                      preferred_element_type=jnp.float32)             # (Np, hd)
        # accumulate this head's contribution to the output projection
        acc_ref[...] += jnp.dot(o_h.astype(jnp.bfloat16), proj_w[h],
                                preferred_element_type=jnp.float32)
        return carry

    lax.fori_loop(0, num_heads, head_body, 0)
    x = x + acc_ref[...] + proj_b[...]

    # -------------------------------- MLP ----------------------------------
    # TODO(synk): for ViT-L/H on v7x (64 MiB VMEM) stream fc1_w / fc2_w in
    # K-chunks via pltpu.emit_pipeline instead of keeping them fully resident.
    xn2 = _layernorm(x, ln2_g[...], ln2_b[...]).astype(jnp.bfloat16)
    h1 = jnp.dot(xn2, fc1_w[...], preferred_element_type=jnp.float32) + fc1_b[...]
    h1 = jax.nn.gelu(h1, approximate=True)      # tanh GELU -> EUP slot (erf = heavy VPU poly)
    x = x + jnp.dot(h1.astype(jnp.bfloat16), fc2_w[...],
                    preferred_element_type=jnp.float32) + fc2_b[...]

    if apply_final_norm:                        # fused final LayerNorm (last block)
        x = _layernorm(x, fin_g[...], fin_b[...])
    o_ref[0] = x


def _nbytes(shape, dtype):
    return math.prod(shape) * jnp.dtype(dtype).itemsize


def _vmem_cap_bytes():
    # Per-generation cap with headroom for compiler-internal scratch:
    # ~52 MiB on v7x (64 MiB physical), ~105 MiB on v5e/v6e (128 MiB physical).
    try:
        cap = int(pltpu.get_tpu_info().vmem_capacity_bytes)
    except Exception:
        cap = 64 * 2 ** 20
    return int(0.82 * cap)


def vit_block_pallas(x, lp, final_g, final_b, num_heads, *,
                     n_true, apply_final_norm):
    """Apply one transformer block.  x: (B, Np, D) f32, lp: prepared params."""
    B, Np, D = x.shape
    H = num_heads
    hd = D // H
    Dh = lp["fc1_w"].shape[1]

    weights = (lp["ln1_g"], lp["ln1_b"], lp["qkv_w"], lp["qkv_b"],
               lp["proj_w"], lp["proj_b"], lp["ln2_g"], lp["ln2_b"],
               lp["fc1_w"], lp["fc1_b"], lp["fc2_w"], lp["fc2_b"],
               final_g, final_b)

    tok_spec = pl.BlockSpec((1, Np, D), lambda b: (b, 0, 0))
    kernel = functools.partial(_vit_block_kernel, num_heads=H, head_dim=hd,
                               n_true=n_true,
                               apply_final_norm=apply_final_norm)

    def build_and_call(single_buffer):
        def wspec(shape):
            idx = lambda b: (0,) * len(shape)
            if single_buffer:
                # grid-invariant weights: one VMEM buffer is enough
                return pl.BlockSpec(shape, idx, pipeline_mode=pl.Buffered(1))
            return pl.BlockSpec(shape, idx)

        in_specs = [tok_spec] + [wspec(tuple(w.shape)) for w in weights]

        # Explicit VMEM budget from the actual block sizes (double-buffered
        # tokens, single- or double-buffered weights, scratch, intermediates).
        wb = 1 if single_buffer else 2
        est = (
            4 * _nbytes((Np, D), jnp.float32)                    # token in/out, 2x buffered
            + wb * sum(_nbytes(w.shape, w.dtype) for w in weights)
            + _nbytes((Np, D), jnp.float32)                      # proj accumulator scratch
            + _nbytes((Np, D), jnp.bfloat16)                     # LN(x) bf16
            + 2 * _nbytes((Np, Np), jnp.float32)                 # scores / probs
            + _nbytes((Np, 3 * hd), jnp.float32)                 # per-head qkv
            + 3 * _nbytes((Np, hd), jnp.bfloat16)                # q/k/v head slabs
            + _nbytes((Np, Dh), jnp.float32)                     # MLP hidden (f32)
            + _nbytes((Np, Dh), jnp.bfloat16)                    # MLP hidden (bf16)
            + 2 * _nbytes((Np, D), jnp.float32)                  # misc temporaries
        )
        vmem_limit = int(min(max(int(1.25 * est), 32 * 2 ** 20), _vmem_cap_bytes()))

        # TODO(synk): v7x megacore only splits this batch axis across its two
        # TensorCores; for B == 1 (or odd B) add a second "parallel" axis
        # (e.g. head groups / query-row tiles) to keep both cores busy.
        return pl.pallas_call(
            kernel,
            out_shape=jax.ShapeDtypeStruct((B, Np, D), jnp.float32),
            grid=(B,),
            in_specs=in_specs,
            out_specs=tok_spec,
            scratch_shapes=[pltpu.VMEM((Np, D), jnp.float32)],
            compiler_params=pltpu.CompilerParams(
                dimension_semantics=("parallel",),
                vmem_limit_bytes=vmem_limit),
        )(x, *weights)

    if _SINGLE_BUFFER_WEIGHTS[0]:
        try:
            return build_and_call(True)
        except Exception:
            _SINGLE_BUFFER_WEIGHTS[0] = False
    return build_and_call(False)


def prepare_params(layer_params, num_heads):
    """One-time conversion of f32 params to the kernel-ready representation:
    1/sqrt(hd) folded into Q columns, bf16 weight casts, qkv/proj split per
    head.  Call once at setup — NOT per forward pass."""
    prepared = []
    for p in layer_params:
        D = p["qkv_w"].shape[0]
        H = num_heads
        hd = D // H
        scale = hd ** -0.5
        wq = (p["qkv_w"][:, 0:D] * scale).reshape(D, H, hd)
        wk = p["qkv_w"][:, D:2 * D].reshape(D, H, hd)
        wv = p["qkv_w"][:, 2 * D:3 * D].reshape(D, H, hd)
        qkv_w = jnp.transpose(jnp.concatenate([wq, wk, wv], axis=-1),
                              (1, 0, 2)).astype(jnp.bfloat16)      # (H, D, 3*hd)
        bq = (p["qkv_b"][0, 0:D] * scale).reshape(H, 1, hd)
        bk = p["qkv_b"][0, D:2 * D].reshape(H, 1, hd)
        bv = p["qkv_b"][0, 2 * D:3 * D].reshape(H, 1, hd)
        qkv_b = jnp.concatenate([bq, bk, bv], axis=-1)              # (H, 1, 3*hd) f32
        prepared.append(dict(
            ln1_g=p["ln1_g"], ln1_b=p["ln1_b"],
            qkv_w=qkv_w, qkv_b=qkv_b,
            proj_w=p["proj_w"].reshape(H, hd, D).astype(jnp.bfloat16),
            proj_b=p["proj_b"],
            ln2_g=p["ln2_g"], ln2_b=p["ln2_b"],
            fc1_w=p["fc1_w"].astype(jnp.bfloat16), fc1_b=p["fc1_b"],
            fc2_w=p["fc2_w"].astype(jnp.bfloat16), fc2_b=p["fc2_b"],
        ))
    return prepared


def vit_blocks_pallas(x, prepared_layers, final_g, final_b, num_heads,
                      end_norm=True):
    B, N, D = x.shape
    Np = ((N + 127) // 128) * 128          # lane-dense token count
    if Np != N:
        x = jnp.pad(x, ((0, 0), (0, Np - N), (0, 0)))
    depth = len(prepared_layers)
    for i, lp in enumerate(prepared_layers):
        x = vit_block_pallas(
            x, lp, final_g, final_b, num_heads, n_true=N,
            apply_final_norm=(end_norm and i == depth - 1))
    if Np != N:
        x = x[:, :N, :]
    return x


# ------------------------------ pure-JAX reference ------------------------------
def _ref_block(x, p, num_heads):
    B, N, D = x.shape
    hd = D // num_heads
    xn = _layernorm(x, p["ln1_g"][0], p["ln1_b"][0])
    qkv = xn @ p["qkv_w"] + p["qkv_b"][0]
    q, k, v = qkv[..., :D], qkv[..., D:2 * D], qkv[..., 2 * D:]

    def split(t):  # (B, N, D) -> (B, H, N, hd)
        return t.reshape(B, N, num_heads, hd).transpose(0, 2, 1, 3)

    q, k, v = split(q) * hd ** -0.5, split(k), split(v)
    s = jnp.einsum("bhnd,bhmd->bhnm", q, k)
    p_attn = jax.nn.softmax(s, axis=-1)
    a = jnp.einsum("bhnm,bhmd->bhnd", p_attn, v).transpose(0, 2, 1, 3).reshape(B, N, D)
    x = x + (a @ p["proj_w"] + p["proj_b"][0])
    xn2 = _layernorm(x, p["ln2_g"][0], p["ln2_b"][0])
    h = jax.nn.gelu(xn2 @ p["fc1_w"] + p["fc1_b"][0], approximate=False)
    return x + (h @ p["fc2_w"] + p["fc2_b"][0])


def _ref_forward(x, layer_params, final_g, final_b, num_heads):
    for p in layer_params:
        x = _ref_block(x, p, num_heads)
    return _layernorm(x, final_g[0], final_b[0])


# ------------------------------ deterministic params ----------------------------
def make_params(key, depth, D, mlp_ratio=4):
    Dh = D * mlp_ratio
    layers = []
    for _ in range(depth):
        keys = jax.random.split(key, 5)
        key = keys[0]
        layers.append(dict(
            ln1_g=jnp.ones((1, D), jnp.float32),
            ln1_b=jnp.zeros((1, D), jnp.float32),
            qkv_w=0.02 * jax.random.normal(keys[1], (D, 3 * D), jnp.float32),
            qkv_b=jnp.zeros((1, 3 * D), jnp.float32),
            proj_w=0.02 * jax.random.normal(keys[2], (D, D), jnp.float32),
            proj_b=jnp.zeros((1, D), jnp.float32),
            ln2_g=jnp.ones((1, D), jnp.float32),
            ln2_b=jnp.zeros((1, D), jnp.float32),
            fc1_w=0.02 * jax.random.normal(keys[3], (D, Dh), jnp.float32),
            fc1_b=jnp.zeros((1, Dh), jnp.float32),
            fc2_w=0.02 * jax.random.normal(keys[4], (Dh, D), jnp.float32),
            fc2_b=jnp.zeros((1, D), jnp.float32),
        ))
    final_g = jnp.ones((1, D), jnp.float32)
    final_b = jnp.zeros((1, D), jnp.float32)
    return layers, final_g, final_b


if __name__ == "__main__":
    # small config consistent with the module (width, depth, num_heads scaled down)
    B, N, D, H, DEPTH = 2, 8, 32, 4, 2

    key = jax.random.PRNGKey(0)
    k_x, k_p = jax.random.split(key)
    x = jax.random.normal(k_x, (B, N, D), jnp.float32)
    layer_params, final_g, final_b = make_params(k_p, DEPTH, D)

    # one-time weight preparation (bf16, per-head split, folded 1/sqrt(hd))
    prepared = prepare_params(layer_params, H)

    out = vit_blocks_pallas(x, prepared, final_g, final_b, H)
    out = jax.block_until_ready(out)

    ref = _ref_forward(x, layer_params, final_g, final_b, H)
    assert out.shape == (B, N, D)
    assert bool(jnp.all(jnp.isfinite(out)))
    # bf16 MXU inputs, approx softmax reciprocal and tanh-GELU are deliberate
    # precision trades; compare against the exact-f32 reference loosely.
    assert bool(jnp.allclose(out, ref, atol=3e-2, rtol=3e-2)), "mismatch vs JAX reference"

    print("KERNEL_OK")
</pallas_src>

<mosaic_0001>
module attributes {stable_mosaic.version = 11 : i64} {
  func.func @_vit_block_kernel(%arg0: i32, %arg1: memref<1x128x32xf32, #tpu.memory_space<vmem>>, %arg2: memref<1x32xf32, #tpu.memory_space<vmem>>, %arg3: memref<1x32xf32, #tpu.memory_space<vmem>>, %arg4: memref<4x32x24xbf16, #tpu.memory_space<vmem>>, %arg5: memref<4x1x24xf32, #tpu.memory_space<vmem>>, %arg6: memref<4x8x32xbf16, #tpu.memory_space<vmem>>, %arg7: memref<1x32xf32, #tpu.memory_space<vmem>>, %arg8: memref<1x32xf32, #tpu.memory_space<vmem>>, %arg9: memref<1x32xf32, #tpu.memory_space<vmem>>, %arg10: memref<32x128xbf16, #tpu.memory_space<vmem>>, %arg11: memref<1x128xf32, #tpu.memory_space<vmem>>, %arg12: memref<128x32xbf16, #tpu.memory_space<vmem>>, %arg13: memref<1x32xf32, #tpu.memory_space<vmem>>, %arg14: memref<1x32xf32, #tpu.memory_space<vmem>>, %arg15: memref<1x32xf32, #tpu.memory_space<vmem>>, %arg16: memref<1x128x32xf32, #tpu.memory_space<vmem>>, %arg17: memref<128x32xf32, #tpu.memory_space<vmem>>) attributes {dimension_semantics = [#tpu.dimension_semantics<parallel>], iteration_bounds = array<i64: 2>, scalar_prefetch = 0 : i64, scratch_operands = 1 : i64, tpu.core_type = #tpu.core_type<tc>, window_params = [{transform_indices = @transform_0, window_bounds = array<i64: 1, 128, 32>}, {pipeline_mode = #tpu.pipeline_mode<synchronous>, transform_indices = @transform_1, window_bounds = array<i64: 1, 32>}, {pipeline_mode = #tpu.pipeline_mode<synchronous>, transform_indices = @transform_2, window_bounds = array<i64: 1, 32>}, {pipeline_mode = #tpu.pipeline_mode<synchronous>, transform_indices = @transform_3, window_bounds = array<i64: 4, 32, 24>}, {pipeline_mode = #tpu.pipeline_mode<synchronous>, transform_indices = @transform_4, window_bounds = array<i64: 4, 1, 24>}, {pipeline_mode = #tpu.pipeline_mode<synchronous>, transform_indices = @transform_5, window_bounds = array<i64: 4, 8, 32>}, {pipeline_mode = #tpu.pipeline_mode<synchronous>, transform_indices = @transform_6, window_bounds = array<i64: 1, 32>}, {pipeline_mode = #tpu.pipeline_mode<synchronous>, transform_indices = @transform_7, window_bounds = array<i64: 1, 32>}, {pipeline_mode = #tpu.pipeline_mode<synchronous>, transform_indices = @transform_8, window_bounds = array<i64: 1, 32>}, {pipeline_mode = #tpu.pipeline_mode<synchronous>, transform_indices = @transform_9, window_bounds = array<i64: 32, 128>}, {pipeline_mode = #tpu.pipeline_mode<synchronous>, transform_indices = @transform_10, window_bounds = array<i64: 1, 128>}, {pipeline_mode = #tpu.pipeline_mode<synchronous>, transform_indices = @transform_11, window_bounds = array<i64: 128, 32>}, {pipeline_mode = #tpu.pipeline_mode<synchronous>, transform_indices = @transform_12, window_bounds = array<i64: 1, 32>}, {pipeline_mode = #tpu.pipeline_mode<synchronous>, transform_indices = @transform_13, window_bounds = array<i64: 1, 32>}, {pipeline_mode = #tpu.pipeline_mode<synchronous>, transform_indices = @transform_14, window_bounds = array<i64: 1, 32>}, {transform_indices = @transform_15, window_bounds = array<i64: 1, 128, 32>}]} {
    %c0 = arith.constant 0 : index
    %c0_0 = arith.constant 0 : index
    %c0_1 = arith.constant 0 : index
    %0 = vector.load %arg1[%c0, %c0_0, %c0_1] : memref<1x128x32xf32, #tpu.memory_space<vmem>>, vector<1x128x32xf32>
    %1 = vector.shape_cast %0 : vector<1x128x32xf32> to vector<128x32xf32>
    %c0_2 = arith.constant 0 : index
    %c0_3 = arith.constant 0 : index
    %2 = vector.load %arg2[%c0_2, %c0_3] : memref<1x32xf32, #tpu.memory_space<vmem>>, vector<1x32xf32>
    %c0_4 = arith.constant 0 : index
    %c0_5 = arith.constant 0 : index
    %3 = vector.load %arg3[%c0_4, %c0_5] : memref<1x32xf32, #tpu.memory_space<vmem>>, vector<1x32xf32>
    %cst = arith.constant dense<0.000000e+00> : vector<128xf32>
    %4 = vector.multi_reduction <add>, %1, %cst [1] : vector<128x32xf32> to vector<128xf32>
    %5 = vector.shape_cast %4 : vector<128xf32> to vector<128x1xf32>
    %cst_6 = arith.constant 3.200000e+01 : f32
    %6 = vector.broadcast %cst_6 : f32 to vector<128x1xf32>
    %7 = arith.divf %5, %6 : vector<128x1xf32>
    %8 = vector.broadcast %7 : vector<128x1xf32> to vector<128x32xf32>
    %9 = arith.subf %1, %8 : vector<128x32xf32>
    %10 = arith.mulf %9, %9 : vector<128x32xf32>
    %cst_7 = arith.constant dense<0.000000e+00> : vector<128xf32>
    %11 = vector.multi_reduction <add>, %10, %cst_7 [1] : vector<128x32xf32> to vector<128xf32>
    %12 = vector.shape_cast %11 : vector<128xf32> to vector<128x1xf32>
    %cst_8 = arith.constant 3.200000e+01 : f32
    %13 = vector.broadcast %cst_8 : f32 to vector<128x1xf32>
    %14 = arith.divf %12, %13 : vector<128x1xf32>
    %15 = vector.broadcast %7 : vector<128x1xf32> to vector<128x32xf32>
    %16 = arith.subf %1, %15 : vector<128x32xf32>
    %cst_9 = arith.constant 9.99999997E-7 : f32
    %17 = vector.broadcast %cst_9 : f32 to vector<128x1xf32>
    %18 = arith.addf %14, %17 : vector<128x1xf32>
    %19 = math.rsqrt %18 : vector<128x1xf32>
    %20 = vector.broadcast %19 : vector<128x1xf32> to vector<128x32xf32>
    %21 = arith.mulf %16, %20 : vector<128x32xf32>
    %22 = vector.broadcast %2 : vector<1x32xf32> to vector<128x32xf32>
    %23 = arith.mulf %21, %22 : vector<128x32xf32>
    %24 = vector.broadcast %3 : vector<1x32xf32> to vector<128x32xf32>
    %25 = arith.addf %23, %24 : vector<128x32xf32>
    %26 = arith.truncf %25 : vector<128x32xf32> to vector<128x32xbf16>
    %27 = tpu.iota {dimensions = array<i32: 1>} : vector<1x128xi32>
    %c8_i32 = arith.constant 8 : i32
    %28 = vector.broadcast %c8_i32 : i32 to vector<1x128xi32>
    %29 = arith.cmpi slt, %27, %28 : vector<1x128xi32>
    %cst_10 = arith.constant 0.000000e+00 : f32
    %cst_11 = arith.constant 0xFF800000 : f32
    %30 = vector.broadcast %cst_10 : f32 to vector<1x128xf32>
    %31 = vector.broadcast %cst_11 : f32 to vector<1x128xf32>
    %32 = arith.select %29, %30, %31 : vector<1x128xi1>, vector<1x128xf32>
    %cst_12 = arith.constant 0.000000e+00 : f32
    %33 = vector.broadcast %cst_12 : f32 to vector<128x32xf32>
    %c0_13 = arith.constant 0 : index
    %c0_14 = arith.constant 0 : index
    %34 = vector.load %arg17[%c0_13, %c0_14] : memref<128x32xf32, #tpu.memory_space<vmem>>, vector<128x32xf32>
    tpu.vector_store %arg17[%c0_13, %c0_14], %33 {strides = array<i32>} : memref<128x32xf32, #tpu.memory_space<vmem>>, vector<128x32xf32>,
    %c0_i32 = arith.constant 0 : i32
    %c4_i32 = arith.constant 4 : i32
    %35 = arith.addi %c0_i32, %c4_i32 : i32
    %c1_i32 = arith.constant 1 : i32
    scf.for %arg18 = %c0_i32 to %35 step %c1_i32  : i32 {
      %94 = arith.index_cast %arg18 : i32 to index
      %c0_46 = arith.constant 0 : index
      %c0_47 = arith.constant 0 : index
      %95 = vector.load %arg4[%94, %c0_46, %c0_47] : memref<4x32x24xbf16, #tpu.memory_space<vmem>>, vector<1x32x24xbf16>
      %96 = vector.shape_cast %95 : vector<1x32x24xbf16> to vector<32x24xbf16>
      %cst_48 = arith.constant dense<0.000000e+00> : vector<128x24xf32>
      %97 = tpu.matmul %26, %96, %cst_48 {dimension_numbers = #tpu.dot_dimension_numbers<[1], [0], [0], [1], [0, 0, 1, 1], [], []>} : vector<128x32xbf16>, vector<32x24xbf16>, vector<128x24xf32> -> vector<128x24xf32>
      %98 = arith.index_cast %arg18 : i32 to index
      %c0_49 = arith.constant 0 : index
      %c0_50 = arith.constant 0 : index
      %99 = vector.load %arg5[%98, %c0_49, %c0_50] : memref<4x1x24xf32, #tpu.memory_space<vmem>>, vector<1x1x24xf32>
      %100 = vector.shape_cast %99 : vector<1x1x24xf32> to vector<1x24xf32>
      %101 = vector.broadcast %100 : vector<1x24xf32> to vector<128x24xf32>
      %102 = arith.addf %97, %101 : vector<128x24xf32>
      %103 = vector.extract_strided_slice %102 {offsets = [0, 0], sizes = [128, 8], strides = [1, 1]} : vector<128x24xf32> to vector<128x8xf32>
      %104 = arith.truncf %103 : vector<128x8xf32> to vector<128x8xbf16>
      %105 = vector.extract_strided_slice %102 {offsets = [0, 8], sizes = [128, 8], strides = [1, 1]} : vector<128x24xf32> to vector<128x8xf32>
      %106 = arith.truncf %105 : vector<128x8xf32> to vector<128x8xbf16>
      %107 = vector.extract_strided_slice %102 {offsets = [0, 16], sizes = [128, 8], strides = [1, 1]} : vector<128x24xf32> to vector<128x8xf32>
      %108 = arith.truncf %107 : vector<128x8xf32> to vector<128x8xbf16>
      %cst_51 = arith.constant dense<0.000000e+00> : vector<128x128xf32>
      %109 = tpu.matmul %104, %106, %cst_51 {dimension_numbers = #tpu.dot_dimension_numbers<[1], [1], [0], [0], [0, 0, 1, 0], [], []>} : vector<128x8xbf16>, vector<128x8xbf16>, vector<128x128xf32> -> vector<128x128xf32>
      %110 = vector.broadcast %32 : vector<1x128xf32> to vector<128x128xf32>
      %111 = arith.addf %109, %110 : vector<128x128xf32>
      %cst_52 = arith.constant dense<0xFF800000> : vector<128xf32>
      %112 = vector.multi_reduction <maximumf>, %111, %cst_52 [1] : vector<128x128xf32> to vector<128xf32>
      %113 = vector.shape_cast %112 : vector<128xf32> to vector<128x1xf32>
      %114 = vector.broadcast %113 : vector<128x1xf32> to vector<128x128xf32>
      %115 = arith.subf %111, %114 : vector<128x128xf32>
      %116 = math.exp %115 : vector<128x128xf32>
      %cst_53 = arith.constant dense<0.000000e+00> : vector<128xf32>
      %117 = vector.multi_reduction <add>, %116, %cst_53 [1] : vector<128x128xf32> to vector<128xf32>
      %118 = vector.shape_cast %117 : vector<128xf32> to vector<128x1xf32>
      %119 = tpu.reciprocal %118 {approx = true} : vector<128x1xf32> -> vector<128x1xf32>
      %120 = vector.broadcast %119 : vector<128x1xf32> to vector<128x128xf32>
      %121 = arith.mulf %116, %120 : vector<128x128xf32>
      %122 = arith.truncf %121 : vector<128x128xf32> to vector<128x128xbf16>
      %cst_54 = arith.constant dense<0.000000e+00> : vector<128x8xf32>
      %123 = tpu.matmul %122, %108, %cst_54 {dimension_numbers = #tpu.dot_dimension_numbers<[1], [0], [0], [1], [0, 0, 1, 1], [], []>} : vector<128x128xbf16>, vector<128x8xbf16>, vector<128x8xf32> -> vector<128x8xf32>
      %c0_55 = arith.constant 0 : index
      %c0_56 = arith.constant 0 : index
      %124 = vector.load %arg17[%c0_55, %c0_56] : memref<128x32xf32, #tpu.memory_space<vmem>>, vector<128x32xf32>
      %125 = arith.truncf %123 : vector<128x8xf32> to vector<128x8xbf16>
      %126 = arith.index_cast %arg18 : i32 to index
      %c0_57 = arith.constant 0 : index
      %c0_58 = arith.constant 0 : index
      %127 = vector.load %arg6[%126, %c0_57, %c0_58] : memref<4x8x32xbf16, #tpu.memory_space<vmem>>, vector<1x8x32xbf16>
      %128 = vector.shape_cast %127 : vector<1x8x32xbf16> to vector<8x32xbf16>
      %cst_59 = arith.constant dense<0.000000e+00> : vector<128x32xf32>
      %129 = tpu.matmul %125, %128, %cst_59 {dimension_numbers = #tpu.dot_dimension_numbers<[1], [0], [0], [1], [0, 0, 1, 1], [], []>} : vector<128x8xbf16>, vector<8x32xbf16>, vector<128x32xf32> -> vector<128x32xf32>
      %130 = arith.addf %124, %129 : vector<128x32xf32>
      %c0_60 = arith.constant 0 : index
      %c0_61 = arith.constant 0 : index
      %131 = vector.load %arg17[%c0_60, %c0_61] : memref<128x32xf32, #tpu.memory_space<vmem>>, vector<128x32xf32>
      tpu.vector_store %arg17[%c0_60, %c0_61], %130 {strides = array<i32>} : memref<128x32xf32, #tpu.memory_space<vmem>>, vector<128x32xf32>,
    }
    %c4_i32_15 = arith.constant 4 : i32
    %c0_16 = arith.constant 0 : index
    %c0_17 = arith.constant 0 : index
    %36 = vector.load %arg17[%c0_16, %c0_17] : memref<128x32xf32, #tpu.memory_space<vmem>>, vector<128x32xf32>
    %37 = arith.addf %1, %36 : vector<128x32xf32>
    %c0_18 = arith.constant 0 : index
    %c0_19 = arith.constant 0 : index
    %38 = vector.load %arg7[%c0_18, %c0_19] : memref<1x32xf32, #tpu.memory_space<vmem>>, vector<1x32xf32>
    %39 = vector.broadcast %38 : vector<1x32xf32> to vector<128x32xf32>
    %40 = arith.addf %37, %39 : vector<128x32xf32>
    %c0_20 = arith.constant 0 : index
    %c0_21 = arith.constant 0 : index
    %41 = vector.load %arg8[%c0_20, %c0_21] : memref<1x32xf32, #tpu.memory_space<vmem>>, vector<1x32xf32>
    %c0_22 = arith.constant 0 : index
    %c0_23 = arith.constant 0 : index
    %42 = vector.load %arg9[%c0_22, %c0_23] : memref<1x32xf32, #tpu.memory_space<vmem>>, vector<1x32xf32>
    %cst_24 = arith.constant dense<0.000000e+00> : vector<128xf32>
    %43 = vector.multi_reduction <add>, %40, %cst_24 [1] : vector<128x32xf32> to vector<128xf32>
    %44 = vector.shape_cast %43 : vector<128xf32> to vector<128x1xf32>
    %cst_25 = arith.constant 3.200000e+01 : f32
    %45 = vector.broadcast %cst_25 : f32 to vector<128x1xf32>
    %46 = arith.divf %44, %45 : vector<128x1xf32>
    %47 = vector.broadcast %46 : vector<128x1xf32> to vector<128x32xf32>
    %48 = arith.subf %40, %47 : vector<128x32xf32>
    %49 = arith.mulf %48, %48 : vector<128x32xf32>
    %cst_26 = arith.constant dense<0.000000e+00> : vector<128xf32>
    %50 = vector.multi_reduction <add>, %49, %cst_26 [1] : vector<128x32xf32> to vector<128xf32>
    %51 = vector.shape_cast %50 : vector<128xf32> to vector<128x1xf32>
    %cst_27 = arith.constant 3.200000e+01 : f32
    %52 = vector.broadcast %cst_27 : f32 to vector<128x1xf32>
    %53 = arith.divf %51, %52 : vector<128x1xf32>
    %54 = vector.broadcast %46 : vector<128x1xf32> to vector<128x32xf32>
    %55 = arith.subf %40, %54 : vector<128x32xf32>
    %cst_28 = arith.constant 9.99999997E-7 : f32
    %56 = vector.broadcast %cst_28 : f32 to vector<128x1xf32>
    %57 = arith.addf %53, %56 : vector<128x1xf32>
    %58 = math.rsqrt %57 : vector<128x1xf32>
    %59 = vector.broadcast %58 : vector<128x1xf32> to vector<128x32xf32>
    %60 = arith.mulf %55, %59 : vector<128x32xf32>
    %61 = vector.broadcast %41 : vector<1x32xf32> to vector<128x32xf32>
    %62 = arith.mulf %60, %61 : vector<128x32xf32>
    %63 = vector.broadcast %42 : vector<1x32xf32> to vector<128x32xf32>
    %64 = arith.addf %62, %63 : vector<128x32xf32>
    %65 = arith.truncf %64 : vector<128x32xf32> to vector<128x32xbf16>
    %c0_29 = arith.constant 0 : index
    %c0_30 = arith.constant 0 : index
    %66 = vector.load %arg10[%c0_29, %c0_30] : memref<32x128xbf16, #tpu.memory_space<vmem>>, vector<32x128xbf16>
    %cst_31 = arith.constant dense<0.000000e+00> : vector<128x128xf32>
    %67 = tpu.matmul %65, %66, %cst_31 {dimension_numbers = #tpu.dot_dimension_numbers<[1], [0], [0], [1], [0, 0, 1, 1], [], []>} : vector<128x32xbf16>, vector<32x128xbf16>, vector<128x128xf32> -> vector<128x128xf32>
    %c0_32 = arith.constant 0 : index
    %c0_33 = arith.constant 0 : index
    %68 = vector.load %arg11[%c0_32, %c0_33] : memref<1x128xf32, #tpu.memory_space<vmem>>, vector<1x128xf32>
    %69 = vector.broadcast %68 : vector<1x128xf32> to vector<128x128xf32>
    %70 = arith.addf %67, %69 : vector<128x128xf32>
    %71 = arith.mulf %70, %70 : vector<128x128xf32>
    %72 = arith.mulf %70, %71 : vector<128x128xf32>
    %cst_34 = arith.constant 4.471500e-02 : f32
    %73 = vector.broadcast %cst_34 : f32 to vector<128x128xf32>
    %74 = arith.mulf %73, %72 : vector<128x128xf32>
    %75 = arith.addf %70, %74 : vector<128x128xf32>
    %cst_35 = arith.constant 0.797884583 : f32
    %76 = vector.broadcast %cst_35 : f32 to vector<128x128xf32>
    %77 = arith.mulf %76, %75 : vector<128x128xf32>
    %78 = math.tanh %77 : vector<128x128xf32>
    %cst_36 = arith.constant 1.000000e+00 : f32
    %79 = vector.broadcast %cst_36 : f32 to vector<128x128xf32>
    %80 = arith.addf %79, %78 : vector<128x128xf32>
    %cst_37 = arith.constant 5.000000e-01 : f32
    %81 = vector.broadcast %cst_37 : f32 to vector<128x128xf32>
    %82 = arith.mulf %81, %80 : vector<128x128xf32>
    %83 = arith.mulf %70, %82 : vector<128x128xf32>
    %84 = arith.truncf %83 : vector<128x128xf32> to vector<128x128xbf16>
    %c0_38 = arith.constant 0 : index
    %c0_39 = arith.constant 0 : index
    %85 = vector.load %arg12[%c0_38, %c0_39] : memref<128x32xbf16, #tpu.memory_space<vmem>>, vector<128x32xbf16>
    %cst_40 = arith.constant dense<0.000000e+00> : vector<128x32xf32>
    %86 = tpu.matmul %84, %85, %cst_40 {dimension_numbers = #tpu.dot_dimension_numbers<[1], [0], [0], [1], [0, 0, 1, 1], [], []>} : vector<128x128xbf16>, vector<128x32xbf16>, vector<128x32xf32> -> vector<128x32xf32>
    %87 = arith.addf %40, %86 : vector<128x32xf32>
    %c0_41 = arith.constant 0 : index
    %c0_42 = arith.constant 0 : index
    %88 = vector.load %arg13[%c0_41, %c0_42] : memref<1x32xf32, #tpu.memory_space<vmem>>, vector<1x32xf32>
    %89 = vector.broadcast %88 : vector<1x32xf32> to vector<128x32xf32>
    %90 = arith.addf %87, %89 : vector<128x32xf32>
    %c0_43 = arith.constant 0 : index
    %c0_44 = arith.constant 0 : index
    %c0_45 = arith.constant 0 : index
    %91 = vector.load %arg16[%c0_43, %c0_44, %c0_45] : memref<1x128x32xf32, #tpu.memory_space<vmem>>, vector<1x128x32xf32>
    %92 = vector.shape_cast %91 : vector<1x128x32xf32> to vector<128x32xf32>
    %93 = vector.shape_cast %90 : vector<128x32xf32> to vector<1x128x32xf32>
    tpu.vector_store %arg16[%c0_43, %c0_44, %c0_45], %93 {strides = array<i32>} : memref<1x128x32xf32, #tpu.memory_space<vmem>>, vector<1x128x32xf32>,
    return
  }
  func.func @transform_0(%arg0: i32) -> (i32, i32, i32) {
    %c0_i32 = arith.constant 0 : i32
    %c0_i32_0 = arith.constant 0 : i32
    %c0_i32_1 = arith.constant 0 : i32
    return %arg0, %c0_i32, %c0_i32_0 : i32, i32, i32
  }
  func.func @transform_1(%arg0: i32) -> (i32, i32) {
    %c0_i32 = arith.constant 0 : i32
    %c0_i32_0 = arith.constant 0 : i32
    %c0_i32_1 = arith.constant 0 : i32
    return %c0_i32, %c0_i32_0 : i32, i32
  }
  func.func @transform_2(%arg0: i32) -> (i32, i32) {
    %c0_i32 = arith.constant 0 : i32
    %c0_i32_0 = arith.constant 0 : i32
    %c0_i32_1 = arith.constant 0 : i32
    return %c0_i32, %c0_i32_0 : i32, i32
  }
  func.func @transform_3(%arg0: i32) -> (i32, i32, i32) {
    %c0_i32 = arith.constant 0 : i32
    %c0_i32_0 = arith.constant 0 : i32
    %c0_i32_1 = arith.constant 0 : i32
    %c0_i32_2 = arith.constant 0 : i32
    return %c0_i32, %c0_i32_0, %c0_i32_1 : i32, i32, i32
  }
  func.func @transform_4(%arg0: i32) -> (i32, i32, i32) {
    %c0_i32 = arith.constant 0 : i32
    %c0_i32_0 = arith.constant 0 : i32
    %c0_i32_1 = arith.constant 0 : i32
    %c0_i32_2 = arith.constant 0 : i32
    return %c0_i32, %c0_i32_0, %c0_i32_1 : i32, i32, i32
  }
  func.func @transform_5(%arg0: i32) -> (i32, i32, i32) {
    %c0_i32 = arith.constant 0 : i32
    %c0_i32_0 = arith.constant 0 : i32
    %c0_i32_1 = arith.constant 0 : i32
    %c0_i32_2 = arith.constant 0 : i32
    return %c0_i32, %c0_i32_0, %c0_i32_1 : i32, i32, i32
  }
  func.func @transform_6(%arg0: i32) -> (i32, i32) {
    %c0_i32 = arith.constant 0 : i32
    %c0_i32_0 = arith.constant 0 : i32
    %c0_i32_1 = arith.constant 0 : i32
    return %c0_i32, %c0_i32_0 : i32, i32
  }
  func.func @transform_7(%arg0: i32) -> (i32, i32) {
    %c0_i32 = arith.constant 0 : i32
    %c0_i32_0 = arith.constant 0 : i32
    %c0_i32_1 = arith.constant 0 : i32
    return %c0_i32, %c0_i32_0 : i32, i32
  }
  func.func @transform_8(%arg0: i32) -> (i32, i32) {
    %c0_i32 = arith.constant 0 : i32
    %c0_i32_0 = arith.constant 0 : i32
    %c0_i32_1 = arith.constant 0 : i32
    return %c0_i32, %c0_i32_0 : i32, i32
  }
  func.func @transform_9(%arg0: i32) -> (i32, i32) {
    %c0_i32 = arith.constant 0 : i32
    %c0_i32_0 = arith.constant 0 : i32
    %c0_i32_1 = arith.constant 0 : i32
    return %c0_i32, %c0_i32_0 : i32, i32
  }
  func.func @transform_10(%arg0: i32) -> (i32, i32) {
    %c0_i32 = arith.constant 0 : i32
    %c0_i32_0 = arith.constant 0 : i32
    %c0_i32_1 = arith.constant 0 : i32
    return %c0_i32, %c0_i32_0 : i32, i32
  }
  func.func @transform_11(%arg0: i32) -> (i32, i32) {
    %c0_i32 = arith.constant 0 : i32
    %c0_i32_0 = arith.constant 0 : i32
    %c0_i32_1 = arith.constant 0 : i32
    return %c0_i32, %c0_i32_0 : i32, i32
  }
  func.func @transform_12(%arg0: i32) -> (i32, i32) {
    %c0_i32 = arith.constant 0 : i32
    %c0_i32_0 = arith.constant 0 : i32
    %c0_i32_1 = arith.constant 0 : i32
    return %c0_i32, %c0_i32_0 : i32, i32
  }
  func.func @transform_13(%arg0: i32) -> (i32, i32) {
    %c0_i32 = arith.constant 0 : i32
    %c0_i32_0 = arith.constant 0 : i32
    %c0_i32_1 = arith.constant 0 : i32
    return %c0_i32, %c0_i32_0 : i32, i32
  }
  func.func @transform_14(%arg0: i32) -> (i32, i32) {
    %c0_i32 = arith.constant 0 : i32
    %c0_i32_0 = arith.constant 0 : i32
    %c0_i32_1 = arith.constant 0 : i32
    return %c0_i32, %c0_i32_0 : i32, i32
  }
  func.func @transform_15(%arg0: i32) -> (i32, i32, i32) {
    %c0_i32 = arith.constant 0 : i32
    %c0_i32_0 = arith.constant 0 : i32
    %c0_i32_1 = arith.constant 0 : i32
    return %arg0, %c0_i32, %c0_i32_0 : i32, i32, i32
  }
}

module attributes {stable_mosaic.version = 11 : i64} {
  func.func @_vit_block_kernel(%arg0: i32, %arg1: memref<1x128x32xf32, #tpu.memory_space<vmem>>, %arg2: memref<1x32xf32, #tpu.memory_space<vmem>>, %arg3: memref<1x32xf32, #tpu.memory_space<vmem>>, %arg4: memref<4x32x24xbf16, #tpu.memory_space<vmem>>, %arg5: memref<4x1x24xf32, #tpu.memory_space<vmem>>, %arg6: memref<4x8x32xbf16, #tpu.memory_space<vmem>>, %arg7: memref<1x32xf32, #tpu.memory_space<vmem>>, %arg8: memref<1x32xf32, #tpu.memory_space<vmem>>, %arg9: memref<1x32xf32, #tpu.memory_space<vmem>>, %arg10: memref<32x128xbf16, #tpu.memory_space<vmem>>, %arg11: memref<1x128xf32, #tpu.memory_space<vmem>>, %arg12: memref<128x32xbf16, #tpu.memory_space<vmem>>, %arg13: memref<1x32xf32, #tpu.memory_space<vmem>>, %arg14: memref<1x32xf32, #tpu.memory_space<vmem>>, %arg15: memref<1x32xf32, #tpu.memory_space<vmem>>, %arg16: memref<1x128x32xf32, #tpu.memory_space<vmem>>, %arg17: memref<128x32xf32, #tpu.memory_space<vmem>>) attributes {dimension_semantics = [#tpu.dimension_semantics<parallel>], iteration_bounds = array<i64: 2>, scalar_prefetch = 0 : i64, scratch_operands = 1 : i64, tpu.core_type = #tpu.core_type<tc>, window_params = [{transform_indices = @transform_0, window_bounds = array<i64: 1, 128, 32>}, {pipeline_mode = #tpu.pipeline_mode<synchronous>, transform_indices = @transform_1, window_bounds = array<i64: 1, 32>}, {pipeline_mode = #tpu.pipeline_mode<synchronous>, transform_indices = @transform_2, window_bounds = array<i64: 1, 32>}, {pipeline_mode = #tpu.pipeline_mode<synchronous>, transform_indices = @transform_3, window_bounds = array<i64: 4, 32, 24>}, {pipeline_mode = #tpu.pipeline_mode<synchronous>, transform_indices = @transform_4, window_bounds = array<i64: 4, 1, 24>}, {pipeline_mode = #tpu.pipeline_mode<synchronous>, transform_indices = @transform_5, window_bounds = array<i64: 4, 8, 32>}, {pipeline_mode = #tpu.pipeline_mode<synchronous>, transform_indices = @transform_6, window_bounds = array<i64: 1, 32>}, {pipeline_mode = #tpu.pipeline_mode<synchronous>, transform_indices = @transform_7, window_bounds = array<i64: 1, 32>}, {pipeline_mode = #tpu.pipeline_mode<synchronous>, transform_indices = @transform_8, window_bounds = array<i64: 1, 32>}, {pipeline_mode = #tpu.pipeline_mode<synchronous>, transform_indices = @transform_9, window_bounds = array<i64: 32, 128>}, {pipeline_mode = #tpu.pipeline_mode<synchronous>, transform_indices = @transform_10, window_bounds = array<i64: 1, 128>}, {pipeline_mode = #tpu.pipeline_mode<synchronous>, transform_indices = @transform_11, window_bounds = array<i64: 128, 32>}, {pipeline_mode = #tpu.pipeline_mode<synchronous>, transform_indices = @transform_12, window_bounds = array<i64: 1, 32>}, {pipeline_mode = #tpu.pipeline_mode<synchronous>, transform_indices = @transform_13, window_bounds = array<i64: 1, 32>}, {pipeline_mode = #tpu.pipeline_mode<synchronous>, transform_indices = @transform_14, window_bounds = array<i64: 1, 32>}, {transform_indices = @transform_15, window_bounds = array<i64: 1, 128, 32>}]} {
    %c0 = arith.constant 0 : index
    %c0_0 = arith.constant 0 : index
    %c0_1 = arith.constant 0 : index
    %0 = vector.load %arg1[%c0, %c0_0, %c0_1] : memref<1x128x32xf32, #tpu.memory_space<vmem>>, vector<1x128x32xf32>
    %1 = vector.shape_cast %0 : vector<1x128x32xf32> to vector<128x32xf32>
    %c0_2 = arith.constant 0 : index
    %c0_3 = arith.constant 0 : index
    %2 = vector.load %arg2[%c0_2, %c0_3] : memref<1x32xf32, #tpu.memory_space<vmem>>, vector<1x32xf32>
    %c0_4 = arith.constant 0 : index
    %c0_5 = arith.constant 0 : index
    %3 = vector.load %arg3[%c0_4, %c0_5] : memref<1x32xf32, #tpu.memory_space<vmem>>, vector<1x32xf32>
    %cst = arith.constant dense<0.000000e+00> : vector<128xf32>
    %4 = vector.multi_reduction <add>, %1, %cst [1] : vector<128x32xf32> to vector<128xf32>
    %5 = vector.shape_cast %4 : vector<128xf32> to vector<128x1xf32>
    %cst_6 = arith.constant 3.200000e+01 : f32
    %6 = vector.broadcast %cst_6 : f32 to vector<128x1xf32>
    %7 = arith.divf %5, %6 : vector<128x1xf32>
    %8 = vector.broadcast %7 : vector<128x1xf32> to vector<128x32xf32>
    %9 = arith.subf %1, %8 : vector<128x32xf32>
    %10 = arith.mulf %9, %9 : vector<128x32xf32>
    %cst_7 = arith.constant dense<0.000000e+00> : vector<128xf32>
    %11 = vector.multi_reduction <add>, %10, %cst_7 [1] : vector<128x32xf32> to vector<128xf32>
    %12 = vector.shape_cast %11 : vector<128xf32> to vector<128x1xf32>
    %cst_8 = arith.constant 3.200000e+01 : f32
    %13 = vector.broadcast %cst_8 : f32 to vector<128x1xf32>
    %14 = arith.divf %12, %13 : vector<128x1xf32>
    %15 = vector.broadcast %7 : vector<128x1xf32> to vector<128x32xf32>
    %16 = arith.subf %1, %15 : vector<128x32xf32>
    %cst_9 = arith.constant 9.99999997E-7 : f32
    %17 = vector.broadcast %cst_9 : f32 to vector<128x1xf32>
    %18 = arith.addf %14, %17 : vector<128x1xf32>
    %19 = math.rsqrt %18 : vector<128x1xf32>
    %20 = vector.broadcast %19 : vector<128x1xf32> to vector<128x32xf32>
    %21 = arith.mulf %16, %20 : vector<128x32xf32>
    %22 = vector.broadcast %2 : vector<1x32xf32> to vector<128x32xf32>
    %23 = arith.mulf %21, %22 : vector<128x32xf32>
    %24 = vector.broadcast %3 : vector<1x32xf32> to vector<128x32xf32>
    %25 = arith.addf %23, %24 : vector<128x32xf32>
    %26 = arith.truncf %25 : vector<128x32xf32> to vector<128x32xbf16>
    %27 = tpu.iota {dimensions = array<i32: 1>} : vector<1x128xi32>
    %c8_i32 = arith.constant 8 : i32
    %28 = vector.broadcast %c8_i32 : i32 to vector<1x128xi32>
    %29 = arith.cmpi slt, %27, %28 : vector<1x128xi32>
    %cst_10 = arith.constant 0.000000e+00 : f32
    %cst_11 = arith.constant 0xFF800000 : f32
    %30 = vector.broadcast %cst_10 : f32 to vector<1x128xf32>
    %31 = vector.broadcast %cst_11 : f32 to vector<1x128xf32>
    %32 = arith.select %29, %30, %31 : vector<1x128xi1>, vector<1x128xf32>
    %cst_12 = arith.constant 0.000000e+00 : f32
    %33 = vector.broadcast %cst_12 : f32 to vector<128x32xf32>
    %c0_13 = arith.constant 0 : index
    %c0_14 = arith.constant 0 : index
    %34 = vector.load %arg17[%c0_13, %c0_14] : memref<128x32xf32, #tpu.memory_space<vmem>>, vector<128x32xf32>
    tpu.vector_store %arg17[%c0_13, %c0_14], %33 {strides = array<i32>} : memref<128x32xf32, #tpu.memory_space<vmem>>, vector<128x32xf32>,
    %c0_i32 = arith.constant 0 : i32
    %c4_i32 = arith.constant 4 : i32
    %35 = arith.addi %c0_i32, %c4_i32 : i32
    %c1_i32 = arith.constant 1 : i32
    scf.for %arg18 = %c0_i32 to %35 step %c1_i32  : i32 {
      %94 = arith.index_cast %arg18 : i32 to index
      %c0_46 = arith.constant 0 : index
      %c0_47 = arith.constant 0 : index
      %95 = vector.load %arg4[%94, %c0_46, %c0_47] : memref<4x32x24xbf16, #tpu.memory_space<vmem>>, vector<1x32x24xbf16>
      %96 = vector.shape_cast %95 : vector<1x32x24xbf16> to vector<32x24xbf16>
      %cst_48 = arith.constant dense<0.000000e+00> : vector<128x24xf32>
      %97 = tpu.matmul %26, %96, %cst_48 {dimension_numbers = #tpu.dot_dimension_numbers<[1], [0], [0], [1], [0, 0, 1, 1], [], []>} : vector<128x32xbf16>, vector<32x24xbf16>, vector<128x24xf32> -> vector<128x24xf32>
      %98 = arith.index_cast %arg18 : i32 to index
      %c0_49 = arith.constant 0 : index
      %c0_50 = arith.constant 0 : index
      %99 = vector.load %arg5[%98, %c0_49, %c0_50] : memref<4x1x24xf32, #tpu.memory_space<vmem>>, vector<1x1x24xf32>
      %100 = vector.shape_cast %99 : vector<1x1x24xf32> to vector<1x24xf32>
      %101 = vector.broadcast %100 : vector<1x24xf32> to vector<128x24xf32>
      %102 = arith.addf %97, %101 : vector<128x24xf32>
      %103 = vector.extract_strided_slice %102 {offsets = [0, 0], sizes = [128, 8], strides = [1, 1]} : vector<128x24xf32> to vector<128x8xf32>
      %104 = arith.truncf %103 : vector<128x8xf32> to vector<128x8xbf16>
      %105 = vector.extract_strided_slice %102 {offsets = [0, 8], sizes = [128, 8], strides = [1, 1]} : vector<128x24xf32> to vector<128x8xf32>
      %106 = arith.truncf %105 : vector<128x8xf32> to vector<128x8xbf16>
      %107 = vector.extract_strided_slice %102 {offsets = [0, 16], sizes = [128, 8], strides = [1, 1]} : vector<128x24xf32> to vector<128x8xf32>
      %108 = arith.truncf %107 : vector<128x8xf32> to vector<128x8xbf16>
      %cst_51 = arith.constant dense<0.000000e+00> : vector<128x128xf32>
      %109 = tpu.matmul %104, %106, %cst_51 {dimension_numbers = #tpu.dot_dimension_numbers<[1], [1], [0], [0], [0, 0, 1, 0], [], []>} : vector<128x8xbf16>, vector<128x8xbf16>, vector<128x128xf32> -> vector<128x128xf32>
      %110 = vector.broadcast %32 : vector<1x128xf32> to vector<128x128xf32>
      %111 = arith.addf %109, %110 : vector<128x128xf32>
      %cst_52 = arith.constant dense<0xFF800000> : vector<128xf32>
      %112 = vector.multi_reduction <maximumf>, %111, %cst_52 [1] : vector<128x128xf32> to vector<128xf32>
      %113 = vector.shape_cast %112 : vector<128xf32> to vector<128x1xf32>
      %114 = vector.broadcast %113 : vector<128x1xf32> to vector<128x128xf32>
      %115 = arith.subf %111, %114 : vector<128x128xf32>
      %116 = math.exp %115 : vector<128x128xf32>
      %cst_53 = arith.constant dense<0.000000e+00> : vector<128xf32>
      %117 = vector.multi_reduction <add>, %116, %cst_53 [1] : vector<128x128xf32> to vector<128xf32>
      %118 = vector.shape_cast %117 : vector<128xf32> to vector<128x1xf32>
      %119 = tpu.reciprocal %118 {approx = true} : vector<128x1xf32> -> vector<128x1xf32>
      %120 = vector.broadcast %119 : vector<128x1xf32> to vector<128x128xf32>
      %121 = arith.mulf %116, %120 : vector<128x128xf32>
      %122 = arith.truncf %121 : vector<128x128xf32> to vector<128x128xbf16>
      %cst_54 = arith.constant dense<0.000000e+00> : vector<128x8xf32>
      %123 = tpu.matmul %122, %108, %cst_54 {dimension_numbers = #tpu.dot_dimension_numbers<[1], [0], [0], [1], [0, 0, 1, 1], [], []>} : vector<128x128xbf16>, vector<128x8xbf16>, vector<128x8xf32> -> vector<128x8xf32>
      %c0_55 = arith.constant 0 : index
      %c0_56 = arith.constant 0 : index
      %124 = vector.load %arg17[%c0_55, %c0_56] : memref<128x32xf32, #tpu.memory_space<vmem>>, vector<128x32xf32>
      %125 = arith.truncf %123 : vector<128x8xf32> to vector<128x8xbf16>
      %126 = arith.index_cast %arg18 : i32 to index
      %c0_57 = arith.constant 0 : index
      %c0_58 = arith.constant 0 : index
      %127 = vector.load %arg6[%126, %c0_57, %c0_58] : memref<4x8x32xbf16, #tpu.memory_space<vmem>>, vector<1x8x32xbf16>
      %128 = vector.shape_cast %127 : vector<1x8x32xbf16> to vector<8x32xbf16>
      %cst_59 = arith.constant dense<0.000000e+00> : vector<128x32xf32>
      %129 = tpu.matmul %125, %128, %cst_59 {dimension_numbers = #tpu.dot_dimension_numbers<[1], [0], [0], [1], [0, 0, 1, 1], [], []>} : vector<128x8xbf16>, vector<8x32xbf16>, vector<128x32xf32> -> vector<128x32xf32>
      %130 = arith.addf %124, %129 : vector<128x32xf32>
      %c0_60 = arith.constant 0 : index
      %c0_61 = arith.constant 0 : index
      %131 = vector.load %arg17[%c0_60, %c0_61] : memref<128x32xf32, #tpu.memory_space<vmem>>, vector<128x32xf32>
      tpu.vector_store %arg17[%c0_60, %c0_61], %130 {strides = array<i32>} : memref<128x32xf32, #tpu.memory_space<vmem>>, vector<128x32xf32>,
    }
    %c4_i32_15 = arith.constant 4 : i32
    %c0_16 = arith.constant 0 : index
    %c0_17 = arith.constant 0 : index
    %36 = vector.load %arg17[%c0_16, %c0_17] : memref<128x32xf32, #tpu.memory_space<vmem>>, vector<128x32xf32>
    %37 = arith.addf %1, %36 : vector<128x32xf32>
    %c0_18 = arith.constant 0 : index
    %c0_19 = arith.constant 0 : index
    %38 = vector.load %arg7[%c0_18, %c0_19] : memref<1x32xf32, #tpu.memory_space<vmem>>, vector<1x32xf32>
    %39 = vector.broadcast %38 : vector<1x32xf32> to vector<128x32xf32>
    %40 = arith.addf %37, %39 : vector<128x32xf32>
    %c0_20 = arith.constant 0 : index
    %c0_21 = arith.constant 0 : index
    %41 = vector.load %arg8[%c0_20, %c0_21] : memref<1x32xf32, #tpu.memory_space<vmem>>, vector<1x32xf32>
    %c0_22 = arith.constant 0 : index
    %c0_23 = arith.constant 0 : index
    %42 = vector.load %arg9[%c0_22, %c0_23] : memref<1x32xf32, #tpu.memory_space<vmem>>, vector<1x32xf32>
    %cst_24 = arith.constant dense<0.000000e+00> : vector<128xf32>
    %43 = vector.multi_reduction <add>, %40, %cst_24 [1] : vector<128x32xf32> to vector<128xf32>
    %44 = vector.shape_cast %43 : vector<128xf32> to vector<128x1xf32>
    %cst_25 = arith.constant 3.200000e+01 : f32
    %45 = vector.broadcast %cst_25 : f32 to vector<128x1xf32>
    %46 = arith.divf %44, %45 : vector<128x1xf32>
    %47 = vector.broadcast %46 : vector<128x1xf32> to vector<128x32xf32>
    %48 = arith.subf %40, %47 : vector<128x32xf32>
    %49 = arith.mulf %48, %48 : vector<128x32xf32>
    %cst_26 = arith.constant dense<0.000000e+00> : vector<128xf32>
    %50 = vector.multi_reduction <add>, %49, %cst_26 [1] : vector<128x32xf32> to vector<128xf32>
    %51 = vector.shape_cast %50 : vector<128xf32> to vector<128x1xf32>
    %cst_27 = arith.constant 3.200000e+01 : f32
    %52 = vector.broadcast %cst_27 : f32 to vector<128x1xf32>
    %53 = arith.divf %51, %52 : vector<128x1xf32>
    %54 = vector.broadcast %46 : vector<128x1xf32> to vector<128x32xf32>
    %55 = arith.subf %40, %54 : vector<128x32xf32>
    %cst_28 = arith.constant 9.99999997E-7 : f32
    %56 = vector.broadcast %cst_28 : f32 to vector<128x1xf32>
    %57 = arith.addf %53, %56 : vector<128x1xf32>
    %58 = math.rsqrt %57 : vector<128x1xf32>
    %59 = vector.broadcast %58 : vector<128x1xf32> to vector<128x32xf32>
    %60 = arith.mulf %55, %59 : vector<128x32xf32>
    %61 = vector.broadcast %41 : vector<1x32xf32> to vector<128x32xf32>
    %62 = arith.mulf %60, %61 : vector<128x32xf32>
    %63 = vector.broadcast %42 : vector<1x32xf32> to vector<128x32xf32>
    %64 = arith.addf %62, %63 : vector<128x32xf32>
    %65 = arith.truncf %64 : vector<128x32xf32> to vector<128x32xbf16>
    %c0_29 = arith.constant 0 : index
    %c0_30 = arith.constant 0 : index
    %66 = vector.load %arg10[%c0_29, %c0_30] : memref<32x128xbf16, #tpu.memory_space<vmem>>, vector<32x128xbf16>
    %cst_31 = arith.constant dense<0.000000e+00> : vector<128x128xf32>
    %67 = tpu.matmul %65, %66, %cst_31 {dimension_numbers = #tpu.dot_dimension_numbers<[1], [0], [0], [1], [0, 0, 1, 1], [], []>} : vector<128x32xbf16>, vector<32x128xbf16>, vector<128x128xf32> -> vector<128x128xf32>
    %c0_32 = arith.constant 0 : index
    %c0_33 = arith.constant 0 : index
    %68 = vector.load %arg11[%c0_32, %c0_33] : memref<1x128xf32, #tpu.memory_space<vmem>>, vector<1x128xf32>
    %69 = vector.broadcast %68 : vector<1x128xf32> to vector<128x128xf32>
    %70 = arith.addf %67, %69 : vector<128x128xf32>
    %71 = arith.mulf %70, %70 : vector<128x128xf32>
    %72 = arith.mulf %70, %71 : vector<128x128xf32>
    %cst_34 = arith.constant 4.471500e-02 : f32
    %73 = vector.broadcast %cst_34 : f32 to vector<128x128xf32>
    %74 = arith.mulf %73, %72 : vector<128x128xf32>
    %75 = arith.addf %70, %74 : vector<128x128xf32>
    %cst_35 = arith.constant 0.797884583 : f32
    %76 = vector.broadcast %cst_35 : f32 to vector<128x128xf32>
    %77 = arith.mulf %76, %75 : vector<128x128xf32>
    %78 = math.tanh %77 : vector<128x128xf32>
    %cst_36 = arith.constant 1.000000e+00 : f32
    %79 = vector.broadcast %cst_36 : f32 to vector<128x128xf32>
    %80 = arith.addf %79, %78 : vector<128x128xf32>
    %cst_37 = arith.constant 5.000000e-01 : f32
    %81 = vector.broadcast %cst_37 : f32 to vector<128x128xf32>
    %82 = arith.mulf %81, %80 : vector<128x128xf32>
    %83 = arith.mulf %70, %82 : vector<128x128xf32>
    %84 = arith.truncf %83 : vector<128x128xf32> to vector<128x128xbf16>
    %c0_38 = arith.constant 0 : index
    %c0_39 = arith.constant 0 : index
    %85 = vector.load %arg12[%c0_38, %c0_39] : memref<128x32xbf16, #tpu.memory_space<vmem>>, vector<128x32xbf16>
    %cst_40 = arith.constant dense<0.000000e+00> : vector<128x32xf32>
    %86 = tpu.matmul %84, %85, %cst_40 {dimension_numbers = #tpu.dot_dimension_numbers<[1], [0], [0], [1], [0, 0, 1, 1], [], []>} : vector<128x128xbf16>, vector<128x32xbf16>, vector<128x32xf32> -> vector<128x32xf32>
    %87 = arith.addf %40, %86 : vector<128x32xf32>
    %c0_41 = arith.constant 0 : index
    %c0_42 = arith.constant 0 : index
    %88 = vector.load %arg13[%c0_41, %c0_42] : memref<1x32xf32, #tpu.memory_space<vmem>>, vector<1x32xf32>
    %89 = vector.broadcast %88 : vector<1x32xf32> to vector<128x32xf32>
    %90 = arith.addf %87, %89 : vector<128x32xf32>
    %c0_43 = arith.constant 0 : index
    %c0_44 = arith.constant 0 : index
    %c0_45 = arith.constant 0 : index
    %91 = vector.load %arg16[%c0_43, %c0_44, %c0_45] : memref<1x128x32xf32, #tpu.memory_space<vmem>>, vector<1x128x32xf32>
    %92 = vector.shape_cast %91 : vector<1x128x32xf32> to vector<128x32xf32>
    %93 = vector.shape_cast %90 : vector<128x32xf32> to vector<1x128x32xf32>
    tpu.vector_store %arg16[%c0_43, %c0_44, %c0_45], %93 {strides = array<i32>} : memref<1x128x32xf32, #tpu.memory_space<vmem>>, vector<1x128x32xf32>,
    return
  }
  func.func @transform_0(%arg0: i32) -> (i32, i32, i32) {
    %c0_i32 = arith.constant 0 : i32
    %c0_i32_0 = arith.constant 0 : i32
    %c0_i32_1 = arith.constant 0 : i32
    return %arg0, %c0_i32, %c0_i32_0 : i32, i32, i32
  }
  func.func @transform_1(%arg0: i32) -> (i32, i32) {
    %c0_i32 = arith.constant 0 : i32
    %c0_i32_0 = arith.constant 0 : i32
    %c0_i32_1 = arith.constant 0 : i32
    return %c0_i32, %c0_i32_0 : i32, i32
  }
  func.func @transform_2(%arg0: i32) -> (i32, i32) {
    %c0_i32 = arith.constant 0 : i32
    %c0_i32_0 = arith.constant 0 : i32
    %c0_i32_1 = arith.constant 0 : i32
    return %c0_i32, %c0_i32_0 : i32, i32
  }
  func.func @transform_3(%arg0: i32) -> (i32, i32, i32) {
    %c0_i32 = arith.constant 0 : i32
    %c0_i32_0 = arith.constant 0 : i32
    %c0_i32_1 = arith.constant 0 : i32
    %c0_i32_2 = arith.constant 0 : i32
    return %c0_i32, %c0_i32_0, %c0_i32_1 : i32, i32, i32
  }
  func.func @transform_4(%arg0: i32) -> (i32, i32, i32) {
    %c0_i32 = arith.constant 0 : i32
    %c0_i32_0 = arith.constant 0 : i32
    %c0_i32_1 = arith.constant 0 : i32
    %c0_i32_2 = arith.constant 0 : i32
    return %c0_i32, %c0_i32_0, %c0_i32_1 : i32, i32, i32
  }
  func.func @transform_5(%arg0: i32) -> (i32, i32, i32) {
    %c0_i32 = arith.constant 0 : i32
    %c0_i32_0 = arith.constant 0 : i32
    %c0_i32_1 = arith.constant 0 : i32
    %c0_i32_2 = arith.constant 0 : i32
    return %c0_i32, %c0_i32_0, %c0_i32_1 : i32, i32, i32
  }
  func.func @transform_6(%arg0: i32) -> (i32, i32) {
    %c0_i32 = arith.constant 0 : i32
    %c0_i32_0 = arith.constant 0 : i32
    %c0_i32_1 = arith.constant 0 : i32
    return %c0_i32, %c0_i32_0 : i32, i32
  }
  func.func @transform_7(%arg0: i32) -> (i32, i32) {
    %c0_i32 = arith.constant 0 : i32
    %c0_i32_0 = arith.constant 0 : i32
    %c0_i32_1 = arith.constant 0 : i32
    return %c0_i32, %c0_i32_0 : i32, i32
  }
  func.func @transform_8(%arg0: i32) -> (i32, i32) {
    %c0_i32 = arith.constant 0 : i32
    %c0_i32_0 = arith.constant 0 : i32
    %c0_i32_1 = arith.constant 0 : i32
    return %c0_i32, %c0_i32_0 : i32, i32
  }
  func.func @transform_9(%arg0: i32) -> (i32, i32) {
    %c0_i32 = arith.constant 0 : i32
    %c0_i32_0 = arith.constant 0 : i32
    %c0_i32_1 = arith.constant 0 : i32
    return %c0_i32, %c0_i32_0 : i32, i32
  }
  func.func @transform_10(%arg0: i32) -> (i32, i32) {
    %c0_i32 = arith.constant 0 : i32
    %c0_i32_0 = arith.constant 0 : i32
    %c0_i32_1 = arith.constant 0 : i32
    return %c0_i32, %c0_i32_0 : i32, i32
  }
  func.func @transform_11(%arg0: i32) -> (i32, i32) {
    %c0_i32 = arith.constant 0 : i32
    %c0_i32_0 = arith.constant 0 : i32
    %c0_i32_1 = arith.constant 0 : i32
    return %c0_i32, %c0_i32_0 : i32, i32
  }
  func.func @transform_12(%arg0: i32) -> (i32, i32) {
    %c0_i32 = arith.constant 0 : i32
    %c0_i32_0 = arith.constant 0 : i32
    %c0_i32_1 = arith.constant 0 : i32
    return %c0_i32, %c0_i32_0 : i32, i32
  }
  func.func @transform_13(%arg0: i32) -> (i32, i32) {
    %c0_i32 = arith.constant 0 : i32
    %c0_i32_0 = arith.constant 0 : i32
    %c0_i32_1 = arith.constant 0 : i32
    return %c0_i32, %c0_i32_0 : i32, i32
  }
  func.func @transform_14(%arg0: i32) -> (i32, i32) {
    %c0_i32 = arith.constant 0 : i32
    %c0_i32_0 = arith.constant 0 : i32
    %c0_i32_1 = arith.constant 0 : i32
    return %c0_i32, %c0_i32_0 : i32, i32
  }
  func.func @transform_15(%arg0: i32) -> (i32, i32, i32) {
    %c0_i32 = arith.constant 0 : i32
    %c0_i32_0 = arith.constant 0 : i32
    %c0_i32_1 = arith.constant 0 : i32
    return %arg0, %c0_i32, %c0_i32_0 : i32, i32, i32
  }
}

</mosaic_0001>

<llo_original>
// kernel: tpu_custom_call.1
$region0: #{tpu_custom_call.1}
  #allocation0 [shape = 'u32[]', space=smem, size = 0x4, offset = 0x4, fixed_abs, tag = 'smem constant byte address 0x4 - core index']
  #allocation1 [shape = 'u32[144,128]{1,0:T(1,128)}', space=vmem, size = 0x12000, scoped, tag = 'internal scratch']
  #allocation2 [shape = 'f32[128,32]{1,0:T(8,128)}', space=vmem, size = 0x10000, scoped, tag = 'scratch operand']
  %s0 = inlined_call_operand.vmem [shape: f32[2,128,32], index: 0, kind: input, shape index: {}]
  %s1 = inlined_call_operand.vmem [shape: f32[1,32], index: 1, kind: input, shape index: {}]
  %s2 = inlined_call_operand.vmem [shape: f32[1,32], index: 2, kind: input, shape index: {}]
  %s3 = inlined_call_operand.vmem [shape: bf16[4,32,24], index: 3, kind: input, shape index: {}]
  %s4 = inlined_call_operand.vmem [shape: f32[4,1,24], index: 4, kind: input, shape index: {}]
  %s5 = inlined_call_operand.vmem [shape: bf16[4,8,32], index: 5, kind: input, shape index: {}]
  %s6 = inlined_call_operand.vmem [shape: f32[1,32], index: 6, kind: input, shape index: {}]
  %s7 = inlined_call_operand.vmem [shape: f32[1,32], index: 7, kind: input, shape index: {}]
  %s8 = inlined_call_operand.vmem [shape: f32[1,32], index: 8, kind: input, shape index: {}]
  %s9 = inlined_call_operand.vmem [shape: bf16[32,128], index: 9, kind: input, shape index: {}]
  %s10 = inlined_call_operand.vmem [shape: f32[1,128], index: 10, kind: input, shape index: {}]
  %s11 = inlined_call_operand.vmem [shape: bf16[128,32], index: 11, kind: input, shape index: {}]
  %s12 = inlined_call_operand.vmem [shape: f32[1,32], index: 12, kind: input, shape index: {}]
  %s13 = inlined_call_operand.vmem [shape: f32[1,32], index: 13, kind: input, shape index: {}]
  %s14 = inlined_call_operand.vmem [shape: f32[1,32], index: 14, kind: input, shape index: {}]
  %s15 = inlined_call_operand.vmem [shape: f32[2,128,32], index: 15, kind: output, shape index: {}]
  %s16 = sld [smem:[#allocation0]]
  $region100: #{tpu_custom_call.1} parent=0
    _
  %s18 = ssub.s32 1, %s16
  %s19 = scalar_select 0, %s18, %s16
  loop: start=0, step=1, limit=4
  $region2: #{tpu_custom_call.1} parent=0 // loop_pre_header
    _
  $region3: #{tpu_custom_call.1} parent=0 // loop_header
    %s21 = sphi 0, %s25
    %p22 = scmp.ge.s32.totalorder %s21, 4
    %s31 = sphi 0, %s33
    %s34 = sphi 0, %s31
    %s35 = sphi 0, %s34
    %s51 = sphi 0, %s35
    %s55 = sphi 0, %s55
    %s57 = sphi 0, %s55
    %s58 = sphi 0, %s57
    %s72 = sphi 0, %s58
    %s76 = sphi 0, %s76
    %s78 = sphi 0, %s76
    %s79 = sphi 0, %s78
    %s93 = sphi 0, %s79
    %s97 = sphi 0, %s97
    %s99 = sphi 0, %s97
    %s100 = sphi 0, %s99
    %s114 = sphi 0, %s100
    %s118 = sphi 0, %s118
    %s120 = sphi 0, %s118
    %s121 = sphi 0, %s120
    %s135 = sphi 0, %s121
    %s139 = sphi 0, %s139
    %s141 = sphi 0, %s139
    %s142 = sphi 0, %s141
    %s156 = sphi 0, %s142
    %s160 = sphi 0, %s160
    %s162 = sphi 0, %s160
    %s163 = sphi 0, %s162
    %s177 = sphi 0, %s163
    %s181 = sphi 0, %s181
    %s183 = sphi 0, %s181
    %s184 = sphi 0, %s183
    %s198 = sphi 0, %s184
    %s202 = sphi 0, %s202
    %s204 = sphi 0, %s202
    %s205 = sphi 0, %s204
    %s219 = sphi 0, %s205
    %s223 = sphi 0, %s223
    %s225 = sphi 0, %s223
    %s226 = sphi 0, %s225
    %s240 = sphi 0, %s226
    %s244 = sphi 0, %s244
    %s246 = sphi 0, %s244
    %s247 = sphi 0, %s246
    %s261 = sphi 0, %s247
    %s265 = sphi 0, %s265
    %s267 = sphi 0, %s265
    %s268 = sphi 0, %s267
    %s282 = sphi 0, %s268
    %s286 = sphi 0, %s286
    %s288 = sphi 0, %s286
    %s289 = sphi 0, %s288
    %s303 = sphi 0, %s289
    %s307 = sphi 0, %s307
    %s309 = sphi 0, %s307
    %s310 = sphi 0, %s309
    %s324 = sphi 0, %s310
    %s328 = sphi 0, %s328
    %s330 = sphi 0, %s328
    %s331 = sphi 0, %s330
    %s345 = sphi 0, %s331
    %s351 = sphi 0, %s353
    %s354 = sphi 0, %s351
    %s355 = sphi 0, %s354
    %s371 = sphi 0, %s355
  $region4: #{tpu_custom_call.1} parent=0 // loop_header_branch
    %24 = sbr.rel (%p22) target = $region8
  $region5: #{tpu_custom_call.1} parent=0 // loop_body
    %s26 = ssub.s32 %s21, 1
    %s27 = ssub.s32 %s21, 2
    %s28 = sadd.s32 %s21, 1
    %s29 = ssub.s32 %s21, %s28
    %p30 = scmp.eq.s32.totalorder %s29, 0
    %s32 = sadd.s32 %s31, 1
    %s33 = scalar_select %p30, %s31, %s32
    %p36 = pneg %p30
    %p37 = scmp.eq.s32.totalorder %s21, 1
    %p38 = por %p36, %p37
    %p39 = scmp.ne.s32.totalorder %s31, %s34
    %p40 = scmp.eq.s32.totalorder %s21, 0
    %p41 = por %p39, %p40
    %p42 = scmp.ne.s32.totalorder %s31, %s34
    %p43 = scmp.eq.s32.totalorder %s26, 1
    %p44 = por %p42, %p43
    %p45 = scmp.ne.s32.totalorder %s34, %s35
    %p46 = scmp.eq.s32.totalorder %s26, 0
    %p47 = por %p45, %p46
    %p48 = scmp.ne.s32.totalorder %s34, %s35
    %p49 = scmp.eq.s32.totalorder %s27, 1
    %p50 = por %p48, %p49
    %p52 = scmp.ne.s32.totalorder %s35, %s51
    %p53 = scmp.eq.s32.totalorder %s27, 0
    %p54 = por %p52, %p53
    %s56 = sadd.s32 %s55, 1
    %p59 = scmp.eq.s32.totalorder %s21, 1
    %p60 = scmp.ne.s32.totalorder %s55, %s57
    %p61 = scmp.eq.s32.totalorder %s21, 0
    %p62 = por %p60, %p61
    %p63 = scmp.ne.s32.totalorder %s55, %s57
    %p64 = scmp.eq.s32.totalorder %s26, 1
    %p65 = por %p63, %p64
    %p66 = scmp.ne.s32.totalorder %s57, %s58
    %p67 = scmp.eq.s32.totalorder %s26, 0
    %p68 = por %p66, %p67
    %p69 = scmp.ne.s32.totalorder %s57, %s58
    %p70 = scmp.eq.s32.totalorder %s27, 1
    %p71 = por %p69, %p70
    %p73 = scmp.ne.s32.totalorder %s58, %s72
    %p74 = scmp.eq.s32.totalorder %s27, 0
    %p75 = por %p73, %p74
    %s77 = sadd.s32 %s76, 1
    %p80 = scmp.eq.s32.totalorder %s21, 1
    %p81 = scmp.ne.s32.totalorder %s76, %s78
    %p82 = scmp.eq.s32.totalorder %s21, 0
    %p83 = por %p81, %p82
    %p84 = scmp.ne.s32.totalorder %s76, %s78
    %p85 = scmp.eq.s32.totalorder %s26, 1
    %p86 = por %p84, %p85
    %p87 = scmp.ne.s32.totalorder %s78, %s79
    %p88 = scmp.eq.s32.totalorder %s26, 0
    %p89 = por %p87, %p88
    %p90 = scmp.ne.s32.totalorder %s78, %s79
    %p91 = scmp.eq.s32.totalorder %s27, 1
    %p92 = por %p90, %p91
    %p94 = scmp.ne.s32.totalorder %s79, %s93
    %p95 = scmp.eq.s32.totalorder %s27, 0
    %p96 = por %p94, %p95
    %s98 = sadd.s32 %s97, 1
    %p101 = scmp.eq.s32.totalorder %s21, 1
    %p102 = scmp.ne.s32.totalorder %s97, %s99
    %p103 = scmp.eq.s32.totalorder %s21, 0
    %p104 = por %p102, %p103
    %p105 = scmp.ne.s32.totalorder %s97, %s99
    %p106 = scmp.eq.s32.totalorder %s26, 1
    %p107 = por %p105, %p106
    %p108 = scmp.ne.s32.totalorder %s99, %s100
    %p109 = scmp.eq.s32.totalorder %s26, 0
    %p110 = por %p108, %p109
    %p111 = scmp.ne.s32.totalorder %s99, %s100
    %p112 = scmp.eq.s32.totalorder %s27, 1
    %p113 = por %p111, %p112
    %p115 = scmp.ne.s32.totalorder %s100, %s114
    %p116 = scmp.eq.s32.totalorder %s27, 0
    %p117 = por %p115, %p116
    %s119 = sadd.s32 %s118, 1
    %p122 = scmp.eq.s32.totalorder %s21, 1
    %p123 = scmp.ne.s32.totalorder %s118, %s120
    %p124 = scmp.eq.s32.totalorder %s21, 0
    %p125 = por %p123, %p124
    %p126 = scmp.ne.s32.totalorder %s118, %s120
    %p127 = scmp.eq.s32.totalorder %s26, 1
    %p128 = por %p126, %p127
    %p129 = scmp.ne.s32.totalorder %s120, %s121
    %p130 = scmp.eq.s32.totalorder %s26, 0
    %p131 = por %p129, %p130
    %p132 = scmp.ne.s32.totalorder %s120, %s121
    %p133 = scmp.eq.s32.totalorder %s27, 1
    %p134 = por %p132, %p133
    %p136 = scmp.ne.s32.totalorder %s121, %s135
    %p137 = scmp.eq.s32.totalorder %s27, 0
    %p138 = por %p136, %p137
    %s140 = sadd.s32 %s139, 1
    %p143 = scmp.eq.s32.totalorder %s21, 1
    %p144 = scmp.ne.s32.totalorder %s139, %s141
    %p145 = scmp.eq.s32.totalorder %s21, 0
    %p146 = por %p144, %p145
    %p147 = scmp.ne.s32.totalorder %s139, %s141
    %p148 = scmp.eq.s32.totalorder %s26, 1
    %p149 = por %p147, %p148
    %p150 = scmp.ne.s32.totalorder %s141, %s142
    %p151 = scmp.eq.s32.totalorder %s26, 0
    %p152 = por %p150, %p151
    %p153 = scmp.ne.s32.totalorder %s141, %s142
    %p154 = scmp.eq.s32.totalorder %s27, 1
    %p155 = por %p153, %p154
    %p157 = scmp.ne.s32.totalorder %s142, %s156
    %p158 = scmp.eq.s32.totalorder %s27, 0
    %p159 = por %p157, %p158
    %s161 = sadd.s32 %s160, 1
    %p164 = scmp.eq.s32.totalorder %s21, 1
    %p165 = scmp.ne.s32.totalorder %s160, %s162
    %p166 = scmp.eq.s32.totalorder %s21, 0
    %p167 = por %p165, %p166
    %p168 = scmp.ne.s32.totalorder %s160, %s162
    %p169 = scmp.eq.s32.totalorder %s26, 1
    %p170 = por %p168, %p169
    %p171 = scmp.ne.s32.totalorder %s162, %s163
    %p172 = scmp.eq.s32.totalorder %s26, 0
    %p173 = por %p171, %p172
    %p174 = scmp.ne.s32.totalorder %s162, %s163
    %p175 = scmp.eq.s32.totalorder %s27, 1
    %p176 = por %p174, %p175
    %p178 = scmp.ne.s32.totalorder %s163, %s177
    %p179 = scmp.eq.s32.totalorder %s27, 0
    %p180 = por %p178, %p179
    %s182 = sadd.s32 %s181, 1
    %p185 = scmp.eq.s32.totalorder %s21, 1
    %p186 = scmp.ne.s32.totalorder %s181, %s183
    %p187 = scmp.eq.s32.totalorder %s21, 0
    %p188 = por %p186, %p187
    %p189 = scmp.ne.s32.totalorder %s181, %s183
    %p190 = scmp.eq.s32.totalorder %s26, 1
    %p191 = por %p189, %p190
    %p192 = scmp.ne.s32.totalorder %s183, %s184
    %p193 = scmp.eq.s32.totalorder %s26, 0
    %p194 = por %p192, %p193
    %p195 = scmp.ne.s32.totalorder %s183, %s184
    %p196 = scmp.eq.s32.totalorder %s27, 1
    %p197 = por %p195, %p196
    %p199 = scmp.ne.s32.totalorder %s184, %s198
    %p200 = scmp.eq.s32.totalorder %s27, 0
    %p201 = por %p199, %p200
    %s203 = sadd.s32 %s202, 1
    %p206 = scmp.eq.s32.totalorder %s21, 1
    %p207 = scmp.ne.s32.totalorder %s202, %s204
    %p208 = scmp.eq.s32.totalorder %s21, 0
    %p209 = por %p207, %p208
    %p210 = scmp.ne.s32.totalorder %s202, %s204
    %p211 = scmp.eq.s32.totalorder %s26, 1
    %p212 = por %p210, %p211
    %p213 = scmp.ne.s32.totalorder %s204, %s205
    %p214 = scmp.eq.s32.totalorder %s26, 0
    %p215 = por %p213, %p214
    %p216 = scmp.ne.s32.totalorder %s204, %s205
    %p217 = scmp.eq.s32.totalorder %s27, 1
    %p218 = por %p216, %p217
    %p220 = scmp.ne.s32.totalorder %s205, %s219
    %p221 = scmp.eq.s32.totalorder %s27, 0
    %p222 = por %p220, %p221
    %s224 = sadd.s32 %s223, 1
    %p227 = scmp.eq.s32.totalorder %s21, 1
    %p228 = scmp.ne.s32.totalorder %s223, %s225
    %p229 = scmp.eq.s32.totalorder %s21, 0
    %p230 = por %p228, %p229
    %p231 = scmp.ne.s32.totalorder %s223, %s225
    %p232 = scmp.eq.s32.totalorder %s26, 1
    %p233 = por %p231, %p232
    %p234 = scmp.ne.s32.totalorder %s225, %s226
    %p235 = scmp.eq.s32.totalorder %s26, 0
    %p236 = por %p234, %p235
    %p237 = scmp.ne.s32.totalorder %s225, %s226
    %p238 = scmp.eq.s32.totalorder %s27, 1
    %p239 = por %p237, %p238
    %p241 = scmp.ne.s32.totalorder %s226, %s240
    %p242 = scmp.eq.s32.totalorder %s27, 0
    %p243 = por %p241, %p242
    %s245 = sadd.s32 %s244, 1
    %p248 = scmp.eq.s32.totalorder %s21, 1
    %p249 = scmp.ne.s32.totalorder %s244, %s246
    %p250 = scmp.eq.s32.totalorder %s21, 0
    %p251 = por %p249, %p250
    %p252 = scmp.ne.s32.totalorder %s244, %s246
    %p253 = scmp.eq.s32.totalorder %s26, 1
    %p254 = por %p252, %p253
    %p255 = scmp.ne.s32.totalorder %s246, %s247
    %p256 = scmp.eq.s32.totalorder %s26, 0
    %p257 = por %p255, %p256
    %p258 = scmp.ne.s32.totalorder %s246, %s247
    %p259 = scmp.eq.s32.totalorder %s27, 1
    %p260 = por %p258, %p259
    %p262 = scmp.ne.s32.totalorder %s247, %s261
    %p263 = scmp.eq.s32.totalorder %s27, 0
    %p264 = por %p262, %p263
    %s266 = sadd.s32 %s265, 1
    %p269 = scmp.eq.s32.totalorder %s21, 1
    %p270 = scmp.ne.s32.totalorder %s265, %s267
    %p271 = scmp.eq.s32.totalorder %s21, 0
    %p272 = por %p270, %p271
    %p273 = scmp.ne.s32.totalorder %s265, %s267
    %p274 = scmp.eq.s32.totalorder %s26, 1
    %p275 = por %p273, %p274
    %p276 = scmp.ne.s32.totalorder %s267, %s268
    %p277 = scmp.eq.s32.totalorder %s26, 0
    %p278 = por %p276, %p277
    %p279 = scmp.ne.s32.totalorder %s267, %s268
    %p280 = scmp.eq.s32.totalorder %s27, 1
    %p281 = por %p279, %p280
    %p283 = scmp.ne.s32.totalorder %s268, %s282
    %p284 = scmp.eq.s32.totalorder %s27, 0
    %p285 = por %p283, %p284
    %s287 = sadd.s32 %s286, 1
    %p290 = scmp.eq.s32.totalorder %s21, 1
    %p291 = scmp.ne.s32.totalorder %s286, %s288
    %p292 = scmp.eq.s32.totalorder %s21, 0
    %p293 = por %p291, %p292
    %p294 = scmp.ne.s32.totalorder %s286, %s288
    %p295 = scmp.eq.s32.totalorder %s26, 1
    %p296 = por %p294, %p295
    %p297 = scmp.ne.s32.totalorder %s288, %s289
    %p298 = scmp.eq.s32.totalorder %s26, 0
    %p299 = por %p297, %p298
    %p300 = scmp.ne.s32.totalorder %s288, %s289
    %p301 = scmp.eq.s32.totalorder %s27, 1
    %p302 = por %p300, %p301
    %p304 = scmp.ne.s32.totalorder %s289, %s303
    %p305 = scmp.eq.s32.totalorder %s27, 0
    %p306 = por %p304, %p305
    %s308 = sadd.s32 %s307, 1
    %p311 = scmp.eq.s32.totalorder %s21, 1
    %p312 = scmp.ne.s32.totalorder %s307, %s309
    %p313 = scmp.eq.s32.totalorder %s21, 0
    %p314 = por %p312, %p313
    %p315 = scmp.ne.s32.totalorder %s307, %s309
    %p316 = scmp.eq.s32.totalorder %s26, 1
    %p317 = por %p315, %p316
    %p318 = scmp.ne.s32.totalorder %s309, %s310
    %p319 = scmp.eq.s32.totalorder %s26, 0
    %p320 = por %p318, %p319
    %p321 = scmp.ne.s32.totalorder %s309, %s310
    %p322 = scmp.eq.s32.totalorder %s27, 1
    %p323 = por %p321, %p322
    %p325 = scmp.ne.s32.totalorder %s310, %s324
    %p326 = scmp.eq.s32.totalorder %s27, 0
    %p327 = por %p325, %p326
    %s329 = sadd.s32 %s328, 1
    %p332 = scmp.eq.s32.totalorder %s21, 1
    %p333 = scmp.ne.s32.totalorder %s328, %s330
    %p334 = scmp.eq.s32.totalorder %s21, 0
    %p335 = por %p333, %p334
    %p336 = scmp.ne.s32.totalorder %s328, %s330
    %p337 = scmp.eq.s32.totalorder %s26, 1
    %p338 = por %p336, %p337
    %p339 = scmp.ne.s32.totalorder %s330, %s331
    %p340 = scmp.eq.s32.totalorder %s26, 0
    %p341 = por %p339, %p340
    %p342 = scmp.ne.s32.totalorder %s330, %s331
    %p343 = scmp.eq.s32.totalorder %s27, 1
    %p344 = por %p342, %p343
    %p346 = scmp.ne.s32.totalorder %s331, %s345
    %p347 = scmp.eq.s32.totalorder %s27, 0
    %p348 = por %p346, %p347
    %s349 = ssub.s32 %s21, %s28
    %p350 = scmp.eq.s32.totalorder %s349, 0
    %s352 = sadd.s32 %s351, 1
    %s353 = scalar_select %p350, %s351, %s352
    %p356 = pneg %p350
    %p357 = scmp.eq.s32.totalorder %s21, 1
    %p358 = por %p356, %p357
    %p359 = scmp.ne.s32.totalorder %s351, %s354
    %p360 = scmp.eq.s32.totalorder %s21, 0
    %p361 = por %p359, %p360
    %p362 = scmp.ne.s32.totalorder %s351, %s354
    %p363 = scmp.eq.s32.totalorder %s26, 1
    %p364 = por %p362, %p363
    %p365 = scmp.ne.s32.totalorder %s354, %s355
    %p366 = scmp.eq.s32.totalorder %s26, 0
    %p367 = por %p365, %p366
    %p368 = scmp.ne.s32.totalorder %s354, %s355
    %p369 = scmp.eq.s32.totalorder %s27, 1
    %p370 = por %p368, %p369
    %p372 = scmp.ne.s32.totalorder %s355, %s371
    %p373 = scmp.eq.s32.totalorder %s27, 0
    %p374 = por %p372, %p373
    %p375 = scmp.le.s32.totalorder 1, %s21
    %p376 = scmp.lt.s32.totalorder %s21, 3
    %p377 = pnand %p375, %p376
    %p378 = pneg %p377
    // Predicated region
    $region9: #{tpu_custom_call.1} parent=5 // pred_check
      _
    $region10: #{tpu_custom_call.1} parent=5 // pred_check_branch
      %380 = sbr.rel (%p377) target = $region12
    $region11: #{tpu_custom_call.1} parent=5 // pred_region
      %s381 = ssub.s32 %s21, 1
      // Predicated region
      $region13: #{tpu_custom_call.1} parent=11 // pred_check
        %p382 = pneg %p68
      $region14: #{tpu_custom_call.1} parent=11 // pred_check_branch
        %384 = sbr.rel (%p382) target = $region16
      $region15: #{tpu_custom_call.1} parent=11 // pred_region
        _
      $region16: #{tpu_custom_call.1} parent=11 // pred_fallthru
        _
      // Predicated region
      $region17: #{tpu_custom_call.1} parent=11 // pred_check
        %p385 = pneg %p89
      $region18: #{tpu_custom_call.1} parent=11 // pred_check_branch
        %387 = sbr.rel (%p385) target = $region20
      $region19: #{tpu_custom_call.1} parent=11 // pred_region
        _
      $region20: #{tpu_custom_call.1} parent=11 // pred_fallthru
        _
      // Predicated region
      $region21: #{tpu_custom_call.1} parent=11 // pred_check
        %p388 = pneg %p110
      $region22: #{tpu_custom_call.1} parent=11 // pred_check_branch
        %390 = sbr.rel (%p388) target = $region24
      $region23: #{tpu_custom_call.1} parent=11 // pred_region
        _
      $region24: #{tpu_custom_call.1} parent=11 // pred_fallthru
        _
      // Predicated region
      $region25: #{tpu_custom_call.1} parent=11 // pred_check
        %p391 = pneg %p131
      $region26: #{tpu_custom_call.1} parent=11 // pred_check_branch
        %393 = sbr.rel (%p391) target = $region28
      $region27: #{tpu_custom_call.1} parent=11 // pred_region
        _
      $region28: #{tpu_custom_call.1} parent=11 // pred_fallthru
        _
      // Predicated region
      $region29: #{tpu_custom_call.1} parent=11 // pred_check
        %p394 = pneg %p152
      $region30: #{tpu_custom_call.1} parent=11 // pred_check_branch
        %396 = sbr.rel (%p394) target = $region32
      $region31: #{tpu_custom_call.1} parent=11 // pred_region
        _
      $region32: #{tpu_custom_call.1} parent=11 // pred_fallthru
        _
      // Predicated region
      $region33: #{tpu_custom_call.1} parent=11 // pred_check
        %p397 = pneg %p173
      $region34: #{tpu_custom_call.1} parent=11 // pred_check_branch
        %399 = sbr.rel (%p397) target = $region36
      $region35: #{tpu_custom_call.1} parent=11 // pred_region
        _
      $region36: #{tpu_custom_call.1} parent=11 // pred_fallthru
        _
      // Predicated region
      $region37: #{tpu_custom_call.1} parent=11 // pred_check
        %p400 = pneg %p194
      $region38: #{tpu_custom_call.1} parent=11 // pred_check_branch
        %402 = sbr.rel (%p400) target = $region40
      $region39: #{tpu_custom_call.1} parent=11 // pred_region
        _
      $region40: #{tpu_custom_call.1} parent=11 // pred_fallthru
        _
      // Predicated region
      $region41: #{tpu_custom_call.1} parent=11 // pred_check
        %p403 = pneg %p215
      $region42: #{tpu_custom_call.1} parent=11 // pred_check_branch
        %405 = sbr.rel (%p403) target = $region44
      $region43: #{tpu_custom_call.1} parent=11 // pred_region
        _
      $region44: #{tpu_custom_call.1} parent=11 // pred_fallthru
        _
      // Predicated region
      $region45: #{tpu_custom_call.1} parent=11 // pred_check
        %p406 = pneg %p236
      $region46: #{tpu_custom_call.1} parent=11 // pred_check_branch
        %408 = sbr.rel (%p406) target = $region48
      $region47: #{tpu_custom_call.1} parent=11 // pred_region
        _
      $region48: #{tpu_custom_call.1} parent=11 // pred_fallthru
        _
      // Predicated region
      $region49: #{tpu_custom_call.1} parent=11 // pred_check
        %p409 = pneg %p257
      $region50: #{tpu_custom_call.1} parent=11 // pred_check_branch
        %411 = sbr.rel (%p409) target = $region52
      $region51: #{tpu_custom_call.1} parent=11 // pred_region
        _
      $region52: #{tpu_custom_call.1} parent=11 // pred_fallthru
        _
      // Predicated region
      $region53: #{tpu_custom_call.1} parent=11 // pred_check
        %p412 = pneg %p278
      $region54: #{tpu_custom_call.1} parent=11 // pred_check_branch
        %414 = sbr.rel (%p412) target = $region56
      $region55: #{tpu_custom_call.1} parent=11 // pred_region
        _
      $region56: #{tpu_custom_call.1} parent=11 // pred_fallthru
        _
      // Predicated region
      $region57: #{tpu_custom_call.1} parent=11 // pred_check
        %p415 = pneg %p299
      $region58: #{tpu_custom_call.1} parent=11 // pred_check_branch
        %417 = sbr.rel (%p415) target = $region60
      $region59: #{tpu_custom_call.1} parent=11 // pred_region
        _
      $region60: #{tpu_custom_call.1} parent=11 // pred_fallthru
        _
      // Predicated region
      $region61: #{tpu_custom_call.1} parent=11 // pred_check
        %p418 = pneg %p320
      $region62: #{tpu_custom_call.1} parent=11 // pred_check_branch
        %420 = sbr.rel (%p418) target = $region64
      $region63: #{tpu_custom_call.1} parent=11 // pred_region
        _
      $region64: #{tpu_custom_call.1} parent=11 // pred_fallthru
        _
      // Predicated region
      $region65: #{tpu_custom_call.1} parent=11 // pred_check
        %p421 = pneg %p341
      $region66: #{tpu_custom_call.1} parent=11 // pred_check_branch
        %423 = sbr.rel (%p421) target = $region68
      $region67: #{tpu_custom_call.1} parent=11 // pred_region
        _
      $region68: #{tpu_custom_call.1} parent=11 // pred_fallthru
        _
    $region12: #{tpu_custom_call.1} parent=5 // pred_fallthru
      _
    %p424 = scmp.lt.s32.totalorder %s21, 2
    // Predicated region
    $region69: #{tpu_custom_call.1} parent=5 // pred_check
      %p425 = pneg %p424
    $region70: #{tpu_custom_call.1} parent=5 // pred_check_branch
      %427 = sbr.rel (%p425) target = $region72
    $region71: #{tpu_custom_call.1} parent=5 // pred_region
      // Predicated region
      $region73: #{tpu_custom_call.1} parent=71 // pred_check
        %p428 = pneg %p41
      $region74: #{tpu_custom_call.1} parent=71 // pred_check_branch
        %430 = sbr.rel (%p428) target = $region76
      $region75: #{tpu_custom_call.1} parent=71 // pred_region
        %p431 = scmp.lt.s32.totalorder %s21, 1
        %s432 = scalar_select %p431, %s21, 1
        %s433 = smul.addr %s432, 16
        %s434 = smul.addr %s433, 8
        %s435 = scalar_lea.vmem %s0, %s434
      $region76: #{tpu_custom_call.1} parent=71 // pred_fallthru
        _
    $region72: #{tpu_custom_call.1} parent=5 // pred_fallthru
      _
    %p436 = scmp.le.s32.totalorder 1, %s21
    %p437 = scmp.lt.s32.totalorder %s21, 3
    %p438 = pnand %p436, %p437
    %p439 = pneg %p438
    // Predicated region
    $region77: #{tpu_custom_call.1} parent=5 // pred_check
      _
    $region78: #{tpu_custom_call.1} parent=5 // pred_check_branch
      %441 = sbr.rel (%p438) target = $region80
    $region79: #{tpu_custom_call.1} parent=5 // pred_region
      %s442 = ssub.s32 %s21, 1
      %p443 = scmp.lt.s32.totalorder %s26, 1
      %s444 = scalar_select %p443, %s26, 1
      %s445 = smul.addr %s444, 16
      %s446 = smul.addr %s445, 8
      %s447 = scalar_lea.vmem %s0, %s446
      %p448 = pneg %p47
      %p449 = pneg %p44
      %p450 = pneg %p68
      %p451 = pneg %p65
      %p452 = pneg %p89
      %p453 = pneg %p86
      %p454 = pneg %p110
      %p455 = pneg %p107
      %p456 = pneg %p131
      %p457 = pneg %p128
      %p458 = pneg %p152
      %p459 = pneg %p149
      %p460 = pneg %p173
      %p461 = pneg %p170
      %p462 = pneg %p194
      %p463 = pneg %p191
      %p464 = pneg %p215
      %p465 = pneg %p212
      %p466 = pneg %p236
      %p467 = pneg %p233
      %p468 = pneg %p257
      %p469 = pneg %p254
      %p470 = pneg %p278
      %p471 = pneg %p275
      %p472 = pneg %p299
      %p473 = pneg %p296
      %p474 = pneg %p320
      %p475 = pneg %p317
      %p476 = pneg %p341
      %p477 = pneg %p338
      %p478 = pneg %p367
      %p479 = pneg %p364
      %p480 = scmp.lt.s32.totalorder %s26, 1
      %s481 = scalar_select %p480, %s26, 1
      %s482 = smul.addr %s481, 16
      %s483 = smul.addr %s482, 8
      %s484 = scalar_lea.vmem %s15, %s483
      %p485 = scmp.lt.s32.totalorder %s26, 1
      %s486 = scalar_select %p485, %s26, 1
      %s487 = smul.addr %s486, 16
      %s488 = smul.addr %s487, 8
      %s489 = scalar_lea.vmem %s0, %s488
      %p490 = scmp.lt.s32.totalorder %s26, 1
      %s491 = scalar_select %p490, %s26, 1
      %s492 = smul.addr %s491, 16
      %s493 = smul.addr %s492, 8
      %s494 = scalar_lea.vmem %s15, %s493
      %v496 = vld [vmem:[%s489] sm:$0xff]
      %v497 = vld [vmem:[%s489 + $0x8] sm:$0xff]
      %v498 = vld [vmem:[%s489 + $0x10] sm:$0xff]
      %v499 = vld [vmem:[%s489 + $0x18] sm:$0xff]
      %v500 = vld [vmem:[%s489 + $0x20] sm:$0xff]
      %v501 = vld [vmem:[%s489 + $0x28] sm:$0xff]
      %v502 = vld [vmem:[%s489 + $0x30] sm:$0xff]
      %v503 = vld [vmem:[%s489 + $0x38] sm:$0xff]
      %v504 = vld [vmem:[%s489 + $0x40] sm:$0xff]
      %v505 = vld [vmem:[%s489 + $0x48] sm:$0xff]
      %v506 = vld [vmem:[%s489 + $0x50] sm:$0xff]
      %v507 = vld [vmem:[%s489 + $0x58] sm:$0xff]
      %v508 = vld [vmem:[%s489 + $0x60] sm:$0xff]
      %v509 = vld [vmem:[%s489 + $0x68] sm:$0xff]
      %v510 = vld [vmem:[%s489 + $0x70] sm:$0xff]
      %v511 = vld [vmem:[%s489 + $0x78] sm:$0xff]
      %v512 = vld [vmem:[%s1] sm:$0x1]
      %v513 = vld [vmem:[%s2] sm:$0x1]
      %vm514 = vcmask 261120
      %v515 = vsel %vm514, %v496, 0.0
      %516 = vadd.xlane.f32.xlu0 %v515
      %v517 = vpop.xlane.xlu0 %516
      %v518 = vsel %vm514, %v497, 0.0
      %519 = vadd.xlane.f32.xlu0 %v518
      %v520 = vpop.xlane.xlu0 %519
      %v521 = vsel %vm514, %v498, 0.0
      %522 = vadd.xlane.f32.xlu0 %v521
      %v523 = vpop.xlane.xlu0 %522
      %v524 = vsel %vm514, %v499, 0.0
      %525 = vadd.xlane.f32.xlu0 %v524
      %v526 = vpop.xlane.xlu0 %525
      %v527 = vsel %vm514, %v500, 0.0
      %528 = vadd.xlane.f32.xlu0 %v527
      %v529 = vpop.xlane.xlu0 %528
      %v530 = vsel %vm514, %v501, 0.0
      %531 = vadd.xlane.f32.xlu0 %v530
      %v532 = vpop.xlane.xlu0 %531
      %v533 = vsel %vm514, %v502, 0.0
      %534 = vadd.xlane.f32.xlu0 %v533
      %v535 = vpop.xlane.xlu0 %534
      %v536 = vsel %vm514, %v503, 0.0
      %537 = vadd.xlane.f32.xlu0 %v536
      %v538 = vpop.xlane.xlu0 %537
      %v539 = vsel %vm514, %v504, 0.0
      %540 = vadd.xlane.f32.xlu0 %v539
      %v541 = vpop.xlane.xlu0 %540
      %v542 = vsel %vm514, %v505, 0.0
      %543 = vadd.xlane.f32.xlu0 %v542
      %v544 = vpop.xlane.xlu0 %543
      %v545 = vsel %vm514, %v506, 0.0
      %546 = vadd.xlane.f32.xlu0 %v545
      %v547 = vpop.xlane.xlu0 %546
      %v548 = vsel %vm514, %v507, 0.0
      %549 = vadd.xlane.f32.xlu0 %v548
      %v550 = vpop.xlane.xlu0 %549
      %v551 = vsel %vm514, %v508, 0.0
      %552 = vadd.xlane.f32.xlu0 %v551
      %v553 = vpop.xlane.xlu0 %552
      %v554 = vsel %vm514, %v509, 0.0
      %555 = vadd.xlane.f32.xlu0 %v554
      %v556 = vpop.xlane.xlu0 %555
      %v557 = vsel %vm514, %v510, 0.0
      %558 = vadd.xlane.f32.xlu0 %v557
      %v559 = vpop.xlane.xlu0 %558
      %v560 = vsel %vm514, %v511, 0.0
      %561 = vadd.xlane.f32.xlu0 %v560
      %v562 = vpop.xlane.xlu0 %561
      %v563 = vrcp.pop 32.0
      %v564 = vmul.f32 %v517, %v563
      %v565 = vmul.f32 %v520, %v563
      %v566 = vmul.f32 %v523, %v563
      %v567 = vmul.f32 %v526, %v563
      %v568 = vmul.f32 %v529, %v563
      %v569 = vmul.f32 %v532, %v563
      %v570 = vmul.f32 %v535, %v563
      %v571 = vmul.f32 %v538, %v563
      %v572 = vmul.f32 %v541, %v563
      %v573 = vmul.f32 %v544, %v563
      %v574 = vmul.f32 %v547, %v563
      %v575 = vmul.f32 %v550, %v563
      %v576 = vmul.f32 %v553, %v563
      %v577 = vmul.f32 %v556, %v563
      %v578 = vmul.f32 %v559, %v563
      %v579 = vmul.f32 %v562, %v563
      %v580 = vsub.f32 %v496, %v564
      %v581 = vsub.f32 %v497, %v565
      %v582 = vsub.f32 %v498, %v566
      %v583 = vsub.f32 %v499, %v567
      %v584 = vsub.f32 %v500, %v568
      %v585 = vsub.f32 %v501, %v569
      %v586 = vsub.f32 %v502, %v570
      %v587 = vsub.f32 %v503, %v571
      %v588 = vsub.f32 %v504, %v572
      %v589 = vsub.f32 %v505, %v573
      %v590 = vsub.f32 %v506, %v574
      %v591 = vsub.f32 %v507, %v575
      %v592 = vsub.f32 %v508, %v576
      %v593 = vsub.f32 %v509, %v577
      %v594 = vsub.f32 %v510, %v578
      %v595 = vsub.f32 %v511, %v579
      %v596 = vmul.f32 %v580, %v580
      %v597 = vmul.f32 %v581, %v581
      %v598 = vmul.f32 %v582, %v582
      %v599 = vmul.f32 %v583, %v583
      %v600 = vmul.f32 %v584, %v584
      %v601 = vmul.f32 %v585, %v585
      %v602 = vmul.f32 %v586, %v586
      %v603 = vmul.f32 %v587, %v587
      %v604 = vmul.f32 %v588, %v588
      %v605 = vmul.f32 %v589, %v589
      %v606 = vmul.f32 %v590, %v590
      %v607 = vmul.f32 %v591, %v591
      %v608 = vmul.f32 %v592, %v592
      %v609 = vmul.f32 %v593, %v593
      %v610 = vmul.f32 %v594, %v594
      %v611 = vmul.f32 %v595, %v595
      %v612 = vsel %vm514, %v596, 0.0
      %613 = vadd.xlane.f32.xlu0 %v612
      %v614 = vpop.xlane.xlu0 %613
      %v615 = vsel %vm514, %v597, 0.0
      %616 = vadd.xlane.f32.xlu0 %v615
      %v617 = vpop.xlane.xlu0 %616
      %v618 = vsel %vm514, %v598, 0.0
      %619 = vadd.xlane.f32.xlu0 %v618
      %v620 = vpop.xlane.xlu0 %619
      %v621 = vsel %vm514, %v599, 0.0
      %622 = vadd.xlane.f32.xlu0 %v621
      %v623 = vpop.xlane.xlu0 %622
      %v624 = vsel %vm514, %v600, 0.0
      %625 = vadd.xlane.f32.xlu0 %v624
      %v626 = vpop.xlane.xlu0 %625
      %v627 = vsel %vm514, %v601, 0.0
      %628 = vadd.xlane.f32.xlu0 %v627
      %v629 = vpop.xlane.xlu0 %628
      %v630 = vsel %vm514, %v602, 0.0
      %631 = vadd.xlane.f32.xlu0 %v630
      %v632 = vpop.xlane.xlu0 %631
      %v633 = vsel %vm514, %v603, 0.0
      %634 = vadd.xlane.f32.xlu0 %v633
      %v635 = vpop.xlane.xlu0 %634
      %v636 = vsel %vm514, %v604, 0.0
      %637 = vadd.xlane.f32.xlu0 %v636
      %v638 = vpop.xlane.xlu0 %637
      %v639 = vsel %vm514, %v605, 0.0
      %640 = vadd.xlane.f32.xlu0 %v639
      %v641 = vpop.xlane.xlu0 %640
      %v642 = vsel %vm514, %v606, 0.0
      %643 = vadd.xlane.f32.xlu0 %v642
      %v644 = vpop.xlane.xlu0 %643
      %v645 = vsel %vm514, %v607, 0.0
      %646 = vadd.xlane.f32.xlu0 %v645
      %v647 = vpop.xlane.xlu0 %646
      %v648 = vsel %vm514, %v608, 0.0
      %649 = vadd.xlane.f32.xlu0 %v648
      %v650 = vpop.xlane.xlu0 %649
      %v651 = vsel %vm514, %v609, 0.0
      %652 = vadd.xlane.f32.xlu0 %v651
      %v653 = vpop.xlane.xlu0 %652
      %v654 = vsel %vm514, %v610, 0.0
      %655 = vadd.xlane.f32.xlu0 %v654
      %v656 = vpop.xlane.xlu0 %655
      %v657 = vsel %vm514, %v611, 0.0
      %658 = vadd.xlane.f32.xlu0 %v657
      %v659 = vpop.xlane.xlu0 %658
      %v660 = vmul.f32 %v614, %v563
      %v661 = vmul.f32 %v617, %v563
      %v662 = vmul.f32 %v620, %v563
      %v663 = vmul.f32 %v623, %v563
      %v664 = vmul.f32 %v626, %v563
      %v665 = vmul.f32 %v629, %v563
      %v666 = vmul.f32 %v632, %v563
      %v667 = vmul.f32 %v635, %v563
      %v668 = vmul.f32 %v638, %v563
      %v669 = vmul.f32 %v641, %v563
      %v670 = vmul.f32 %v644, %v563
      %v671 = vmul.f32 %v647, %v563
      %v672 = vmul.f32 %v650, %v563
      %v673 = vmul.f32 %v653, %v563
      %v674 = vmul.f32 %v656, %v563
      %v675 = vmul.f32 %v659, %v563
      %v676 = vadd.f32 %v660, 1e-06
      %v677 = vadd.f32 %v661, 1e-06
      %v678 = vadd.f32 %v662, 1e-06
      %v679 = vadd.f32 %v663, 1e-06
      %v680 = vadd.f32 %v664, 1e-06
      %v681 = vadd.f32 %v665, 1e-06
      %v682 = vadd.f32 %v666, 1e-06
      %v683 = vadd.f32 %v667, 1e-06
      %v684 = vadd.f32 %v668, 1e-06
      %v685 = vadd.f32 %v669, 1e-06
      %v686 = vadd.f32 %v670, 1e-06
      %v687 = vadd.f32 %v671, 1e-06
      %v688 = vadd.f32 %v672, 1e-06
      %v689 = vadd.f32 %v673, 1e-06
      %v690 = vadd.f32 %v674, 1e-06
      %v691 = vadd.f32 %v675, 1e-06
      %v692 = vrsqrt.pop %v676
      %v693 = vrsqrt.pop %v677
      %v694 = vrsqrt.pop %v678
      %v695 = vrsqrt.pop %v679
      %v696 = vrsqrt.pop %v680
      %v697 = vrsqrt.pop %v681
      %v698 = vrsqrt.pop %v682
      %v699 = vrsqrt.pop %v683
      %v700 = vrsqrt.pop %v684
      %v701 = vrsqrt.pop %v685
      %v702 = vrsqrt.pop %v686
      %v703 = vrsqrt.pop %v687
      %v704 = vrsqrt.pop %v688
      %v705 = vrsqrt.pop %v689
      %v706 = vrsqrt.pop %v690
      %v707 = vrsqrt.pop %v691
      %v708 = vmul.f32 %v580, %v692
      %v709 = vmul.f32 %v581, %v693
      %v710 = vmul.f32 %v582, %v694
      %v711 = vmul.f32 %v583, %v695
      %v712 = vmul.f32 %v584, %v696
      %v713 = vmul.f32 %v585, %v697
      %v714 = vmul.f32 %v586, %v698
      %v715 = vmul.f32 %v587, %v699
      %v716 = vmul.f32 %v588, %v700
      %v717 = vmul.f32 %v589, %v701
      %v718 = vmul.f32 %v590, %v702
      %v719 = vmul.f32 %v591, %v703
      %v720 = vmul.f32 %v592, %v704
      %v721 = vmul.f32 %v593, %v705
      %v722 = vmul.f32 %v594, %v706
      %v723 = vmul.f32 %v595, %v707
      %v725 = vlaneseq
      %v726 = vshrl.u32 %v725, 7
      %v727 = vsub.s32 0, %v726
      %v728 = vrot.slane %v512, %v727
      %v730 = vmul.f32 %v708, %v728
      %v731 = vmul.f32 %v709, %v728
      %v732 = vmul.f32 %v710, %v728
      %v733 = vmul.f32 %v711, %v728
      %v734 = vmul.f32 %v712, %v728
      %v735 = vmul.f32 %v713, %v728
      %v736 = vmul.f32 %v714, %v728
      %v737 = vmul.f32 %v715, %v728
      %v738 = vmul.f32 %v716, %v728
      %v739 = vmul.f32 %v717, %v728
      %v740 = vmul.f32 %v718, %v728
      %v741 = vmul.f32 %v719, %v728
      %v742 = vmul.f32 %v720, %v728
      %v743 = vmul.f32 %v721, %v728
      %v744 = vmul.f32 %v722, %v728
      %v745 = vmul.f32 %v723, %v728
      %v747 = vlaneseq
      %v748 = vshrl.u32 %v747, 7
      %v749 = vsub.s32 0, %v748
      %v750 = vrot.slane %v513, %v749
      %v752 = vadd.f32 %v730, %v750
      %v753 = vadd.f32 %v731, %v750
      %v754 = vadd.f32 %v732, %v750
      %v755 = vadd.f32 %v733, %v750
      %v756 = vadd.f32 %v734, %v750
      %v757 = vadd.f32 %v735, %v750
      %v758 = vadd.f32 %v736, %v750
      %v759 = vadd.f32 %v737, %v750
      %v760 = vadd.f32 %v738, %v750
      %v761 = vadd.f32 %v739, %v750
      %v762 = vadd.f32 %v740, %v750
      %v763 = vadd.f32 %v741, %v750
      %v764 = vadd.f32 %v742, %v750
      %v765 = vadd.f32 %v743, %v750
      %v766 = vadd.f32 %v744, %v750
      %v767 = vadd.f32 %v745, %v750
      %v768 = vpack.c.bf16 %v753, %v752
      %v769 = vpack.c.bf16 %v755, %v754
      %v770 = vpack.c.bf16 %v757, %v756
      %v771 = vpack.c.bf16 %v759, %v758
      %v772 = vpack.c.bf16 %v761, %v760
      %v773 = vpack.c.bf16 %v763, %v762
      %v774 = vpack.c.bf16 %v765, %v764
      %v775 = vpack.c.bf16 %v767, %v766
      %v776 = vlaneseq
      %v777 = vand.u32 %v776, 127
      %vm778 = vcmp.lt.s32.totalorder %v777, 8
      %v779 = vsel %vm778, 0.0, -inf
      %780 = vst.msk [vmem:[#allocation2] sm:$0xff] %vm514, 0.0
      %781 = vst.msk [vmem:[#allocation2 + $0x8] sm:$0xff] %vm514, 0.0
      %782 = vst.msk [vmem:[#allocation2 + $0x10] sm:$0xff] %vm514, 0.0
      %783 = vst.msk [vmem:[#allocation2 + $0x18] sm:$0xff] %vm514, 0.0
      %784 = vst.msk [vmem:[#allocation2 + $0x20] sm:$0xff] %vm514, 0.0
      %785 = vst.msk [vmem:[#allocation2 + $0x28] sm:$0xff] %vm514, 0.0
      %786 = vst.msk [vmem:[#allocation2 + $0x30] sm:$0xff] %vm514, 0.0
      %787 = vst.msk [vmem:[#allocation2 + $0x38] sm:$0xff] %vm514, 0.0
      %788 = vst.msk [vmem:[#allocation2 + $0x40] sm:$0xff] %vm514, 0.0
      %789 = vst.msk [vmem:[#allocation2 + $0x48] sm:$0xff] %vm514, 0.0
      %790 = vst.msk [vmem:[#allocation2 + $0x50] sm:$0xff] %vm514, 0.0
      %791 = vst.msk [vmem:[#allocation2 + $0x58] sm:$0xff] %vm514, 0.0
      %792 = vst.msk [vmem:[#allocation2 + $0x60] sm:$0xff] %vm514, 0.0
      %793 = vst.msk [vmem:[#allocation2 + $0x68] sm:$0xff] %vm514, 0.0
      %794 = vst.msk [vmem:[#allocation2 + $0x70] sm:$0xff] %vm514, 0.0
      %795 = vst.msk [vmem:[#allocation2 + $0x78] sm:$0xff] %vm514, 0.0
      loop: start=0, step=1, limit=4
      $region81: #{tpu_custom_call.1} parent=79 // loop_pre_header
        _
      $region82: #{tpu_custom_call.1} parent=79 // loop_header
        %s797 = sphi 0, %s801
        %p798 = scmp.ge.s32.totalorder %s797, 4
      $region83: #{tpu_custom_call.1} parent=79 // loop_header_branch
        %800 = sbr.rel (%p798) target = $region87
      $region84: #{tpu_custom_call.1} parent=79 // loop_body
        %s802 = smul.u32 %s797, 4
        %s803 = smul.addr %s802, 4
        %s804 = scalar_lea.vmem %s3, %s803
        %v805 = vld [vmem:[%s804] sm:$0xf]
        %v806 = vld [vmem:[%s804 + $0x4] sm:$0xf]
        %v807 = vld [vmem:[%s804 + $0x8] sm:$0xf]
        %v808 = vld [vmem:[%s804 + $0xc] sm:$0xf]
        %s809 = scalar_lea.vmem %s4, %s797
        %v810 = vld [vmem:[%s809] sm:$0x1]
        %v812 = vlaneseq
        %v813 = vshrl.u32 %v812, 7
        %v814 = vsub.s32 0, %v813
        %v815 = vrot.slane %v810, %v814
        %v821 = vunpack.c.l.b16 %v805
        %v822 = vunpack.c.l.b16 %v806
        %v823 = vunpack.c.l.b16 %v807
        %v824 = vunpack.c.l.b16 %v808
        %v825 = vpack.c.b16 %v822, %v821
        %v826 = vpack.c.b16 %v824, %v823
        %v830 = vsel %vm514, %v768, 0
        %v833 = vsel %vm514, %v769, 0
        %v836 = vsel %vm514, %v770, 0
        %v839 = vsel %vm514, %v771, 0
        %v842 = vsel %vm514, %v772, 0
        %v845 = vsel %vm514, %v773, 0
        %v848 = vsel %vm514, %v774, 0
        %v851 = vsel %vm514, %v775, 0
        %853 = vmatprep.subr.bf16.mxu0 0
        %854 = vmatpush1.bf16.msra.mxu0 %v825
        %855 = vmatprep.subr.bf16.mxu0 0
        %856 = vmatpush1.bf16.msra.mxu0 %v826
        %857 = vmatprep.subr.bf16.mxu0 0
        %858 = vmatpush1.bf16.msra.mxu0 0
        %859 = vmatprep.subr.bf16.mxu0 0
        %860 = vmatpush1.bf16.msra.mxu0 0
        %861 = vmatprep.subr.bf16.mxu0 0
        %862 = vmatpush1.bf16.msra.mxu0 0
        %863 = vmatprep.subr.bf16.mxu0 0
        %864 = vmatpush1.bf16.msra.mxu0 0
        %865 = vmatprep.subr.bf16.mxu0 0
        %866 = vmatpush1.bf16.msra.mxu0 0
        %867 = vmatprep.subr.bf16.mxu0 0
        %868 = vmatpush1.bf16.msra.mxu0 0
        %869 = vmatprep.subr.bf16.mxu0 0
        %870 = vmatpush1.bf16.msra.mxu0 0
        %871 = vmatprep.subr.bf16.mxu0 0
        %872 = vmatpush1.bf16.msra.mxu0 0
        %873 = vmatprep.subr.bf16.mxu0 0
        %874 = vmatpush1.bf16.msra.mxu0 0
        %875 = vmatprep.subr.bf16.mxu0 0
        %876 = vmatpush1.bf16.msra.mxu0 0
        %877 = vmatprep.subr.bf16.mxu0 0
        %878 = vmatpush1.bf16.msra.mxu0 0
        %879 = vmatprep.subr.bf16.mxu0 0
        %880 = vmatpush1.bf16.msra.mxu0 0
        %881 = vmatprep.subr.bf16.mxu0 0
        %882 = vmatpush1.bf16.msra.mxu0 0
        %883 = vmatprep.subr.bf16.mxu0 0
        %884 = vmatpush1.bf16.msra.mxu0 0
        %885 = vmatprep.mubr.bf16.mxu0 0
        %886 = vmatmul.mubr.bf16.gmra.mrb[0].mxu0 %v830
        %v887 = vpop.f32.mrb[0].mxu0
        %v888 = vadd.f32 %v815, %v887
        %v889 = vpop.f32.mrb[0].mxu0
        %v890 = vpop.f32.mrb[0].mxu0
        %v891 = vadd.f32 %v815, %v890
        %v892 = vpop.f32.mrb[0].mxu0
        %893 = vmatprep.mubr.bf16.mxu0 0
        %894 = vmatmul.mubr.bf16.gmra.mrb[0].mxu0 %v833
        %v895 = vpop.f32.mrb[0].mxu0
        %v896 = vadd.f32 %v815, %v895
        %v897 = vpop.f32.mrb[0].mxu0
        %v898 = vpop.f32.mrb[0].mxu0
        %v899 = vadd.f32 %v815, %v898
        %v900 = vpop.f32.mrb[0].mxu0
        %901 = vmatprep.mubr.bf16.mxu0 0
        %902 = vmatmul.mubr.bf16.gmra.mrb[0].mxu0 %v836
        %v903 = vpop.f32.mrb[0].mxu0
        %v904 = vadd.f32 %v815, %v903
        %v905 = vpop.f32.mrb[0].mxu0
        %v906 = vpop.f32.mrb[0].mxu0
        %v907 = vadd.f32 %v815, %v906
        %v908 = vpop.f32.mrb[0].mxu0
        %909 = vmatprep.mubr.bf16.mxu0 0
        %910 = vmatmul.mubr.bf16.gmra.mrb[0].mxu0 %v839
        %v911 = vpop.f32.mrb[0].mxu0
        %v912 = vadd.f32 %v815, %v911
        %v913 = vpop.f32.mrb[0].mxu0
        %v914 = vpop.f32.mrb[0].mxu0
        %v915 = vadd.f32 %v815, %v914
        %v916 = vpop.f32.mrb[0].mxu0
        %917 = vmatprep.mubr.bf16.mxu0 0
        %918 = vmatmul.mubr.bf16.gmra.mrb[0].mxu0 %v842
        %v919 = vpop.f32.mrb[0].mxu0
        %v920 = vadd.f32 %v815, %v919
        %v921 = vpop.f32.mrb[0].mxu0
        %v922 = vpop.f32.mrb[0].mxu0
        %v923 = vadd.f32 %v815, %v922
        %v924 = vpop.f32.mrb[0].mxu0
        %925 = vmatprep.mubr.bf16.mxu0 0
        %926 = vmatmul.mubr.bf16.gmra.mrb[0].mxu0 %v845
        %v927 = vpop.f32.mrb[0].mxu0
        %v928 = vadd.f32 %v815, %v927
        %v929 = vpop.f32.mrb[0].mxu0
        %v930 = vpop.f32.mrb[0].mxu0
        %v931 = vadd.f32 %v815, %v930
        %v932 = vpop.f32.mrb[0].mxu0
        %933 = vmatprep.mubr.bf16.mxu0 0
        %934 = vmatmul.mubr.bf16.gmra.mrb[0].mxu0 %v848
        %v935 = vpop.f32.mrb[0].mxu0
        %v936 = vadd.f32 %v815, %v935
        %v937 = vpop.f32.mrb[0].mxu0
        %v938 = vpop.f32.mrb[0].mxu0
        %v939 = vadd.f32 %v815, %v938
        %v940 = vpop.f32.mrb[0].mxu0
        %941 = vmatprep.mubr.bf16.mxu0 0
        %942 = vmatmul.mubr.bf16.gmra.mrb[0].mxu0 %v851
        %v943 = vpop.f32.mrb[0].mxu0
        %v944 = vadd.f32 %v815, %v943
        %v945 = vpop.f32.mrb[0].mxu0
        %v946 = vpop.f32.mrb[0].mxu0
        %v947 = vadd.f32 %v815, %v946
        %v948 = vpop.f32.mrb[0].mxu0
        %949 = vdwg.mxu0
        %v950 = vpack.c.bf16 %v891, %v888
        %v951 = vpack.c.bf16 %v899, %v896
        %v952 = vpack.c.bf16 %v907, %v904
        %v953 = vpack.c.bf16 %v915, %v912
        %v954 = vpack.c.bf16 %v923, %v920
        %v955 = vpack.c.bf16 %v931, %v928
        %v956 = vpack.c.bf16 %v939, %v936
        %v957 = vpack.c.bf16 %v947, %v944
        %966 = vrot.lane.b32.xlu0 %v950, 120
        %v967 = vpop.permute.xlu0 %966
        %968 = vrot.lane.b32.xlu0 %v951, 120
        %v969 = vpop.permute.xlu0 %968
        %970 = vrot.lane.b32.xlu0 %v952, 120
        %v971 = vpop.permute.xlu0 %970
        %972 = vrot.lane.b32.xlu0 %v953, 120
        %v973 = vpop.permute.xlu0 %972
        %974 = vrot.lane.b32.xlu0 %v954, 120
        %v975 = vpop.permute.xlu0 %974
        %976 = vrot.lane.b32.xlu0 %v955, 120
        %v977 = vpop.permute.xlu0 %976
        %978 = vrot.lane.b32.xlu0 %v956, 120
        %v979 = vpop.permute.xlu0 %978
        %980 = vrot.lane.b32.xlu0 %v957, 120
        %v981 = vpop.permute.xlu0 %980
        %vm982 = vcmask 64512
        %v984 = vsel %vm982, %v950, 0
        %v987 = vsel %vm982, %v951, 0
        %v990 = vsel %vm982, %v952, 0
        %v993 = vsel %vm982, %v953, 0
        %v996 = vsel %vm982, %v954, 0
        %v999 = vsel %vm982, %v955, 0
        %v1002 = vsel %vm982, %v956, 0
        %v1005 = vsel %vm982, %v957, 0
        %v1008 = vsel %vm982, %v967, 0
        %v1011 = vsel %vm982, %v969, 0
        %v1014 = vsel %vm982, %v971, 0
        %v1017 = vsel %vm982, %v973, 0
        %v1020 = vsel %vm982, %v975, 0
        %v1023 = vsel %vm982, %v977, 0
        %v1026 = vsel %vm982, %v979, 0
        %v1029 = vsel %vm982, %v981, 0
        %1031 = vmatprep.subr.bf16.mxu0 0
        %1032 = vmatpush1.bf16.xpose.msra.mxu0 %v1008
        %1033 = vmatprep.subr.bf16.mxu0 0
        %1034 = vmatpush1.bf16.xpose.msra.mxu0 %v1011
        %1035 = vmatprep.subr.bf16.mxu0 0
        %1036 = vmatpush1.bf16.xpose.msra.mxu0 %v1014
        %1037 = vmatprep.subr.bf16.mxu0 0
        %1038 = vmatpush1.bf16.xpose.msra.mxu0 %v1017
        %1039 = vmatprep.subr.bf16.mxu0 0
        %1040 = vmatpush1.bf16.xpose.msra.mxu0 %v1020
        %1041 = vmatprep.subr.bf16.mxu0 0
        %1042 = vmatpush1.bf16.xpose.msra.mxu0 %v1023
        %1043 = vmatprep.subr.bf16.mxu0 0
        %1044 = vmatpush1.bf16.xpose.msra.mxu0 %v1026
        %1045 = vmatprep.subr.bf16.mxu0 0
        %1046 = vmatpush1.bf16.xpose.msra.mxu0 %v1029
        %1047 = vmatprep.subr.bf16.mxu0 0
        %1048 = vmatpush1.bf16.xpose.msra.mxu0 0
        %1049 = vmatprep.subr.bf16.mxu0 0
        %1050 = vmatpush1.bf16.xpose.msra.mxu0 0
        %1051 = vmatprep.subr.bf16.mxu0 0
        %1052 = vmatpush1.bf16.xpose.msra.mxu0 0
        %1053 = vmatprep.subr.bf16.mxu0 0
        %1054 = vmatpush1.bf16.xpose.msra.mxu0 0
        %1055 = vmatprep.subr.bf16.mxu0 0
        %1056 = vmatpush1.bf16.xpose.msra.mxu0 0
        %1057 = vmatprep.subr.bf16.mxu0 0
        %1058 = vmatpush1.bf16.xpose.msra.mxu0 0
        %1059 = vmatprep.subr.bf16.mxu0 0
        %1060 = vmatpush1.bf16.xpose.msra.mxu0 0
        %1061 = vmatprep.subr.bf16.mxu0 0
        %1062 = vmatpush1.bf16.xpose.msra.mxu0 0
        %1063 = vmatprep.mubr.bf16.mxu0 0
        %1064 = vmatmul.mubr.bf16.gmra.mrb[0].mxu0 %v984
        %v1065 = vpop.f32.mrb[0].mxu0
        %v1066 = vadd.f32 %v779, %v1065
        %v1067 = vpop.f32.mrb[0].mxu0
        %v1068 = vpop.f32.mrb[0].mxu0
        %v1069 = vadd.f32 %v779, %v1068
        %v1070 = vpop.f32.mrb[0].mxu0
        %1071 = vmatprep.mubr.bf16.mxu0 0
        %1072 = vmatmul.mubr.bf16.gmra.mrb[0].mxu0 %v987
        %v1073 = vpop.f32.mrb[0].mxu0
        %v1074 = vadd.f32 %v779, %v1073
        %v1075 = vpop.f32.mrb[0].mxu0
        %v1076 = vpop.f32.mrb[0].mxu0
        %v1077 = vadd.f32 %v779, %v1076
        %v1078 = vpop.f32.mrb[0].mxu0
        %1079 = vmatprep.mubr.bf16.mxu0 0
        %1080 = vmatmul.mubr.bf16.gmra.mrb[0].mxu0 %v990
        %v1081 = vpop.f32.mrb[0].mxu0
        %v1082 = vadd.f32 %v779, %v1081
        %v1083 = vpop.f32.mrb[0].mxu0
        %v1084 = vpop.f32.mrb[0].mxu0
        %v1085 = vadd.f32 %v779, %v1084
        %v1086 = vpop.f32.mrb[0].mxu0
        %1087 = vmatprep.mubr.bf16.mxu0 0
        %1088 = vmatmul.mubr.bf16.gmra.mrb[0].mxu0 %v993
        %v1089 = vpop.f32.mrb[0].mxu0
        %v1090 = vadd.f32 %v779, %v1089
        %v1091 = vpop.f32.mrb[0].mxu0
        %v1092 = vpop.f32.mrb[0].mxu0
        %v1093 = vadd.f32 %v779, %v1092
        %v1094 = vpop.f32.mrb[0].mxu0
        %1095 = vmatprep.mubr.bf16.mxu0 0
        %1096 = vmatmul.mubr.bf16.gmra.mrb[0].mxu0 %v996
        %v1097 = vpop.f32.mrb[0].mxu0
        %v1098 = vadd.f32 %v779, %v1097
        %v1099 = vpop.f32.mrb[0].mxu0
        %v1100 = vpop.f32.mrb[0].mxu0
        %v1101 = vadd.f32 %v779, %v1100
        %v1102 = vpop.f32.mrb[0].mxu0
        %1103 = vmatprep.mubr.bf16.mxu0 0
        %1104 = vmatmul.mubr.bf16.gmra.mrb[0].mxu0 %v999
        %v1105 = vpop.f32.mrb[0].mxu0
        %v1106 = vadd.f32 %v779, %v1105
        %v1107 = vpop.f32.mrb[0].mxu0
        %v1108 = vpop.f32.mrb[0].mxu0
        %v1109 = vadd.f32 %v779, %v1108
        %v1110 = vpop.f32.mrb[0].mxu0
        %1111 = vmatprep.mubr.bf16.mxu0 0
        %1112 = vmatmul.mubr.bf16.gmra.mrb[0].mxu0 %v1002
        %v1113 = vpop.f32.mrb[0].mxu0
        %v1114 = vadd.f32 %v779, %v1113
        %v1115 = vpop.f32.mrb[0].mxu0
        %v1116 = vpop.f32.mrb[0].mxu0
        %v1117 = vadd.f32 %v779, %v1116
        %v1118 = vpop.f32.mrb[0].mxu0
        %1119 = vmatprep.mubr.bf16.mxu0 0
        %1120 = vmatmul.mubr.bf16.gmra.mrb[0].mxu0 %v1005
        %v1121 = vpop.f32.mrb[0].mxu0
        %v1122 = vadd.f32 %v779, %v1121
        %v1123 = vpop.f32.mrb[0].mxu0
        %v1124 = vpop.f32.mrb[0].mxu0
        %v1125 = vadd.f32 %v779, %v1124
        %v1126 = vpop.f32.mrb[0].mxu0
        %1127 = vdwg.mxu0
        %1128 = vmax.xlane.f32.xlu0 %v1066
        %v1129 = vpop.xlane.xlu0 %1128
        %1130 = vmax.xlane.f32.xlu0 %v1069
        %v1131 = vpop.xlane.xlu0 %1130
        %1132 = vmax.xlane.f32.xlu0 %v1074
        %v1133 = vpop.xlane.xlu0 %1132
        %1134 = vmax.xlane.f32.xlu0 %v1077
        %v1135 = vpop.xlane.xlu0 %1134
        %1136 = vmax.xlane.f32.xlu0 %v1082
        %v1137 = vpop.xlane.xlu0 %1136
        %1138 = vmax.xlane.f32.xlu0 %v1085
        %v1139 = vpop.xlane.xlu0 %1138
        %1140 = vmax.xlane.f32.xlu0 %v1090
        %v1141 = vpop.xlane.xlu0 %1140
        %1142 = vmax.xlane.f32.xlu0 %v1093
        %v1143 = vpop.xlane.xlu0 %1142
        %1144 = vmax.xlane.f32.xlu0 %v1098
        %v1145 = vpop.xlane.xlu0 %1144
        %1146 = vmax.xlane.f32.xlu0 %v1101
        %v1147 = vpop.xlane.xlu0 %1146
        %1148 = vmax.xlane.f32.xlu0 %v1106
        %v1149 = vpop.xlane.xlu0 %1148
        %1150 = vmax.xlane.f32.xlu0 %v1109
        %v1151 = vpop.xlane.xlu0 %1150
        %1152 = vmax.xlane.f32.xlu0 %v1114
        %v1153 = vpop.xlane.xlu0 %1152
        %1154 = vmax.xlane.f32.xlu0 %v1117
        %v1155 = vpop.xlane.xlu0 %1154
        %1156 = vmax.xlane.f32.xlu0 %v1122
        %v1157 = vpop.xlane.xlu0 %1156
        %1158 = vmax.xlane.f32.xlu0 %v1125
        %v1159 = vpop.xlane.xlu0 %1158
        %v1160 = vsub.f32 %v1066, %v1129
        %v1161 = vsub.f32 %v1069, %v1131
        %v1162 = vsub.f32 %v1074, %v1133
        %v1163 = vsub.f32 %v1077, %v1135
        %v1164 = vsub.f32 %v1082, %v1137
        %v1165 = vsub.f32 %v1085, %v1139
        %v1166 = vsub.f32 %v1090, %v1141
        %v1167 = vsub.f32 %v1093, %v1143
        %v1168 = vsub.f32 %v1098, %v1145
        %v1169 = vsub.f32 %v1101, %v1147
        %v1170 = vsub.f32 %v1106, %v1149
        %v1171 = vsub.f32 %v1109, %v1151
        %v1172 = vsub.f32 %v1114, %v1153
        %v1173 = vsub.f32 %v1117, %v1155
        %v1174 = vsub.f32 %v1122, %v1157
        %v1175 = vsub.f32 %v1125, %v1159
        %v1176 = vmul.f32 %v1160, 1.442695
        %v1177 = vpow.pop %v1176
        %v1178 = vmul.f32 %v1161, 1.442695
        %v1179 = vpow.pop %v1178
        %v1180 = vmul.f32 %v1162, 1.442695
        %v1181 = vpow.pop %v1180
        %v1182 = vmul.f32 %v1163, 1.442695
        %v1183 = vpow.pop %v1182
        %v1184 = vmul.f32 %v1164, 1.442695
        %v1185 = vpow.pop %v1184
        %v1186 = vmul.f32 %v1165, 1.442695
        %v1187 = vpow.pop %v1186
        %v1188 = vmul.f32 %v1166, 1.442695
        %v1189 = vpow.pop %v1188
        %v1190 = vmul.f32 %v1167, 1.442695
        %v1191 = vpow.pop %v1190
        %v1192 = vmul.f32 %v1168, 1.442695
        %v1193 = vpow.pop %v1192
        %v1194 = vmul.f32 %v1169, 1.442695
        %v1195 = vpow.pop %v1194
        %v1196 = vmul.f32 %v1170, 1.442695
        %v1197 = vpow.pop %v1196
        %v1198 = vmul.f32 %v1171, 1.442695
        %v1199 = vpow.pop %v1198
        %v1200 = vmul.f32 %v1172, 1.442695
        %v1201 = vpow.pop %v1200
        %v1202 = vmul.f32 %v1173, 1.442695
        %v1203 = vpow.pop %v1202
        %v1204 = vmul.f32 %v1174, 1.442695
        %v1205 = vpow.pop %v1204
        %v1206 = vmul.f32 %v1175, 1.442695
        %v1207 = vpow.pop %v1206
        %1208 = vadd.xlane.f32.xlu0 %v1177
        %v1209 = vpop.xlane.xlu0 %1208
        %1210 = vadd.xlane.f32.xlu0 %v1179
        %v1211 = vpop.xlane.xlu0 %1210
        %1212 = vadd.xlane.f32.xlu0 %v1181
        %v1213 = vpop.xlane.xlu0 %1212
        %1214 = vadd.xlane.f32.xlu0 %v1183
        %v1215 = vpop.xlane.xlu0 %1214
        %1216 = vadd.xlane.f32.xlu0 %v1185
        %v1217 = vpop.xlane.xlu0 %1216
        %1218 = vadd.xlane.f32.xlu0 %v1187
        %v1219 = vpop.xlane.xlu0 %1218
        %1220 = vadd.xlane.f32.xlu0 %v1189
        %v1221 = vpop.xlane.xlu0 %1220
        %1222 = vadd.xlane.f32.xlu0 %v1191
        %v1223 = vpop.xlane.xlu0 %1222
        %1224 = vadd.xlane.f32.xlu0 %v1193
        %v1225 = vpop.xlane.xlu0 %1224
        %1226 = vadd.xlane.f32.xlu0 %v1195
        %v1227 = vpop.xlane.xlu0 %1226
        %1228 = vadd.xlane.f32.xlu0 %v1197
        %v1229 = vpop.xlane.xlu0 %1228
        %1230 = vadd.xlane.f32.xlu0 %v1199
        %v1231 = vpop.xlane.xlu0 %1230
        %1232 = vadd.xlane.f32.xlu0 %v1201
        %v1233 = vpop.xlane.xlu0 %1232
        %1234 = vadd.xlane.f32.xlu0 %v1203
        %v1235 = vpop.xlane.xlu0 %1234
        %1236 = vadd.xlane.f32.xlu0 %v1205
        %v1237 = vpop.xlane.xlu0 %1236
        %1238 = vadd.xlane.f32.xlu0 %v1207
        %v1239 = vpop.xlane.xlu0 %1238
        %v1240 = vrcp.pop %v1209
        %v1241 = vrcp.pop %v1211
        %v1242 = vrcp.pop %v1213
        %v1243 = vrcp.pop %v1215
        %v1244 = vrcp.pop %v1217
        %v1245 = vrcp.pop %v1219
        %v1246 = vrcp.pop %v1221
        %v1247 = vrcp.pop %v1223
        %v1248 = vrcp.pop %v1225
        %v1249 = vrcp.pop %v1227
        %v1250 = vrcp.pop %v1229
        %v1251 = vrcp.pop %v1231
        %v1252 = vrcp.pop %v1233
        %v1253 = vrcp.pop %v1235
        %v1254 = vrcp.pop %v1237
        %v1255 = vrcp.pop %v1239
        %v1256 = vmul.f32 %v1177, %v1240
        %v1257 = vmul.f32 %v1179, %v1241
        %v1258 = vmul.f32 %v1181, %v1242
        %v1259 = vmul.f32 %v1183, %v1243
        %v1260 = vmul.f32 %v1185, %v1244
        %v1261 = vmul.f32 %v1187, %v1245
        %v1262 = vmul.f32 %v1189, %v1246
        %v1263 = vmul.f32 %v1191, %v1247
        %v1264 = vmul.f32 %v1193, %v1248
        %v1265 = vmul.f32 %v1195, %v1249
        %v1266 = vmul.f32 %v1197, %v1250
        %v1267 = vmul.f32 %v1199, %v1251
        %v1268 = vmul.f32 %v1201, %v1252
        %v1269 = vmul.f32 %v1203, %v1253
        %v1270 = vmul.f32 %v1205, %v1254
        %v1271 = vmul.f32 %v1207, %v1255
        %v1272 = vpack.c.bf16 %v1257, %v1256
        %v1273 = vpack.c.bf16 %v1259, %v1258
        %v1274 = vpack.c.bf16 %v1261, %v1260
        %v1275 = vpack.c.bf16 %v1263, %v1262
        %v1276 = vpack.c.bf16 %v1265, %v1264
        %v1277 = vpack.c.bf16 %v1267, %v1266
        %v1278 = vpack.c.bf16 %v1269, %v1268
        %v1279 = vpack.c.bf16 %v1271, %v1270
        %1280 = vrot.lane.b32.xlu0 %v950, 112
        %v1281 = vpop.permute.xlu0 %1280
        %1282 = vrot.lane.b32.xlu0 %v951, 112
        %v1283 = vpop.permute.xlu0 %1282
        %1284 = vrot.lane.b32.xlu0 %v952, 112
        %v1285 = vpop.permute.xlu0 %1284
        %1286 = vrot.lane.b32.xlu0 %v953, 112
        %v1287 = vpop.permute.xlu0 %1286
        %1288 = vrot.lane.b32.xlu0 %v954, 112
        %v1289 = vpop.permute.xlu0 %1288
        %1290 = vrot.lane.b32.xlu0 %v955, 112
        %v1291 = vpop.permute.xlu0 %1290
        %1292 = vrot.lane.b32.xlu0 %v956, 112
        %v1293 = vpop.permute.xlu0 %1292
        %1294 = vrot.lane.b32.xlu0 %v957, 112
        %v1295 = vpop.permute.xlu0 %1294
        %1304 = vmatprep.subr.bf16.mxu0 0
        %1305 = vmatpush1.bf16.msra.mxu0 %v1281
        %1306 = vmatprep.subr.bf16.mxu0 0
        %1307 = vmatpush1.bf16.msra.mxu0 %v1283
        %1308 = vmatprep.subr.bf16.mxu0 0
        %1309 = vmatpush1.bf16.msra.mxu0 %v1285
        %1310 = vmatprep.subr.bf16.mxu0 0
        %1311 = vmatpush1.bf16.msra.mxu0 %v1287
        %1312 = vmatprep.subr.bf16.mxu0 0
        %1313 = vmatpush1.bf16.msra.mxu0 %v1289
        %1314 = vmatprep.subr.bf16.mxu0 0
        %1315 = vmatpush1.bf16.msra.mxu0 %v1291
        %1316 = vmatprep.subr.bf16.mxu0 0
        %1317 = vmatpush1.bf16.msra.mxu0 %v1293
        %1318 = vmatprep.subr.bf16.mxu0 0
        %1319 = vmatpush1.bf16.msra.mxu0 %v1295
        %1320 = vmatprep.subr.bf16.mxu0 0
        %1321 = vmatpush1.bf16.msra.mxu0 0
        %1322 = vmatprep.subr.bf16.mxu0 0
        %1323 = vmatpush1.bf16.msra.mxu0 0
        %1324 = vmatprep.subr.bf16.mxu0 0
        %1325 = vmatpush1.bf16.msra.mxu0 0
        %1326 = vmatprep.subr.bf16.mxu0 0
        %1327 = vmatpush1.bf16.msra.mxu0 0
        %1328 = vmatprep.subr.bf16.mxu0 0
        %1329 = vmatpush1.bf16.msra.mxu0 0
        %1330 = vmatprep.subr.bf16.mxu0 0
        %1331 = vmatpush1.bf16.msra.mxu0 0
        %1332 = vmatprep.subr.bf16.mxu0 0
        %1333 = vmatpush1.bf16.msra.mxu0 0
        %1334 = vmatprep.subr.bf16.mxu0 0
        %1335 = vmatpush1.bf16.msra.mxu0 0
        %1336 = vmatprep.mubr.bf16.mxu0 0
        %1337 = vmatmul.mubr.bf16.gmra.mrb[0].mxu0 %v1272
        %v1338 = vpop.f32.mrb[0].mxu0
        %v1339 = vadd.f32 0.0, %v1338
        %v1340 = vpop.f32.mrb[0].mxu0
        %v1341 = vpop.f32.mrb[0].mxu0
        %v1342 = vadd.f32 0.0, %v1341
        %v1343 = vpop.f32.mrb[0].mxu0
        %1344 = vmatprep.mubr.bf16.mxu0 0
        %1345 = vmatmul.mubr.bf16.gmra.mrb[0].mxu0 %v1273
        %v1346 = vpop.f32.mrb[0].mxu0
        %v1347 = vadd.f32 0.0, %v1346
        %v1348 = vpop.f32.mrb[0].mxu0
        %v1349 = vpop.f32.mrb[0].mxu0
        %v1350 = vadd.f32 0.0, %v1349
        %v1351 = vpop.f32.mrb[0].mxu0
        %1352 = vmatprep.mubr.bf16.mxu0 0
        %1353 = vmatmul.mubr.bf16.gmra.mrb[0].mxu0 %v1274
        %v1354 = vpop.f32.mrb[0].mxu0
        %v1355 = vadd.f32 0.0, %v1354
        %v1356 = vpop.f32.mrb[0].mxu0
        %v1357 = vpop.f32.mrb[0].mxu0
        %v1358 = vadd.f32 0.0, %v1357
        %v1359 = vpop.f32.mrb[0].mxu0
        %1360 = vmatprep.mubr.bf16.mxu0 0
        %1361 = vmatmul.mubr.bf16.gmra.mrb[0].mxu0 %v1275
        %v1362 = vpop.f32.mrb[0].mxu0
        %v1363 = vadd.f32 0.0, %v1362
        %v1364 = vpop.f32.mrb[0].mxu0
        %v1365 = vpop.f32.mrb[0].mxu0
        %v1366 = vadd.f32 0.0, %v1365
        %v1367 = vpop.f32.mrb[0].mxu0
        %1368 = vmatprep.mubr.bf16.mxu0 0
        %1369 = vmatmul.mubr.bf16.gmra.mrb[0].mxu0 %v1276
        %v1370 = vpop.f32.mrb[0].mxu0
        %v1371 = vadd.f32 0.0, %v1370
        %v1372 = vpop.f32.mrb[0].mxu0
        %v1373 = vpop.f32.mrb[0].mxu0
        %v1374 = vadd.f32 0.0, %v1373
        %v1375 = vpop.f32.mrb[0].mxu0
        %1376 = vmatprep.mubr.bf16.mxu0 0
        %1377 = vmatmul.mubr.bf16.gmra.mrb[0].mxu0 %v1277
        %v1378 = vpop.f32.mrb[0].mxu0
        %v1379 = vadd.f32 0.0, %v1378
        %v1380 = vpop.f32.mrb[0].mxu0
        %v1381 = vpop.f32.mrb[0].mxu0
        %v1382 = vadd.f32 0.0, %v1381
        %v1383 = vpop.f32.mrb[0].mxu0
        %1384 = vmatprep.mubr.bf16.mxu0 0
        %1385 = vmatmul.mubr.bf16.gmra.mrb[0].mxu0 %v1278
        %v1386 = vpop.f32.mrb[0].mxu0
        %v1387 = vadd.f32 0.0, %v1386
        %v1388 = vpop.f32.mrb[0].mxu0
        %v1389 = vpop.f32.mrb[0].mxu0
        %v1390 = vadd.f32 0.0, %v1389
        %v1391 = vpop.f32.mrb[0].mxu0
        %1392 = vmatprep.mubr.bf16.mxu0 0
        %1393 = vmatmul.mubr.bf16.gmra.mrb[0].mxu0 %v1279
        %v1394 = vpop.f32.mrb[0].mxu0
        %v1395 = vadd.f32 0.0, %v1394
        %v1396 = vpop.f32.mrb[0].mxu0
        %v1397 = vpop.f32.mrb[0].mxu0
        %v1398 = vadd.f32 0.0, %v1397
        %v1399 = vpop.f32.mrb[0].mxu0
        %1400 = vdwg.mxu0
        %v1401 = vld [vmem:[#allocation2] sm:$0xff]
        %v1402 = vld [vmem:[#allocation2 + $0x8] sm:$0xff]
        %v1403 = vld [vmem:[#allocation2 + $0x10] sm:$0xff]
        %v1404 = vld [vmem:[#allocation2 + $0x18] sm:$0xff]
        %v1405 = vld [vmem:[#allocation2 + $0x20] sm:$0xff]
        %v1406 = vld [vmem:[#allocation2 + $0x28] sm:$0xff]
        %v1407 = vld [vmem:[#allocation2 + $0x30] sm:$0xff]
        %v1408 = vld [vmem:[#allocation2 + $0x38] sm:$0xff]
        %v1409 = vld [vmem:[#allocation2 + $0x40] sm:$0xff]
        %v1410 = vld [vmem:[#allocation2 + $0x48] sm:$0xff]
        %v1411 = vld [vmem:[#allocation2 + $0x50] sm:$0xff]
        %v1412 = vld [vmem:[#allocation2 + $0x58] sm:$0xff]
        %v1413 = vld [vmem:[#allocation2 + $0x60] sm:$0xff]
        %v1414 = vld [vmem:[#allocation2 + $0x68] sm:$0xff]
        %v1415 = vld [vmem:[#allocation2 + $0x70] sm:$0xff]
        %v1416 = vld [vmem:[#allocation2 + $0x78] sm:$0xff]
        %v1417 = vpack.c.bf16 %v1342, %v1339
        %v1418 = vpack.c.bf16 %v1350, %v1347
        %v1419 = vpack.c.bf16 %v1358, %v1355
        %v1420 = vpack.c.bf16 %v1366, %v1363
        %v1421 = vpack.c.bf16 %v1374, %v1371
        %v1422 = vpack.c.bf16 %v1382, %v1379
        %v1423 = vpack.c.bf16 %v1390, %v1387
        %v1424 = vpack.c.bf16 %v1398, %v1395
        %s1425 = smul.addr %s797, 4
        %s1426 = scalar_lea.vmem %s5, %s1425
        %v1427 = vld [vmem:[%s1426] sm:$0xf]
        %v1429 = vsel %vm982, %v1417, 0
        %v1432 = vsel %vm982, %v1418, 0
        %v1435 = vsel %vm982, %v1419, 0
        %v1438 = vsel %vm982, %v1420, 0
        %v1441 = vsel %vm982, %v1421, 0
        %v1444 = vsel %vm982, %v1422, 0
        %v1447 = vsel %vm982, %v1423, 0
        %v1450 = vsel %vm982, %v1424, 0
        %vm1452 = vcmask 1043456
        %v1454 = vsel %vm1452, %v1427, 0
        %1456 = vmatprep.subr.bf16.mxu0 0
        %1457 = vmatpush1.bf16.msra.mxu0 %v1454
        %1458 = vmatprep.subr.bf16.mxu0 0
        %1459 = vmatpush1.bf16.msra.mxu0 0
        %1460 = vmatprep.subr.bf16.mxu0 0
        %1461 = vmatpush1.bf16.msra.mxu0 0
        %1462 = vmatprep.subr.bf16.mxu0 0
        %1463 = vmatpush1.bf16.msra.mxu0 0
        %1464 = vmatprep.subr.bf16.mxu0 0
        %1465 = vmatpush1.bf16.msra.mxu0 0
        %1466 = vmatprep.subr.bf16.mxu0 0
        %1467 = vmatpush1.bf16.msra.mxu0 0
        %1468 = vmatprep.subr.bf16.mxu0 0
        %1469 = vmatpush1.bf16.msra.mxu0 0
        %1470 = vmatprep.subr.bf16.mxu0 0
        %1471 = vmatpush1.bf16.msra.mxu0 0
        %1472 = vmatprep.subr.bf16.mxu0 0
        %1473 = vmatpush1.bf16.msra.mxu0 0
        %1474 = vmatprep.subr.bf16.mxu0 0
        %1475 = vmatpush1.bf16.msra.mxu0 0
        %1476 = vmatprep.subr.bf16.mxu0 0
        %1477 = vmatpush1.bf16.msra.mxu0 0
        %1478 = vmatprep.subr.bf16.mxu0 0
        %1479 = vmatpush1.bf16.msra.mxu0 0
        %1480 = vmatprep.subr.bf16.mxu0 0
        %1481 = vmatpush1.bf16.msra.mxu0 0
        %1482 = vmatprep.subr.bf16.mxu0 0
        %1483 = vmatpush1.bf16.msra.mxu0 0
        %1484 = vmatprep.subr.bf16.mxu0 0
        %1485 = vmatpush1.bf16.msra.mxu0 0
        %1486 = vmatprep.subr.bf16.mxu0 0
        %1487 = vmatpush1.bf16.msra.mxu0 0
        %1488 = vmatprep.mubr.bf16.mxu0 0
        %1489 = vmatmul.mubr.bf16.gmra.mrb[0].mxu0 %v1429
        %v1490 = vpop.f32.mrb[0].mxu0
        %v1491 = vadd.f32 0.0, %v1490
        %v1492 = vpop.f32.mrb[0].mxu0
        %v1493 = vpop.f32.mrb[0].mxu0
        %v1494 = vadd.f32 0.0, %v1493
        %v1495 = vpop.f32.mrb[0].mxu0
        %1496 = vmatprep.mubr.bf16.mxu0 0
        %1497 = vmatmul.mubr.bf16.gmra.mrb[0].mxu0 %v1432
        %v1498 = vpop.f32.mrb[0].mxu0
        %v1499 = vadd.f32 0.0, %v1498
        %v1500 = vpop.f32.mrb[0].mxu0
        %v1501 = vpop.f32.mrb[0].mxu0
        %v1502 = vadd.f32 0.0, %v1501
        %v1503 = vpop.f32.mrb[0].mxu0
        %1504 = vmatprep.mubr.bf16.mxu0 0
        %1505 = vmatmul.mubr.bf16.gmra.mrb[0].mxu0 %v1435
        %v1506 = vpop.f32.mrb[0].mxu0
        %v1507 = vadd.f32 0.0, %v1506
        %v1508 = vpop.f32.mrb[0].mxu0
        %v1509 = vpop.f32.mrb[0].mxu0
        %v1510 = vadd.f32 0.0, %v1509
        %v1511 = vpop.f32.mrb[0].mxu0
        %1512 = vmatprep.mubr.bf16.mxu0 0
        %1513 = vmatmul.mubr.bf16.gmra.mrb[0].mxu0 %v1438
        %v1514 = vpop.f32.mrb[0].mxu0
        %v1515 = vadd.f32 0.0, %v1514
        %v1516 = vpop.f32.mrb[0].mxu0
        %v1517 = vpop.f32.mrb[0].mxu0
        %v1518 = vadd.f32 0.0, %v1517
        %v1519 = vpop.f32.mrb[0].mxu0
        %1520 = vmatprep.mubr.bf16.mxu0 0
        %1521 = vmatmul.mubr.bf16.gmra.mrb[0].mxu0 %v1441
        %v1522 = vpop.f32.mrb[0].mxu0
        %v1523 = vadd.f32 0.0, %v1522
        %v1524 = vpop.f32.mrb[0].mxu0
        %v1525 = vpop.f32.mrb[0].mxu0
        %v1526 = vadd.f32 0.0, %v1525
        %v1527 = vpop.f32.mrb[0].mxu0
        %1528 = vmatprep.mubr.bf16.mxu0 0
        %1529 = vmatmul.mubr.bf16.gmra.mrb[0].mxu0 %v1444
        %v1530 = vpop.f32.mrb[0].mxu0
        %v1531 = vadd.f32 0.0, %v1530
        %v1532 = vpop.f32.mrb[0].mxu0
        %v1533 = vpop.f32.mrb[0].mxu0
        %v1534 = vadd.f32 0.0, %v1533
        %v1535 = vpop.f32.mrb[0].mxu0
        %1536 = vmatprep.mubr.bf16.mxu0 0
        %1537 = vmatmul.mubr.bf16.gmra.mrb[0].mxu0 %v1447
        %v1538 = vpop.f32.mrb[0].mxu0
        %v1539 = vadd.f32 0.0, %v1538
        %v1540 = vpop.f32.mrb[0].mxu0
        %v1541 = vpop.f32.mrb[0].mxu0
        %v1542 = vadd.f32 0.0, %v1541
        %v1543 = vpop.f32.mrb[0].mxu0
        %1544 = vmatprep.mubr.bf16.mxu0 0
        %1545 = vmatmul.mubr.bf16.gmra.mrb[0].mxu0 %v1450
        %v1546 = vpop.f32.mrb[0].mxu0
        %v1547 = vadd.f32 0.0, %v1546
        %v1548 = vpop.f32.mrb[0].mxu0
        %v1549 = vpop.f32.mrb[0].mxu0
        %v1550 = vadd.f32 0.0, %v1549
        %v1551 = vpop.f32.mrb[0].mxu0
        %1552 = vdwg.mxu0
        %v1553 = vadd.f32 %v1401, %v1491
        %v1554 = vadd.f32 %v1402, %v1494
        %v1555 = vadd.f32 %v1403, %v1499
        %v1556 = vadd.f32 %v1404, %v1502
        %v1557 = vadd.f32 %v1405, %v1507
        %v1558 = vadd.f32 %v1406, %v1510
        %v1559 = vadd.f32 %v1407, %v1515
        %v1560 = vadd.f32 %v1408, %v1518
        %v1561 = vadd.f32 %v1409, %v1523
        %v1562 = vadd.f32 %v1410, %v1526
        %v1563 = vadd.f32 %v1411, %v1531
        %v1564 = vadd.f32 %v1412, %v1534
        %v1565 = vadd.f32 %v1413, %v1539
        %v1566 = vadd.f32 %v1414, %v1542
        %v1567 = vadd.f32 %v1415, %v1547
        %v1568 = vadd.f32 %v1416, %v1550
        %1569 = vst.msk [vmem:[#allocation2] sm:$0xff] %vm514, %v1553
        %1570 = vst.msk [vmem:[#allocation2 + $0x8] sm:$0xff] %vm514, %v1554
        %1571 = vst.msk [vmem:[#allocation2 + $0x10] sm:$0xff] %vm514, %v1555
        %1572 = vst.msk [vmem:[#allocation2 + $0x18] sm:$0xff] %vm514, %v1556
        %1573 = vst.msk [vmem:[#allocation2 + $0x20] sm:$0xff] %vm514, %v1557
        %1574 = vst.msk [vmem:[#allocation2 + $0x28] sm:$0xff] %vm514, %v1558
        %1575 = vst.msk [vmem:[#allocation2 + $0x30] sm:$0xff] %vm514, %v1559
        %1576 = vst.msk [vmem:[#allocation2 + $0x38] sm:$0xff] %vm514, %v1560
        %1577 = vst.msk [vmem:[#allocation2 + $0x40] sm:$0xff] %vm514, %v1561
        %1578 = vst.msk [vmem:[#allocation2 + $0x48] sm:$0xff] %vm514, %v1562
        %1579 = vst.msk [vmem:[#allocation2 + $0x50] sm:$0xff] %vm514, %v1563
        %1580 = vst.msk [vmem:[#allocation2 + $0x58] sm:$0xff] %vm514, %v1564
        %1581 = vst.msk [vmem:[#allocation2 + $0x60] sm:$0xff] %vm514, %v1565
        %1582 = vst.msk [vmem:[#allocation2 + $0x68] sm:$0xff] %vm514, %v1566
        %1583 = vst.msk [vmem:[#allocation2 + $0x70] sm:$0xff] %vm514, %v1567
        %1584 = vst.msk [vmem:[#allocation2 + $0x78] sm:$0xff] %vm514, %v1568
      $region85: #{tpu_custom_call.1} parent=79 // loop_footer
        %s801 = sadd.s32 1, %s797
      $region86: #{tpu_custom_call.1} parent=79 // loop_footer_branch
        %796 = sbr.rel target = $region82
      $region87: #{tpu_custom_call.1} parent=79 // loop_exit
        _
      %v1585 = vld [vmem:[#allocation2] sm:$0xff]
      %v1586 = vld [vmem:[#allocation2 + $0x8] sm:$0xff]
      %v1587 = vld [vmem:[#allocation2 + $0x10] sm:$0xff]
      %v1588 = vld [vmem:[#allocation2 + $0x18] sm:$0xff]
      %v1589 = vld [vmem:[#allocation2 + $0x20] sm:$0xff]
      %v1590 = vld [vmem:[#allocation2 + $0x28] sm:$0xff]
      %v1591 = vld [vmem:[#allocation2 + $0x30] sm:$0xff]
      %v1592 = vld [vmem:[#allocation2 + $0x38] sm:$0xff]
      %v1593 = vld [vmem:[#allocation2 + $0x40] sm:$0xff]
      %v1594 = vld [vmem:[#allocation2 + $0x48] sm:$0xff]
      %v1595 = vld [vmem:[#allocation2 + $0x50] sm:$0xff]
      %v1596 = vld [vmem:[#allocation2 + $0x58] sm:$0xff]
      %v1597 = vld [vmem:[#allocation2 + $0x60] sm:$0xff]
      %v1598 = vld [vmem:[#allocation2 + $0x68] sm:$0xff]
      %v1599 = vld [vmem:[#allocation2 + $0x70] sm:$0xff]
      %v1600 = vld [vmem:[#allocation2 + $0x78] sm:$0xff]
      %v1601 = vadd.f32 %v496, %v1585
      %v1602 = vadd.f32 %v497, %v1586
      %v1603 = vadd.f32 %v498, %v1587
      %v1604 = vadd.f32 %v499, %v1588
      %v1605 = vadd.f32 %v500, %v1589
      %v1606 = vadd.f32 %v501, %v1590
      %v1607 = vadd.f32 %v502, %v1591
      %v1608 = vadd.f32 %v503, %v1592
      %v1609 = vadd.f32 %v504, %v1593
      %v1610 = vadd.f32 %v505, %v1594
      %v1611 = vadd.f32 %v506, %v1595
      %v1612 = vadd.f32 %v507, %v1596
      %v1613 = vadd.f32 %v508, %v1597
      %v1614 = vadd.f32 %v509, %v1598
      %v1615 = vadd.f32 %v510, %v1599
      %v1616 = vadd.f32 %v511, %v1600
      %v1617 = vld [vmem:[%s6] sm:$0x1]
      %v1619 = vlaneseq
      %v1620 = vshrl.u32 %v1619, 7
      %v1621 = vsub.s32 0, %v1620
      %v1622 = vrot.slane %v1617, %v1621
      %v1624 = vadd.f32 %v1601, %v1622
      %v1625 = vadd.f32 %v1602, %v1622
      %v1626 = vadd.f32 %v1603, %v1622
      %v1627 = vadd.f32 %v1604, %v1622
      %v1628 = vadd.f32 %v1605, %v1622
      %v1629 = vadd.f32 %v1606, %v1622
      %v1630 = vadd.f32 %v1607, %v1622
      %v1631 = vadd.f32 %v1608, %v1622
      %v1632 = vadd.f32 %v1609, %v1622
      %v1633 = vadd.f32 %v1610, %v1622
      %v1634 = vadd.f32 %v1611, %v1622
      %v1635 = vadd.f32 %v1612, %v1622
      %v1636 = vadd.f32 %v1613, %v1622
      %v1637 = vadd.f32 %v1614, %v1622
      %v1638 = vadd.f32 %v1615, %v1622
      %v1639 = vadd.f32 %v1616, %v1622
      %v1640 = vld [vmem:[%s7] sm:$0x1]
      %v1641 = vld [vmem:[%s8] sm:$0x1]
      %v1642 = vsel %vm514, %v1624, 0.0
      %1643 = vadd.xlane.f32.xlu0 %v1642
      %v1644 = vpop.xlane.xlu0 %1643
      %v1645 = vsel %vm514, %v1625, 0.0
      %1646 = vadd.xlane.f32.xlu0 %v1645
      %v1647 = vpop.xlane.xlu0 %1646
      %v1648 = vsel %vm514, %v1626, 0.0
      %1649 = vadd.xlane.f32.xlu0 %v1648
      %v1650 = vpop.xlane.xlu0 %1649
      %v1651 = vsel %vm514, %v1627, 0.0
      %1652 = vadd.xlane.f32.xlu0 %v1651
      %v1653 = vpop.xlane.xlu0 %1652
      %v1654 = vsel %vm514, %v1628, 0.0
      %1655 = vadd.xlane.f32.xlu0 %v1654
      %v1656 = vpop.xlane.xlu0 %1655
      %v1657 = vsel %vm514, %v1629, 0.0
      %1658 = vadd.xlane.f32.xlu0 %v1657
      %v1659 = vpop.xlane.xlu0 %1658
      %v1660 = vsel %vm514, %v1630, 0.0
      %1661 = vadd.xlane.f32.xlu0 %v1660
      %v1662 = vpop.xlane.xlu0 %1661
      %v1663 = vsel %vm514, %v1631, 0.0
      %1664 = vadd.xlane.f32.xlu0 %v1663
      %v1665 = vpop.xlane.xlu0 %1664
      %v1666 = vsel %vm514, %v1632, 0.0
      %1667 = vadd.xlane.f32.xlu0 %v1666
      %v1668 = vpop.xlane.xlu0 %1667
      %v1669 = vsel %vm514, %v1633, 0.0
      %1670 = vadd.xlane.f32.xlu0 %v1669
      %v1671 = vpop.xlane.xlu0 %1670
      %v1672 = vsel %vm514, %v1634, 0.0
      %1673 = vadd.xlane.f32.xlu0 %v1672
      %v1674 = vpop.xlane.xlu0 %1673
      %v1675 = vsel %vm514, %v1635, 0.0
      %1676 = vadd.xlane.f32.xlu0 %v1675
      %v1677 = vpop.xlane.xlu0 %1676
      %v1678 = vsel %vm514, %v1636, 0.0
      %1679 = vadd.xlane.f32.xlu0 %v1678
      %v1680 = vpop.xlane.xlu0 %1679
      %v1681 = vsel %vm514, %v1637, 0.0
      %1682 = vadd.xlane.f32.xlu0 %v1681
      %v1683 = vpop.xlane.xlu0 %1682
      %v1684 = vsel %vm514, %v1638, 0.0
      %1685 = vadd.xlane.f32.xlu0 %v1684
      %v1686 = vpop.xlane.xlu0 %1685
      %v1687 = vsel %vm514, %v1639, 0.0
      %1688 = vadd.xlane.f32.xlu0 %v1687
      %v1689 = vpop.xlane.xlu0 %1688
      %v1690 = vmul.f32 %v1644, %v563
      %v1691 = vmul.f32 %v1647, %v563
      %v1692 = vmul.f32 %v1650, %v563
      %v1693 = vmul.f32 %v1653, %v563
      %v1694 = vmul.f32 %v1656, %v563
      %v1695 = vmul.f32 %v1659, %v563
      %v1696 = vmul.f32 %v1662, %v563
      %v1697 = vmul.f32 %v1665, %v563
      %v1698 = vmul.f32 %v1668, %v563
      %v1699 = vmul.f32 %v1671, %v563
      %v1700 = vmul.f32 %v1674, %v563
      %v1701 = vmul.f32 %v1677, %v563
      %v1702 = vmul.f32 %v1680, %v563
      %v1703 = vmul.f32 %v1683, %v563
      %v1704 = vmul.f32 %v1686, %v563
      %v1705 = vmul.f32 %v1689, %v563
      %v1706 = vsub.f32 %v1624, %v1690
      %v1707 = vsub.f32 %v1625, %v1691
      %v1708 = vsub.f32 %v1626, %v1692
      %v1709 = vsub.f32 %v1627, %v1693
      %v1710 = vsub.f32 %v1628, %v1694
      %v1711 = vsub.f32 %v1629, %v1695
      %v1712 = vsub.f32 %v1630, %v1696
      %v1713 = vsub.f32 %v1631, %v1697
      %v1714 = vsub.f32 %v1632, %v1698
      %v1715 = vsub.f32 %v1633, %v1699
      %v1716 = vsub.f32 %v1634, %v1700
      %v1717 = vsub.f32 %v1635, %v1701
      %v1718 = vsub.f32 %v1636, %v1702
      %v1719 = vsub.f32 %v1637, %v1703
      %v1720 = vsub.f32 %v1638, %v1704
      %v1721 = vsub.f32 %v1639, %v1705
      %v1722 = vmul.f32 %v1706, %v1706
      %v1723 = vmul.f32 %v1707, %v1707
      %v1724 = vmul.f32 %v1708, %v1708
      %v1725 = vmul.f32 %v1709, %v1709
      %v1726 = vmul.f32 %v1710, %v1710
      %v1727 = vmul.f32 %v1711, %v1711
      %v1728 = vmul.f32 %v1712, %v1712
      %v1729 = vmul.f32 %v1713, %v1713
      %v1730 = vmul.f32 %v1714, %v1714
      %v1731 = vmul.f32 %v1715, %v1715
      %v1732 = vmul.f32 %v1716, %v1716
      %v1733 = vmul.f32 %v1717, %v1717
      %v1734 = vmul.f32 %v1718, %v1718
      %v1735 = vmul.f32 %v1719, %v1719
      %v1736 = vmul.f32 %v1720, %v1720
      %v1737 = vmul.f32 %v1721, %v1721
      %v1738 = vsel %vm514, %v1722, 0.0
      %1739 = vadd.xlane.f32.xlu0 %v1738
      %v1740 = vpop.xlane.xlu0 %1739
      %v1741 = vsel %vm514, %v1723, 0.0
      %1742 = vadd.xlane.f32.xlu0 %v1741
      %v1743 = vpop.xlane.xlu0 %1742
      %v1744 = vsel %vm514, %v1724, 0.0
      %1745 = vadd.xlane.f32.xlu0 %v1744
      %v1746 = vpop.xlane.xlu0 %1745
      %v1747 = vsel %vm514, %v1725, 0.0
      %1748 = vadd.xlane.f32.xlu0 %v1747
      %v1749 = vpop.xlane.xlu0 %1748
      %v1750 = vsel %vm514, %v1726, 0.0
      %1751 = vadd.xlane.f32.xlu0 %v1750
      %v1752 = vpop.xlane.xlu0 %1751
      %v1753 = vsel %vm514, %v1727, 0.0
      %1754 = vadd.xlane.f32.xlu0 %v1753
      %v1755 = vpop.xlane.xlu0 %1754
      %v1756 = vsel %vm514, %v1728, 0.0
      %1757 = vadd.xlane.f32.xlu0 %v1756
      %v1758 = vpop.xlane.xlu0 %1757
      %v1759 = vsel %vm514, %v1729, 0.0
      %1760 = vadd.xlane.f32.xlu0 %v1759
      %v1761 = vpop.xlane.xlu0 %1760
      %v1762 = vsel %vm514, %v1730, 0.0
      %1763 = vadd.xlane.f32.xlu0 %v1762
      %v1764 = vpop.xlane.xlu0 %1763
      %v1765 = vsel %vm514, %v1731, 0.0
      %1766 = vadd.xlane.f32.xlu0 %v1765
      %v1767 = vpop.xlane.xlu0 %1766
      %v1768 = vsel %vm514, %v1732, 0.0
      %1769 = vadd.xlane.f32.xlu0 %v1768
      %v1770 = vpop.xlane.xlu0 %1769
      %v1771 = vsel %vm514, %v1733, 0.0
      %1772 = vadd.xlane.f32.xlu0 %v1771
      %v1773 = vpop.xlane.xlu0 %1772
      %v1774 = vsel %vm514, %v1734, 0.0
      %1775 = vadd.xlane.f32.xlu0 %v1774
      %v1776 = vpop.xlane.xlu0 %1775
      %v1777 = vsel %vm514, %v1735, 0.0
      %1778 = vadd.xlane.f32.xlu0 %v1777
      %v1779 = vpop.xlane.xlu0 %1778
      %v1780 = vsel %vm514, %v1736, 0.0
      %1781 = vadd.xlane.f32.xlu0 %v1780
      %v1782 = vpop.xlane.xlu0 %1781
      %v1783 = vsel %vm514, %v1737, 0.0
      %1784 = vadd.xlane.f32.xlu0 %v1783
      %v1785 = vpop.xlane.xlu0 %1784
      %v1786 = vmul.f32 %v1740, %v563
      %v1787 = vmul.f32 %v1743, %v563
      %v1788 = vmul.f32 %v1746, %v563
      %v1789 = vmul.f32 %v1749, %v563
      %v1790 = vmul.f32 %v1752, %v563
      %v1791 = vmul.f32 %v1755, %v563
      %v1792 = vmul.f32 %v1758, %v563
      %v1793 = vmul.f32 %v1761, %v563
      %v1794 = vmul.f32 %v1764, %v563
      %v1795 = vmul.f32 %v1767, %v563
      %v1796 = vmul.f32 %v1770, %v563
      %v1797 = vmul.f32 %v1773, %v563
      %v1798 = vmul.f32 %v1776, %v563
      %v1799 = vmul.f32 %v1779, %v563
      %v1800 = vmul.f32 %v1782, %v563
      %v1801 = vmul.f32 %v1785, %v563
      %v1802 = vadd.f32 %v1786, 1e-06
      %v1803 = vadd.f32 %v1787, 1e-06
      %v1804 = vadd.f32 %v1788, 1e-06
      %v1805 = vadd.f32 %v1789, 1e-06
      %v1806 = vadd.f32 %v1790, 1e-06
      %v1807 = vadd.f32 %v1791, 1e-06
      %v1808 = vadd.f32 %v1792, 1e-06
      %v1809 = vadd.f32 %v1793, 1e-06
      %v1810 = vadd.f32 %v1794, 1e-06
      %v1811 = vadd.f32 %v1795, 1e-06
      %v1812 = vadd.f32 %v1796, 1e-06
      %v1813 = vadd.f32 %v1797, 1e-06
      %v1814 = vadd.f32 %v1798, 1e-06
      %v1815 = vadd.f32 %v1799, 1e-06
      %v1816 = vadd.f32 %v1800, 1e-06
      %v1817 = vadd.f32 %v1801, 1e-06
      %v1818 = vrsqrt.pop %v1802
      %v1819 = vrsqrt.pop %v1803
      %v1820 = vrsqrt.pop %v1804
      %v1821 = vrsqrt.pop %v1805
      %v1822 = vrsqrt.pop %v1806
      %v1823 = vrsqrt.pop %v1807
      %v1824 = vrsqrt.pop %v1808
      %v1825 = vrsqrt.pop %v1809
      %v1826 = vrsqrt.pop %v1810
      %v1827 = vrsqrt.pop %v1811
      %v1828 = vrsqrt.pop %v1812
      %v1829 = vrsqrt.pop %v1813
      %v1830 = vrsqrt.pop %v1814
      %v1831 = vrsqrt.pop %v1815
      %v1832 = vrsqrt.pop %v1816
      %v1833 = vrsqrt.pop %v1817
      %v1834 = vmul.f32 %v1706, %v1818
      %v1835 = vmul.f32 %v1707, %v1819
      %v1836 = vmul.f32 %v1708, %v1820
      %v1837 = vmul.f32 %v1709, %v1821
      %v1838 = vmul.f32 %v1710, %v1822
      %v1839 = vmul.f32 %v1711, %v1823
      %v1840 = vmul.f32 %v1712, %v1824
      %v1841 = vmul.f32 %v1713, %v1825
      %v1842 = vmul.f32 %v1714, %v1826
      %v1843 = vmul.f32 %v1715, %v1827
      %v1844 = vmul.f32 %v1716, %v1828
      %v1845 = vmul.f32 %v1717, %v1829
      %v1846 = vmul.f32 %v1718, %v1830
      %v1847 = vmul.f32 %v1719, %v1831
      %v1848 = vmul.f32 %v1720, %v1832
      %v1849 = vmul.f32 %v1721, %v1833
      %v1851 = vlaneseq
      %v1852 = vshrl.u32 %v1851, 7
      %v1853 = vsub.s32 0, %v1852
      %v1854 = vrot.slane %v1640, %v1853
      %v1856 = vmul.f32 %v1834, %v1854
      %v1857 = vmul.f32 %v1835, %v1854
      %v1858 = vmul.f32 %v1836, %v1854
      %v1859 = vmul.f32 %v1837, %v1854
      %v1860 = vmul.f32 %v1838, %v1854
      %v1861 = vmul.f32 %v1839, %v1854
      %v1862 = vmul.f32 %v1840, %v1854
      %v1863 = vmul.f32 %v1841, %v1854
      %v1864 = vmul.f32 %v1842, %v1854
      %v1865 = vmul.f32 %v1843, %v1854
      %v1866 = vmul.f32 %v1844, %v1854
      %v1867 = vmul.f32 %v1845, %v1854
      %v1868 = vmul.f32 %v1846, %v1854
      %v1869 = vmul.f32 %v1847, %v1854
      %v1870 = vmul.f32 %v1848, %v1854
      %v1871 = vmul.f32 %v1849, %v1854
      %v1873 = vlaneseq
      %v1874 = vshrl.u32 %v1873, 7
      %v1875 = vsub.s32 0, %v1874
      %v1876 = vrot.slane %v1641, %v1875
      %v1878 = vadd.f32 %v1856, %v1876
      %v1879 = vadd.f32 %v1857, %v1876
      %v1880 = vadd.f32 %v1858, %v1876
      %v1881 = vadd.f32 %v1859, %v1876
      %v1882 = vadd.f32 %v1860, %v1876
      %v1883 = vadd.f32 %v1861, %v1876
      %v1884 = vadd.f32 %v1862, %v1876
      %v1885 = vadd.f32 %v1863, %v1876
      %v1886 = vadd.f32 %v1864, %v1876
      %v1887 = vadd.f32 %v1865, %v1876
      %v1888 = vadd.f32 %v1866, %v1876
      %v1889 = vadd.f32 %v1867, %v1876
      %v1890 = vadd.f32 %v1868, %v1876
      %v1891 = vadd.f32 %v1869, %v1876
      %v1892 = vadd.f32 %v1870, %v1876
      %v1893 = vadd.f32 %v1871, %v1876
      %v1894 = vpack.c.bf16 %v1879, %v1878
      %v1895 = vpack.c.bf16 %v1881, %v1880
      %v1896 = vpack.c.bf16 %v1883, %v1882
      %v1897 = vpack.c.bf16 %v1885, %v1884
      %v1898 = vpack.c.bf16 %v1887, %v1886
      %v1899 = vpack.c.bf16 %v1889, %v1888
      %v1900 = vpack.c.bf16 %v1891, %v1890
      %v1901 = vpack.c.bf16 %v1893, %v1892
      %v1902 = vld [vmem:[%s9] sm:$0xf]
      %v1903 = vld [vmem:[%s9 + $0x4] sm:$0xf]
      %v1904 = vld [vmem:[%s9 + $0x8] sm:$0xf]
      %v1905 = vld [vmem:[%s9 + $0xc] sm:$0xf]
      %v1906 = vld [vmem:[%s10] sm:$0x1]
      %v1908 = vlaneseq
      %v1909 = vshrl.u32 %v1908, 7
      %v1910 = vsub.s32 0, %v1909
      %v1911 = vrot.slane %v1906, %v1910
      %v1917 = vunpack.c.l.b16 %v1902
      %v1918 = vunpack.c.l.b16 %v1903
      %v1919 = vunpack.c.l.b16 %v1904
      %v1920 = vunpack.c.l.b16 %v1905
      %v1921 = vpack.c.b16 %v1918, %v1917
      %v1922 = vpack.c.b16 %v1920, %v1919
      %v1926 = vsel %vm514, %v1894, 0
      %v1929 = vsel %vm514, %v1895, 0
      %v1932 = vsel %vm514, %v1896, 0
      %v1935 = vsel %vm514, %v1897, 0
      %v1938 = vsel %vm514, %v1898, 0
      %v1941 = vsel %vm514, %v1899, 0
      %v1944 = vsel %vm514, %v1900, 0
      %v1947 = vsel %vm514, %v1901, 0
      %1949 = vmatprep.subr.bf16.mxu0 0
      %1950 = vmatpush1.bf16.msra.mxu0 %v1921
      %1951 = vmatprep.subr.bf16.mxu0 0
      %1952 = vmatpush1.bf16.msra.mxu0 %v1922
      %1953 = vmatprep.subr.bf16.mxu0 0
      %1954 = vmatpush1.bf16.msra.mxu0 0
      %1955 = vmatprep.subr.bf16.mxu0 0
      %1956 = vmatpush1.bf16.msra.mxu0 0
      %1957 = vmatprep.subr.bf16.mxu0 0
      %1958 = vmatpush1.bf16.msra.mxu0 0
      %1959 = vmatprep.subr.bf16.mxu0 0
      %1960 = vmatpush1.bf16.msra.mxu0 0
      %1961 = vmatprep.subr.bf16.mxu0 0
      %1962 = vmatpush1.bf16.msra.mxu0 0
      %1963 = vmatprep.subr.bf16.mxu0 0
      %1964 = vmatpush1.bf16.msra.mxu0 0
      %1965 = vmatprep.subr.bf16.mxu0 0
      %1966 = vmatpush1.bf16.msra.mxu0 0
      %1967 = vmatprep.subr.bf16.mxu0 0
      %1968 = vmatpush1.bf16.msra.mxu0 0
      %1969 = vmatprep.subr.bf16.mxu0 0
      %1970 = vmatpush1.bf16.msra.mxu0 0
      %1971 = vmatprep.subr.bf16.mxu0 0
      %1972 = vmatpush1.bf16.msra.mxu0 0
      %1973 = vmatprep.subr.bf16.mxu0 0
      %1974 = vmatpush1.bf16.msra.mxu0 0
      %1975 = vmatprep.subr.bf16.mxu0 0
      %1976 = vmatpush1.bf16.msra.mxu0 0
      %1977 = vmatprep.subr.bf16.mxu0 0
      %1978 = vmatpush1.bf16.msra.mxu0 0
      %1979 = vmatprep.subr.bf16.mxu0 0
      %1980 = vmatpush1.bf16.msra.mxu0 0
      %1981 = vmatprep.mubr.bf16.mxu0 0
      %1982 = vmatmul.mubr.bf16.gmra.mrb[0].mxu0 %v1926
      %v1983 = vpop.f32.mrb[0].mxu0
      %v1984 = vadd.f32 %v1911, %v1983
      %v1985 = vpop.f32.mrb[0].mxu0
      %v1986 = vpop.f32.mrb[0].mxu0
      %v1987 = vadd.f32 %v1911, %v1986
      %v1988 = vpop.f32.mrb[0].mxu0
      %1989 = vmatprep.mubr.bf16.mxu0 0
      %1990 = vmatmul.mubr.bf16.gmra.mrb[0].mxu0 %v1929
      %v1991 = vpop.f32.mrb[0].mxu0
      %v1992 = vadd.f32 %v1911, %v1991
      %v1993 = vpop.f32.mrb[0].mxu0
      %v1994 = vpop.f32.mrb[0].mxu0
      %v1995 = vadd.f32 %v1911, %v1994
      %v1996 = vpop.f32.mrb[0].mxu0
      %1997 = vmatprep.mubr.bf16.mxu0 0
      %1998 = vmatmul.mubr.bf16.gmra.mrb[0].mxu0 %v1932
      %v1999 = vpop.f32.mrb[0].mxu0
      %v2000 = vadd.f32 %v1911, %v1999
      %v2001 = vpop.f32.mrb[0].mxu0
      %v2002 = vpop.f32.mrb[0].mxu0
      %v2003 = vadd.f32 %v1911, %v2002
      %v2004 = vpop.f32.mrb[0].mxu0
      %2005 = vmatprep.mubr.bf16.mxu0 0
      %2006 = vmatmul.mubr.bf16.gmra.mrb[0].mxu0 %v1935
      %v2007 = vpop.f32.mrb[0].mxu0
      %v2008 = vadd.f32 %v1911, %v2007
      %v2009 = vpop.f32.mrb[0].mxu0
      %v2010 = vpop.f32.mrb[0].mxu0
      %v2011 = vadd.f32 %v1911, %v2010
      %v2012 = vpop.f32.mrb[0].mxu0
      %2013 = vmatprep.mubr.bf16.mxu0 0
      %2014 = vmatmul.mubr.bf16.gmra.mrb[0].mxu0 %v1938
      %v2015 = vpop.f32.mrb[0].mxu0
      %v2016 = vadd.f32 %v1911, %v2015
      %v2017 = vpop.f32.mrb[0].mxu0
      %v2018 = vpop.f32.mrb[0].mxu0
      %v2019 = vadd.f32 %v1911, %v2018
      %v2020 = vpop.f32.mrb[0].mxu0
      %2021 = vmatprep.mubr.bf16.mxu0 0
      %2022 = vmatmul.mubr.bf16.gmra.mrb[0].mxu0 %v1941
      %v2023 = vpop.f32.mrb[0].mxu0
      %v2024 = vadd.f32 %v1911, %v2023
      %v2025 = vpop.f32.mrb[0].mxu0
      %v2026 = vpop.f32.mrb[0].mxu0
      %v2027 = vadd.f32 %v1911, %v2026
      %v2028 = vpop.f32.mrb[0].mxu0
      %2029 = vmatprep.mubr.bf16.mxu0 0
      %2030 = vmatmul.mubr.bf16.gmra.mrb[0].mxu0 %v1944
      %v2031 = vpop.f32.mrb[0].mxu0
      %v2032 = vadd.f32 %v1911, %v2031
      %v2033 = vpop.f32.mrb[0].mxu0
      %v2034 = vpop.f32.mrb[0].mxu0
      %v2035 = vadd.f32 %v1911, %v2034
      %v2036 = vpop.f32.mrb[0].mxu0
      %2037 = vmatprep.mubr.bf16.mxu0 0
      %2038 = vmatmul.mubr.bf16.gmra.mrb[0].mxu0 %v1947
      %v2039 = vpop.f32.mrb[0].mxu0
      %v2040 = vadd.f32 %v1911, %v2039
      %v2041 = vpop.f32.mrb[0].mxu0
      %v2042 = vpop.f32.mrb[0].mxu0
      %v2043 = vadd.f32 %v1911, %v2042
      %v2044 = vpop.f32.mrb[0].mxu0
      %2045 = vdwg.mxu0
      %v2046 = vmul.f32 %v1984, %v1984
      %v2047 = vmul.f32 %v1987, %v1987
      %v2048 = vmul.f32 %v1992, %v1992
      %v2049 = vmul.f32 %v1995, %v1995
      %v2050 = vmul.f32 %v2000, %v2000
      %v2051 = vmul.f32 %v2003, %v2003
      %v2052 = vmul.f32 %v2008, %v2008
      %v2053 = vmul.f32 %v2011, %v2011
      %v2054 = vmul.f32 %v2016, %v2016
      %v2055 = vmul.f32 %v2019, %v2019
      %v2056 = vmul.f32 %v2024, %v2024
      %v2057 = vmul.f32 %v2027, %v2027
      %v2058 = vmul.f32 %v2032, %v2032
      %v2059 = vmul.f32 %v2035, %v2035
      %v2060 = vmul.f32 %v2040, %v2040
      %v2061 = vmul.f32 %v2043, %v2043
      %v2062 = vmul.f32 %v1984, %v2046
      %v2063 = vmul.f32 %v1987, %v2047
      %v2064 = vmul.f32 %v1992, %v2048
      %v2065 = vmul.f32 %v1995, %v2049
      %v2066 = vmul.f32 %v2000, %v2050
      %v2067 = vmul.f32 %v2003, %v2051
      %v2068 = vmul.f32 %v2008, %v2052
      %v2069 = vmul.f32 %v2011, %v2053
      %v2070 = vmul.f32 %v2016, %v2054
      %v2071 = vmul.f32 %v2019, %v2055
      %v2072 = vmul.f32 %v2024, %v2056
      %v2073 = vmul.f32 %v2027, %v2057
      %v2074 = vmul.f32 %v2032, %v2058
      %v2075 = vmul.f32 %v2035, %v2059
      %v2076 = vmul.f32 %v2040, %v2060
      %v2077 = vmul.f32 %v2043, %v2061
      %v2078 = vmul.f32 %v2062, 0.044715
      %v2079 = vmul.f32 %v2063, 0.044715
      %v2080 = vmul.f32 %v2064, 0.044715
      %v2081 = vmul.f32 %v2065, 0.044715
      %v2082 = vmul.f32 %v2066, 0.044715
      %v2083 = vmul.f32 %v2067, 0.044715
      %v2084 = vmul.f32 %v2068, 0.044715
      %v2085 = vmul.f32 %v2069, 0.044715
      %v2086 = vmul.f32 %v2070, 0.044715
      %v2087 = vmul.f32 %v2071, 0.044715
      %v2088 = vmul.f32 %v2072, 0.044715
      %v2089 = vmul.f32 %v2073, 0.044715
      %v2090 = vmul.f32 %v2074, 0.044715
      %v2091 = vmul.f32 %v2075, 0.044715
      %v2092 = vmul.f32 %v2076, 0.044715
      %v2093 = vmul.f32 %v2077, 0.044715
      %v2094 = vadd.f32 %v1984, %v2078
      %v2095 = vadd.f32 %v1987, %v2079
      %v2096 = vadd.f32 %v1992, %v2080
      %v2097 = vadd.f32 %v1995, %v2081
      %v2098 = vadd.f32 %v2000, %v2082
      %v2099 = vadd.f32 %v2003, %v2083
      %v2100 = vadd.f32 %v2008, %v2084
      %v2101 = vadd.f32 %v2011, %v2085
      %v2102 = vadd.f32 %v2016, %v2086
      %v2103 = vadd.f32 %v2019, %v2087
      %v2104 = vadd.f32 %v2024, %v2088
      %v2105 = vadd.f32 %v2027, %v2089
      %v2106 = vadd.f32 %v2032, %v2090
      %v2107 = vadd.f32 %v2035, %v2091
      %v2108 = vadd.f32 %v2040, %v2092
      %v2109 = vadd.f32 %v2043, %v2093
      %v2110 = vmul.f32 %v2094, 0.7978846
      %v2111 = vmul.f32 %v2095, 0.7978846
      %v2112 = vmul.f32 %v2096, 0.7978846
      %v2113 = vmul.f32 %v2097, 0.7978846
      %v2114 = vmul.f32 %v2098, 0.7978846
      %v2115 = vmul.f32 %v2099, 0.7978846
      %v2116 = vmul.f32 %v2100, 0.7978846
      %v2117 = vmul.f32 %v2101, 0.7978846
      %v2118 = vmul.f32 %v2102, 0.7978846
      %v2119 = vmul.f32 %v2103, 0.7978846
      %v2120 = vmul.f32 %v2104, 0.7978846
      %v2121 = vmul.f32 %v2105, 0.7978846
      %v2122 = vmul.f32 %v2106, 0.7978846
      %v2123 = vmul.f32 %v2107, 0.7978846
      %v2124 = vmul.f32 %v2108, 0.7978846
      %v2125 = vmul.f32 %v2109, 0.7978846
      %v2126 = vtanh.pop %v2110
      %v2127 = vtanh.pop %v2111
      %v2128 = vtanh.pop %v2112
      %v2129 = vtanh.pop %v2113
      %v2130 = vtanh.pop %v2114
      %v2131 = vtanh.pop %v2115
      %v2132 = vtanh.pop %v2116
      %v2133 = vtanh.pop %v2117
      %v2134 = vtanh.pop %v2118
      %v2135 = vtanh.pop %v2119
      %v2136 = vtanh.pop %v2120
      %v2137 = vtanh.pop %v2121
      %v2138 = vtanh.pop %v2122
      %v2139 = vtanh.pop %v2123
      %v2140 = vtanh.pop %v2124
      %v2141 = vtanh.pop %v2125
      %v2142 = vadd.f32 %v2126, 1.0
      %v2143 = vadd.f32 %v2127, 1.0
      %v2144 = vadd.f32 %v2128, 1.0
      %v2145 = vadd.f32 %v2129, 1.0
      %v2146 = vadd.f32 %v2130, 1.0
      %v2147 = vadd.f32 %v2131, 1.0
      %v2148 = vadd.f32 %v2132, 1.0
      %v2149 = vadd.f32 %v2133, 1.0
      %v2150 = vadd.f32 %v2134, 1.0
      %v2151 = vadd.f32 %v2135, 1.0
      %v2152 = vadd.f32 %v2136, 1.0
      %v2153 = vadd.f32 %v2137, 1.0
      %v2154 = vadd.f32 %v2138, 1.0
      %v2155 = vadd.f32 %v2139, 1.0
      %v2156 = vadd.f32 %v2140, 1.0
      %v2157 = vadd.f32 %v2141, 1.0
      %v2158 = vmul.f32 %v2142, 0.5
      %v2159 = vmul.f32 %v2143, 0.5
      %v2160 = vmul.f32 %v2144, 0.5
      %v2161 = vmul.f32 %v2145, 0.5
      %v2162 = vmul.f32 %v2146, 0.5
      %v2163 = vmul.f32 %v2147, 0.5
      %v2164 = vmul.f32 %v2148, 0.5
      %v2165 = vmul.f32 %v2149, 0.5
      %v2166 = vmul.f32 %v2150, 0.5
      %v2167 = vmul.f32 %v2151, 0.5
      %v2168 = vmul.f32 %v2152, 0.5
      %v2169 = vmul.f32 %v2153, 0.5
      %v2170 = vmul.f32 %v2154, 0.5
      %v2171 = vmul.f32 %v2155, 0.5
      %v2172 = vmul.f32 %v2156, 0.5
      %v2173 = vmul.f32 %v2157, 0.5
      %v2174 = vmul.f32 %v1984, %v2158
      %v2175 = vmul.f32 %v1987, %v2159
      %v2176 = vmul.f32 %v1992, %v2160
      %v2177 = vmul.f32 %v1995, %v2161
      %v2178 = vmul.f32 %v2000, %v2162
      %v2179 = vmul.f32 %v2003, %v2163
      %v2180 = vmul.f32 %v2008, %v2164
      %v2181 = vmul.f32 %v2011, %v2165
      %v2182 = vmul.f32 %v2016, %v2166
      %v2183 = vmul.f32 %v2019, %v2167
      %v2184 = vmul.f32 %v2024, %v2168
      %v2185 = vmul.f32 %v2027, %v2169
      %v2186 = vmul.f32 %v2032, %v2170
      %v2187 = vmul.f32 %v2035, %v2171
      %v2188 = vmul.f32 %v2040, %v2172
      %v2189 = vmul.f32 %v2043, %v2173
      %v2190 = vpack.c.bf16 %v2175, %v2174
      %v2191 = vpack.c.bf16 %v2177, %v2176
      %v2192 = vpack.c.bf16 %v2179, %v2178
      %v2193 = vpack.c.bf16 %v2181, %v2180
      %v2194 = vpack.c.bf16 %v2183, %v2182
      %v2195 = vpack.c.bf16 %v2185, %v2184
      %v2196 = vpack.c.bf16 %v2187, %v2186
      %v2197 = vpack.c.bf16 %v2189, %v2188
      %v2198 = vld [vmem:[%s11] sm:$0xf]
      %v2199 = vld [vmem:[%s11 + $0x4] sm:$0xf]
      %v2200 = vld [vmem:[%s11 + $0x8] sm:$0xf]
      %v2201 = vld [vmem:[%s11 + $0xc] sm:$0xf]
      %v2202 = vld [vmem:[%s11 + $0x10] sm:$0xf]
      %v2203 = vld [vmem:[%s11 + $0x14] sm:$0xf]
      %v2204 = vld [vmem:[%s11 + $0x18] sm:$0xf]
      %v2205 = vld [vmem:[%s11 + $0x1c] sm:$0xf]
      %v2206 = vld [vmem:[%s11 + $0x20] sm:$0xf]
      %v2207 = vld [vmem:[%s11 + $0x24] sm:$0xf]
      %v2208 = vld [vmem:[%s11 + $0x28] sm:$0xf]
      %v2209 = vld [vmem:[%s11 + $0x2c] sm:$0xf]
      %v2210 = vld [vmem:[%s11 + $0x30] sm:$0xf]
      %v2211 = vld [vmem:[%s11 + $0x34] sm:$0xf]
      %v2212 = vld [vmem:[%s11 + $0x38] sm:$0xf]
      %v2213 = vld [vmem:[%s11 + $0x3c] sm:$0xf]
      %v2230 = vunpack.c.l.b16 %v2198
      %v2231 = vunpack.c.l.b16 %v2199
      %v2232 = vunpack.c.l.b16 %v2200
      %v2233 = vunpack.c.l.b16 %v2201
      %v2234 = vunpack.c.l.b16 %v2202
      %v2235 = vunpack.c.l.b16 %v2203
      %v2236 = vunpack.c.l.b16 %v2204
      %v2237 = vunpack.c.l.b16 %v2205
      %v2238 = vunpack.c.l.b16 %v2206
      %v2239 = vunpack.c.l.b16 %v2207
      %v2240 = vunpack.c.l.b16 %v2208
      %v2241 = vunpack.c.l.b16 %v2209
      %v2242 = vunpack.c.l.b16 %v2210
      %v2243 = vunpack.c.l.b16 %v2211
      %v2244 = vunpack.c.l.b16 %v2212
      %v2245 = vunpack.c.l.b16 %v2213
      %v2246 = vpack.c.b16 %v2231, %v2230
      %v2247 = vpack.c.b16 %v2233, %v2232
      %v2248 = vpack.c.b16 %v2235, %v2234
      %v2249 = vpack.c.b16 %v2237, %v2236
      %v2250 = vpack.c.b16 %v2239, %v2238
      %v2251 = vpack.c.b16 %v2241, %v2240
      %v2252 = vpack.c.b16 %v2243, %v2242
      %v2253 = vpack.c.b16 %v2245, %v2244
      %2262 = vmatprep.subr.bf16.mxu0 0
      %2263 = vmatpush1.bf16.msra.mxu0 %v2246
      %2264 = vmatprep.subr.bf16.mxu0 0
      %2265 = vmatpush1.bf16.msra.mxu0 %v2247
      %2266 = vmatprep.subr.bf16.mxu0 0
      %2267 = vmatpush1.bf16.msra.mxu0 %v2248
      %2268 = vmatprep.subr.bf16.mxu0 0
      %2269 = vmatpush1.bf16.msra.mxu0 %v2249
      %2270 = vmatprep.subr.bf16.mxu0 0
      %2271 = vmatpush1.bf16.msra.mxu0 %v2250
      %2272 = vmatprep.subr.bf16.mxu0 0
      %2273 = vmatpush1.bf16.msra.mxu0 %v2251
      %2274 = vmatprep.subr.bf16.mxu0 0
      %2275 = vmatpush1.bf16.msra.mxu0 %v2252
      %2276 = vmatprep.subr.bf16.mxu0 0
      %2277 = vmatpush1.bf16.msra.mxu0 %v2253
      %2278 = vmatprep.subr.bf16.mxu0 0
      %2279 = vmatpush1.bf16.msra.mxu0 0
      %2280 = vmatprep.subr.bf16.mxu0 0
      %2281 = vmatpush1.bf16.msra.mxu0 0
      %2282 = vmatprep.subr.bf16.mxu0 0
      %2283 = vmatpush1.bf16.msra.mxu0 0
      %2284 = vmatprep.subr.bf16.mxu0 0
      %2285 = vmatpush1.bf16.msra.mxu0 0
      %2286 = vmatprep.subr.bf16.mxu0 0
      %2287 = vmatpush1.bf16.msra.mxu0 0
      %2288 = vmatprep.subr.bf16.mxu0 0
      %2289 = vmatpush1.bf16.msra.mxu0 0
      %2290 = vmatprep.subr.bf16.mxu0 0
      %2291 = vmatpush1.bf16.msra.mxu0 0
      %2292 = vmatprep.subr.bf16.mxu0 0
      %2293 = vmatpush1.bf16.msra.mxu0 0
      %2294 = vmatprep.mubr.bf16.mxu0 0
      %2295 = vmatmul.mubr.bf16.gmra.mrb[0].mxu0 %v2190
      %v2296 = vpop.f32.mrb[0].mxu0
      %v2297 = vadd.f32 0.0, %v2296
      %v2298 = vpop.f32.mrb[0].mxu0
      %v2299 = vpop.f32.mrb[0].mxu0
      %v2300 = vadd.f32 0.0, %v2299
      %v2301 = vpop.f32.mrb[0].mxu0
      %2302 = vmatprep.mubr.bf16.mxu0 0
      %2303 = vmatmul.mubr.bf16.gmra.mrb[0].mxu0 %v2191
      %v2304 = vpop.f32.mrb[0].mxu0
      %v2305 = vadd.f32 0.0, %v2304
      %v2306 = vpop.f32.mrb[0].mxu0
      %v2307 = vpop.f32.mrb[0].mxu0
      %v2308 = vadd.f32 0.0, %v2307
      %v2309 = vpop.f32.mrb[0].mxu0
      %2310 = vmatprep.mubr.bf16.mxu0 0
      %2311 = vmatmul.mubr.bf16.gmra.mrb[0].mxu0 %v2192
      %v2312 = vpop.f32.mrb[0].mxu0
      %v2313 = vadd.f32 0.0, %v2312
      %v2314 = vpop.f32.mrb[0].mxu0
      %v2315 = vpop.f32.mrb[0].mxu0
      %v2316 = vadd.f32 0.0, %v2315
      %v2317 = vpop.f32.mrb[0].mxu0
      %2318 = vmatprep.mubr.bf16.mxu0 0
      %2319 = vmatmul.mubr.bf16.gmra.mrb[0].mxu0 %v2193
      %v2320 = vpop.f32.mrb[0].mxu0
      %v2321 = vadd.f32 0.0, %v2320
      %v2322 = vpop.f32.mrb[0].mxu0
      %v2323 = vpop.f32.mrb[0].mxu0
      %v2324 = vadd.f32 0.0, %v2323
      %v2325 = vpop.f32.mrb[0].mxu0
      %2326 = vmatprep.mubr.bf16.mxu0 0
      %2327 = vmatmul.mubr.bf16.gmra.mrb[0].mxu0 %v2194
      %v2328 = vpop.f32.mrb[0].mxu0
      %v2329 = vadd.f32 0.0, %v2328
      %v2330 = vpop.f32.mrb[0].mxu0
      %v2331 = vpop.f32.mrb[0].mxu0
      %v2332 = vadd.f32 0.0, %v2331
      %v2333 = vpop.f32.mrb[0].mxu0
      %2334 = vmatprep.mubr.bf16.mxu0 0
      %2335 = vmatmul.mubr.bf16.gmra.mrb[0].mxu0 %v2195
      %v2336 = vpop.f32.mrb[0].mxu0
      %v2337 = vadd.f32 0.0, %v2336
      %v2338 = vpop.f32.mrb[0].mxu0
      %v2339 = vpop.f32.mrb[0].mxu0
      %v2340 = vadd.f32 0.0, %v2339
      %v2341 = vpop.f32.mrb[0].mxu0
      %2342 = vmatprep.mubr.bf16.mxu0 0
      %2343 = vmatmul.mubr.bf16.gmra.mrb[0].mxu0 %v2196
      %v2344 = vpop.f32.mrb[0].mxu0
      %v2345 = vadd.f32 0.0, %v2344
      %v2346 = vpop.f32.mrb[0].mxu0
      %v2347 = vpop.f32.mrb[0].mxu0
      %v2348 = vadd.f32 0.0, %v2347
      %v2349 = vpop.f32.mrb[0].mxu0
      %2350 = vmatprep.mubr.bf16.mxu0 0
      %2351 = vmatmul.mubr.bf16.gmra.mrb[0].mxu0 %v2197
      %v2352 = vpop.f32.mrb[0].mxu0
      %v2353 = vadd.f32 0.0, %v2352
      %v2354 = vpop.f32.mrb[0].mxu0
      %v2355 = vpop.f32.mrb[0].mxu0
      %v2356 = vadd.f32 0.0, %v2355
      %v2357 = vpop.f32.mrb[0].mxu0
      %2358 = vdwg.mxu0
      %v2359 = vadd.f32 %v1624, %v2297
      %v2360 = vadd.f32 %v1625, %v2300
      %v2361 = vadd.f32 %v1626, %v2305
      %v2362 = vadd.f32 %v1627, %v2308
      %v2363 = vadd.f32 %v1628, %v2313
      %v2364 = vadd.f32 %v1629, %v2316
      %v2365 = vadd.f32 %v1630, %v2321
      %v2366 = vadd.f32 %v1631, %v2324
      %v2367 = vadd.f32 %v1632, %v2329
      %v2368 = vadd.f32 %v1633, %v2332
      %v2369 = vadd.f32 %v1634, %v2337
      %v2370 = vadd.f32 %v1635, %v2340
      %v2371 = vadd.f32 %v1636, %v2345
      %v2372 = vadd.f32 %v1637, %v2348
      %v2373 = vadd.f32 %v1638, %v2353
      %v2374 = vadd.f32 %v1639, %v2356
      %v2375 = vld [vmem:[%s12] sm:$0x1]
      %v2377 = vlaneseq
      %v2378 = vshrl.u32 %v2377, 7
      %v2379 = vsub.s32 0, %v2378
      %v2380 = vrot.slane %v2375, %v2379
      %v2382 = vadd.f32 %v2359, %v2380
      %v2383 = vadd.f32 %v2360, %v2380
      %v2384 = vadd.f32 %v2361, %v2380
      %v2385 = vadd.f32 %v2362, %v2380
      %v2386 = vadd.f32 %v2363, %v2380
      %v2387 = vadd.f32 %v2364, %v2380
      %v2388 = vadd.f32 %v2365, %v2380
      %v2389 = vadd.f32 %v2366, %v2380
      %v2390 = vadd.f32 %v2367, %v2380
      %v2391 = vadd.f32 %v2368, %v2380
      %v2392 = vadd.f32 %v2369, %v2380
      %v2393 = vadd.f32 %v2370, %v2380
      %v2394 = vadd.f32 %v2371, %v2380
      %v2395 = vadd.f32 %v2372, %v2380
      %v2396 = vadd.f32 %v2373, %v2380
      %v2397 = vadd.f32 %v2374, %v2380
      %2398 = vst.msk [vmem:[%s494] sm:$0xff] %vm514, %v2382
      %2399 = vst.msk [vmem:[%s494 + $0x8] sm:$0xff] %vm514, %v2383
      %2400 = vst.msk [vmem:[%s494 + $0x10] sm:$0xff] %vm514, %v2384
      %2401 = vst.msk [vmem:[%s494 + $0x18] sm:$0xff] %vm514, %v2385
      %2402 = vst.msk [vmem:[%s494 + $0x20] sm:$0xff] %vm514, %v2386
      %2403 = vst.msk [vmem:[%s494 + $0x28] sm:$0xff] %vm514, %v2387
      %2404 = vst.msk [vmem:[%s494 + $0x30] sm:$0xff] %vm514, %v2388
      %2405 = vst.msk [vmem:[%s494 + $0x38] sm:$0xff] %vm514, %v2389
      %2406 = vst.msk [vmem:[%s494 + $0x40] sm:$0xff] %vm514, %v2390
      %2407 = vst.msk [vmem:[%s494 + $0x48] sm:$0xff] %vm514, %v2391
      %2408 = vst.msk [vmem:[%s494 + $0x50] sm:$0xff] %vm514, %v2392
      %2409 = vst.msk [vmem:[%s494 + $0x58] sm:$0xff] %vm514, %v2393
      %2410 = vst.msk [vmem:[%s494 + $0x60] sm:$0xff] %vm514, %v2394
      %2411 = vst.msk [vmem:[%s494 + $0x68] sm:$0xff] %vm514, %v2395
      %2412 = vst.msk [vmem:[%s494 + $0x70] sm:$0xff] %vm514, %v2396
      %2413 = vst.msk [vmem:[%s494 + $0x78] sm:$0xff] %vm514, %v2397
      %p2414 = scmp.lt.s32.totalorder %s26, 1
      %s2415 = scalar_select %p2414, %s26, 1
      %s2416 = smul.addr %s2415, 16
      %s2417 = smul.addr %s2416, 8
      %s2418 = scalar_lea.vmem %s15, %s2417
      // Predicated region
      $region88: #{tpu_custom_call.1} parent=79 // pred_check
        %p2419 = pneg %p364
      $region89: #{tpu_custom_call.1} parent=79 // pred_check_branch
        %2421 = sbr.rel (%p2419) target = $region91
      $region90: #{tpu_custom_call.1} parent=79 // pred_region
        _
      $region91: #{tpu_custom_call.1} parent=79 // pred_fallthru
        _
    $region80: #{tpu_custom_call.1} parent=5 // pred_fallthru
      _
    %p2422 = scmp.le.s32.totalorder 2, %s21
    // Predicated region
    $region92: #{tpu_custom_call.1} parent=5 // pred_check
      %p2423 = pneg %p2422
    $region93: #{tpu_custom_call.1} parent=5 // pred_check_branch
      %2425 = sbr.rel (%p2423) target = $region95
    $region94: #{tpu_custom_call.1} parent=5 // pred_region
      %s2426 = ssub.s32 %s21, 2
      // Predicated region
      $region96: #{tpu_custom_call.1} parent=94 // pred_check
        %p2427 = pneg %p370
      $region97: #{tpu_custom_call.1} parent=94 // pred_check_branch
        %2429 = sbr.rel (%p2427) target = $region99
      $region98: #{tpu_custom_call.1} parent=94 // pred_region
        %p2430 = scmp.lt.s32.totalorder %s27, 1
        %s2431 = scalar_select %p2430, %s27, 1
        %s2432 = smul.addr %s2431, 16
        %s2433 = smul.addr %s2432, 8
        %s2434 = scalar_lea.vmem %s15, %s2433
      $region99: #{tpu_custom_call.1} parent=94 // pred_fallthru
        _
    $region95: #{tpu_custom_call.1} parent=5 // pred_fallthru
      _
  $region6: #{tpu_custom_call.1} parent=0 // loop_footer
    %s25 = sadd.s32 1, %s21
  $region7: #{tpu_custom_call.1} parent=0 // loop_footer_branch
    %20 = sbr.rel target = $region3
  $region8: #{tpu_custom_call.1} parent=0 // loop_exit
    _

// kernel: tpu_custom_call.1
$region0: #{tpu_custom_call.1}
  #allocation0 [shape = 'u32[]', space=smem, size = 0x4, offset = 0x4, fixed_abs, tag = 'smem constant byte address 0x4 - core index']
  #allocation1 [shape = 'u32[144,128]{1,0:T(1,128)}', space=vmem, size = 0x12000, scoped, tag = 'internal scratch']
  #allocation2 [shape = 'f32[128,32]{1,0:T(8,128)}', space=vmem, size = 0x10000, scoped, tag = 'scratch operand']
  %s0 = inlined_call_operand.vmem [shape: f32[2,128,32], index: 0, kind: input, shape index: {}]
  %s1 = inlined_call_operand.vmem [shape: f32[1,32], index: 1, kind: input, shape index: {}]
  %s2 = inlined_call_operand.vmem [shape: f32[1,32], index: 2, kind: input, shape index: {}]
  %s3 = inlined_call_operand.vmem [shape: bf16[4,32,24], index: 3, kind: input, shape index: {}]
  %s4 = inlined_call_operand.vmem [shape: f32[4,1,24], index: 4, kind: input, shape index: {}]
  %s5 = inlined_call_operand.vmem [shape: bf16[4,8,32], index: 5, kind: input, shape index: {}]
  %s6 = inlined_call_operand.vmem [shape: f32[1,32], index: 6, kind: input, shape index: {}]
  %s7 = inlined_call_operand.vmem [shape: f32[1,32], index: 7, kind: input, shape index: {}]
  %s8 = inlined_call_operand.vmem [shape: f32[1,32], index: 8, kind: input, shape index: {}]
  %s9 = inlined_call_operand.vmem [shape: bf16[32,128], index: 9, kind: input, shape index: {}]
  %s10 = inlined_call_operand.vmem [shape: f32[1,128], index: 10, kind: input, shape index: {}]
  %s11 = inlined_call_operand.vmem [shape: bf16[128,32], index: 11, kind: input, shape index: {}]
  %s12 = inlined_call_operand.vmem [shape: f32[1,32], index: 12, kind: input, shape index: {}]
  %s13 = inlined_call_operand.vmem [shape: f32[1,32], index: 13, kind: input, shape index: {}]
  %s14 = inlined_call_operand.vmem [shape: f32[1,32], index: 14, kind: input, shape index: {}]
  %s15 = inlined_call_operand.vmem [shape: f32[2,128,32], index: 15, kind: output, shape index: {}]
  %s16 = sld [smem:[#allocation0]]
  $region100: #{tpu_custom_call.1} parent=0
    _
  %s18 = ssub.s32 1, %s16
  %s19 = scalar_select 0, %s18, %s16
  loop: start=0, step=1, limit=4
  $region2: #{tpu_custom_call.1} parent=0 // loop_pre_header
    _
  $region3: #{tpu_custom_call.1} parent=0 // loop_header
    %s21 = sphi 0, %s25
    %p22 = scmp.ge.s32.totalorder %s21, 4
    %s31 = sphi 0, %s33
    %s34 = sphi 0, %s31
    %s35 = sphi 0, %s34
    %s51 = sphi 0, %s35
    %s55 = sphi 0, %s55
    %s57 = sphi 0, %s55
    %s58 = sphi 0, %s57
    %s72 = sphi 0, %s58
    %s76 = sphi 0, %s76
    %s78 = sphi 0, %s76
    %s79 = sphi 0, %s78
    %s93 = sphi 0, %s79
    %s97 = sphi 0, %s97
    %s99 = sphi 0, %s97
    %s100 = sphi 0, %s99
    %s114 = sphi 0, %s100
    %s118 = sphi 0, %s118
    %s120 = sphi 0, %s118
    %s121 = sphi 0, %s120
    %s135 = sphi 0, %s121
    %s139 = sphi 0, %s139
    %s141 = sphi 0, %s139
    %s142 = sphi 0, %s141
    %s156 = sphi 0, %s142
    %s160 = sphi 0, %s160
    %s162 = sphi 0, %s160
    %s163 = sphi 0, %s162
    %s177 = sphi 0, %s163
    %s181 = sphi 0, %s181
    %s183 = sphi 0, %s181
    %s184 = sphi 0, %s183
    %s198 = sphi 0, %s184
    %s202 = sphi 0, %s202
    %s204 = sphi 0, %s202
    %s205 = sphi 0, %s204
    %s219 = sphi 0, %s205
    %s223 = sphi 0, %s223
    %s225 = sphi 0, %s223
    %s226 = sphi 0, %s225
    %s240 = sphi 0, %s226
    %s244 = sphi 0, %s244
    %s246 = sphi 0, %s244
    %s247 = sphi 0, %s246
    %s261 = sphi 0, %s247
    %s265 = sphi 0, %s265
    %s267 = sphi 0, %s265
    %s268 = sphi 0, %s267
    %s282 = sphi 0, %s268
    %s286 = sphi 0, %s286
    %s288 = sphi 0, %s286
    %s289 = sphi 0, %s288
    %s303 = sphi 0, %s289
    %s307 = sphi 0, %s307
    %s309 = sphi 0, %s307
    %s310 = sphi 0, %s309
    %s324 = sphi 0, %s310
    %s328 = sphi 0, %s328
    %s330 = sphi 0, %s328
    %s331 = sphi 0, %s330
    %s345 = sphi 0, %s331
    %s351 = sphi 0, %s353
    %s354 = sphi 0, %s351
    %s355 = sphi 0, %s354
    %s371 = sphi 0, %s355
  $region4: #{tpu_custom_call.1} parent=0 // loop_header_branch
    %24 = sbr.rel (%p22) target = $region8
  $region5: #{tpu_custom_call.1} parent=0 // loop_body
    %s26 = ssub.s32 %s21, 1
    %s27 = ssub.s32 %s21, 2
    %s28 = sadd.s32 %s21, 1
    %s29 = ssub.s32 %s21, %s28
    %p30 = scmp.eq.s32.totalorder %s29, 0
    %s32 = sadd.s32 %s31, 1
    %s33 = scalar_select %p30, %s31, %s32
    %p36 = pneg %p30
    %p37 = scmp.eq.s32.totalorder %s21, 1
    %p38 = por %p36, %p37
    %p39 = scmp.ne.s32.totalorder %s31, %s34
    %p40 = scmp.eq.s32.totalorder %s21, 0
    %p41 = por %p39, %p40
    %p42 = scmp.ne.s32.totalorder %s31, %s34
    %p43 = scmp.eq.s32.totalorder %s26, 1
    %p44 = por %p42, %p43
    %p45 = scmp.ne.s32.totalorder %s34, %s35
    %p46 = scmp.eq.s32.totalorder %s26, 0
    %p47 = por %p45, %p46
    %p48 = scmp.ne.s32.totalorder %s34, %s35
    %p49 = scmp.eq.s32.totalorder %s27, 1
    %p50 = por %p48, %p49
    %p52 = scmp.ne.s32.totalorder %s35, %s51
    %p53 = scmp.eq.s32.totalorder %s27, 0
    %p54 = por %p52, %p53
    %s56 = sadd.s32 %s55, 1
    %p59 = scmp.eq.s32.totalorder %s21, 1
    %p60 = scmp.ne.s32.totalorder %s55, %s57
    %p61 = scmp.eq.s32.totalorder %s21, 0
    %p62 = por %p60, %p61
    %p63 = scmp.ne.s32.totalorder %s55, %s57
    %p64 = scmp.eq.s32.totalorder %s26, 1
    %p65 = por %p63, %p64
    %p66 = scmp.ne.s32.totalorder %s57, %s58
    %p67 = scmp.eq.s32.totalorder %s26, 0
    %p68 = por %p66, %p67
    %p69 = scmp.ne.s32.totalorder %s57, %s58
    %p70 = scmp.eq.s32.totalorder %s27, 1
    %p71 = por %p69, %p70
    %p73 = scmp.ne.s32.totalorder %s58, %s72
    %p74 = scmp.eq.s32.totalorder %s27, 0
    %p75 = por %p73, %p74
    %s77 = sadd.s32 %s76, 1
    %p80 = scmp.eq.s32.totalorder %s21, 1
    %p81 = scmp.ne.s32.totalorder %s76, %s78
    %p82 = scmp.eq.s32.totalorder %s21, 0
    %p83 = por %p81, %p82
    %p84 = scmp.ne.s32.totalorder %s76, %s78
    %p85 = scmp.eq.s32.totalorder %s26, 1
    %p86 = por %p84, %p85
    %p87 = scmp.ne.s32.totalorder %s78, %s79
    %p88 = scmp.eq.s32.totalorder %s26, 0
    %p89 = por %p87, %p88
    %p90 = scmp.ne.s32.totalorder %s78, %s79
    %p91 = scmp.eq.s32.totalorder %s27, 1
    %p92 = por %p90, %p91
    %p94 = scmp.ne.s32.totalorder %s79, %s93
    %p95 = scmp.eq.s32.totalorder %s27, 0
    %p96 = por %p94, %p95
    %s98 = sadd.s32 %s97, 1
    %p101 = scmp.eq.s32.totalorder %s21, 1
    %p102 = scmp.ne.s32.totalorder %s97, %s99
    %p103 = scmp.eq.s32.totalorder %s21, 0
    %p104 = por %p102, %p103
    %p105 = scmp.ne.s32.totalorder %s97, %s99
    %p106 = scmp.eq.s32.totalorder %s26, 1
    %p107 = por %p105, %p106
    %p108 = scmp.ne.s32.totalorder %s99, %s100
    %p109 = scmp.eq.s32.totalorder %s26, 0
    %p110 = por %p108, %p109
    %p111 = scmp.ne.s32.totalorder %s99, %s100
    %p112 = scmp.eq.s32.totalorder %s27, 1
    %p113 = por %p111, %p112
    %p115 = scmp.ne.s32.totalorder %s100, %s114
    %p116 = scmp.eq.s32.totalorder %s27, 0
    %p117 = por %p115, %p116
    %s119 = sadd.s32 %s118, 1
    %p122 = scmp.eq.s32.totalorder %s21, 1
    %p123 = scmp.ne.s32.totalorder %s118, %s120
    %p124 = scmp.eq.s32.totalorder %s21, 0
    %p125 = por %p123, %p124
    %p126 = scmp.ne.s32.totalorder %s118, %s120
    %p127 = scmp.eq.s32.totalorder %s26, 1
    %p128 = por %p126, %p127
    %p129 = scmp.ne.s32.totalorder %s120, %s121
    %p130 = scmp.eq.s32.totalorder %s26, 0
    %p131 = por %p129, %p130
    %p132 = scmp.ne.s32.totalorder %s120, %s121
    %p133 = scmp.eq.s32.totalorder %s27, 1
    %p134 = por %p132, %p133
    %p136 = scmp.ne.s32.totalorder %s121, %s135
    %p137 = scmp.eq.s32.totalorder %s27, 0
    %p138 = por %p136, %p137
    %s140 = sadd.s32 %s139, 1
    %p143 = scmp.eq.s32.totalorder %s21, 1
    %p144 = scmp.ne.s32.totalorder %s139, %s141
    %p145 = scmp.eq.s32.totalorder %s21, 0
    %p146 = por %p144, %p145
    %p147 = scmp.ne.s32.totalorder %s139, %s141
    %p148 = scmp.eq.s32.totalorder %s26, 1
    %p149 = por %p147, %p148
    %p150 = scmp.ne.s32.totalorder %s141, %s142
    %p151 = scmp.eq.s32.totalorder %s26, 0
    %p152 = por %p150, %p151
    %p153 = scmp.ne.s32.totalorder %s141, %s142
    %p154 = scmp.eq.s32.totalorder %s27, 1
    %p155 = por %p153, %p154
    %p157 = scmp.ne.s32.totalorder %s142, %s156
    %p158 = scmp.eq.s32.totalorder %s27, 0
    %p159 = por %p157, %p158
    %s161 = sadd.s32 %s160, 1
    %p164 = scmp.eq.s32.totalorder %s21, 1
    %p165 = scmp.ne.s32.totalorder %s160, %s162
    %p166 = scmp.eq.s32.totalorder %s21, 0
    %p167 = por %p165, %p166
    %p168 = scmp.ne.s32.totalorder %s160, %s162
    %p169 = scmp.eq.s32.totalorder %s26, 1
    %p170 = por %p168, %p169
    %p171 = scmp.ne.s32.totalorder %s162, %s163
    %p172 = scmp.eq.s32.totalorder %s26, 0
    %p173 = por %p171, %p172
    %p174 = scmp.ne.s32.totalorder %s162, %s163
    %p175 = scmp.eq.s32.totalorder %s27, 1
    %p176 = por %p174, %p175
    %p178 = scmp.ne.s32.totalorder %s163, %s177
    %p179 = scmp.eq.s32.totalorder %s27, 0
    %p180 = por %p178, %p179
    %s182 = sadd.s32 %s181, 1
    %p185 = scmp.eq.s32.totalorder %s21, 1
    %p186 = scmp.ne.s32.totalorder %s181, %s183
    %p187 = scmp.eq.s32.totalorder %s21, 0
    %p188 = por %p186, %p187
    %p189 = scmp.ne.s32.totalorder %s181, %s183
    %p190 = scmp.eq.s32.totalorder %s26, 1
    %p191 = por %p189, %p190
    %p192 = scmp.ne.s32.totalorder %s183, %s184
    %p193 = scmp.eq.s32.totalorder %s26, 0
    %p194 = por %p192, %p193
    %p195 = scmp.ne.s32.totalorder %s183, %s184
    %p196 = scmp.eq.s32.totalorder %s27, 1
    %p197 = por %p195, %p196
    %p199 = scmp.ne.s32.totalorder %s184, %s198
    %p200 = scmp.eq.s32.totalorder %s27, 0
    %p201 = por %p199, %p200
    %s203 = sadd.s32 %s202, 1
    %p206 = scmp.eq.s32.totalorder %s21, 1
    %p207 = scmp.ne.s32.totalorder %s202, %s204
    %p208 = scmp.eq.s32.totalorder %s21, 0
    %p209 = por %p207, %p208
    %p210 = scmp.ne.s32.totalorder %s202, %s204
    %p211 = scmp.eq.s32.totalorder %s26, 1
    %p212 = por %p210, %p211
    %p213 = scmp.ne.s32.totalorder %s204, %s205
    %p214 = scmp.eq.s32.totalorder %s26, 0
    %p215 = por %p213, %p214
    %p216 = scmp.ne.s32.totalorder %s204, %s205
    %p217 = scmp.eq.s32.totalorder %s27, 1
    %p218 = por %p216, %p217
    %p220 = scmp.ne.s32.totalorder %s205, %s219
    %p221 = scmp.eq.s32.totalorder %s27, 0
    %p222 = por %p220, %p221
    %s224 = sadd.s32 %s223, 1
    %p227 = scmp.eq.s32.totalorder %s21, 1
    %p228 = scmp.ne.s32.totalorder %s223, %s225
    %p229 = scmp.eq.s32.totalorder %s21, 0
    %p230 = por %p228, %p229
    %p231 = scmp.ne.s32.totalorder %s223, %s225
    %p232 = scmp.eq.s32.totalorder %s26, 1
    %p233 = por %p231, %p232
    %p234 = scmp.ne.s32.totalorder %s225, %s226
    %p235 = scmp.eq.s32.totalorder %s26, 0
    %p236 = por %p234, %p235
    %p237 = scmp.ne.s32.totalorder %s225, %s226
    %p238 = scmp.eq.s32.totalorder %s27, 1
    %p239 = por %p237, %p238
    %p241 = scmp.ne.s32.totalorder %s226, %s240
    %p242 = scmp.eq.s32.totalorder %s27, 0
    %p243 = por %p241, %p242
    %s245 = sadd.s32 %s244, 1
    %p248 = scmp.eq.s32.totalorder %s21, 1
    %p249 = scmp.ne.s32.totalorder %s244, %s246
    %p250 = scmp.eq.s32.totalorder %s21, 0
    %p251 = por %p249, %p250
    %p252 = scmp.ne.s32.totalorder %s244, %s246
    %p253 = scmp.eq.s32.totalorder %s26, 1
    %p254 = por %p252, %p253
    %p255 = scmp.ne.s32.totalorder %s246, %s247
    %p256 = scmp.eq.s32.totalorder %s26, 0
    %p257 = por %p255, %p256
    %p258 = scmp.ne.s32.totalorder %s246, %s247
    %p259 = scmp.eq.s32.totalorder %s27, 1
    %p260 = por %p258, %p259
    %p262 = scmp.ne.s32.totalorder %s247, %s261
    %p263 = scmp.eq.s32.totalorder %s27, 0
    %p264 = por %p262, %p263
    %s266 = sadd.s32 %s265, 1
    %p269 = scmp.eq.s32.totalorder %s21, 1
    %p270 = scmp.ne.s32.totalorder %s265, %s267
    %p271 = scmp.eq.s32.totalorder %s21, 0
    %p272 = por %p270, %p271
    %p273 = scmp.ne.s32.totalorder %s265, %s267
    %p274 = scmp.eq.s32.totalorder %s26, 1
    %p275 = por %p273, %p274
    %p276 = scmp.ne.s32.totalorder %s267, %s268
    %p277 = scmp.eq.s32.totalorder %s26, 0
    %p278 = por %p276, %p277
    %p279 = scmp.ne.s32.totalorder %s267, %s268
    %p280 = scmp.eq.s32.totalorder %s27, 1
    %p281 = por %p279, %p280
    %p283 = scmp.ne.s32.totalorder %s268, %s282
    %p284 = scmp.eq.s32.totalorder %s27, 0
    %p285 = por %p283, %p284
    %s287 = sadd.s32 %s286, 1
    %p290 = scmp.eq.s32.totalorder %s21, 1
    %p291 = scmp.ne.s32.totalorder %s286, %s288
    %p292 = scmp.eq.s32.totalorder %s21, 0
    %p293 = por %p291, %p292
    %p294 = scmp.ne.s32.totalorder %s286, %s288
    %p295 = scmp.eq.s32.totalorder %s26, 1
    %p296 = por %p294, %p295
    %p297 = scmp.ne.s32.totalorder %s288, %s289
    %p298 = scmp.eq.s32.totalorder %s26, 0
    %p299 = por %p297, %p298
    %p300 = scmp.ne.s32.totalorder %s288, %s289
    %p301 = scmp.eq.s32.totalorder %s27, 1
    %p302 = por %p300, %p301
    %p304 = scmp.ne.s32.totalorder %s289, %s303
    %p305 = scmp.eq.s32.totalorder %s27, 0
    %p306 = por %p304, %p305
    %s308 = sadd.s32 %s307, 1
    %p311 = scmp.eq.s32.totalorder %s21, 1
    %p312 = scmp.ne.s32.totalorder %s307, %s309
    %p313 = scmp.eq.s32.totalorder %s21, 0
    %p314 = por %p312, %p313
    %p315 = scmp.ne.s32.totalorder %s307, %s309
    %p316 = scmp.eq.s32.totalorder %s26, 1
    %p317 = por %p315, %p316
    %p318 = scmp.ne.s32.totalorder %s309, %s310
    %p319 = scmp.eq.s32.totalorder %s26, 0
    %p320 = por %p318, %p319
    %p321 = scmp.ne.s32.totalorder %s309, %s310
    %p322 = scmp.eq.s32.totalorder %s27, 1
    %p323 = por %p321, %p322
    %p325 = scmp.ne.s32.totalorder %s310, %s324
    %p326 = scmp.eq.s32.totalorder %s27, 0
    %p327 = por %p325, %p326
    %s329 = sadd.s32 %s328, 1
    %p332 = scmp.eq.s32.totalorder %s21, 1
    %p333 = scmp.ne.s32.totalorder %s328, %s330
    %p334 = scmp.eq.s32.totalorder %s21, 0
    %p335 = por %p333, %p334
    %p336 = scmp.ne.s32.totalorder %s328, %s330
    %p337 = scmp.eq.s32.totalorder %s26, 1
    %p338 = por %p336, %p337
    %p339 = scmp.ne.s32.totalorder %s330, %s331
    %p340 = scmp.eq.s32.totalorder %s26, 0
    %p341 = por %p339, %p340
    %p342 = scmp.ne.s32.totalorder %s330, %s331
    %p343 = scmp.eq.s32.totalorder %s27, 1
    %p344 = por %p342, %p343
    %p346 = scmp.ne.s32.totalorder %s331, %s345
    %p347 = scmp.eq.s32.totalorder %s27, 0
    %p348 = por %p346, %p347
    %s349 = ssub.s32 %s21, %s28
    %p350 = scmp.eq.s32.totalorder %s349, 0
    %s352 = sadd.s32 %s351, 1
    %s353 = scalar_select %p350, %s351, %s352
    %p356 = pneg %p350
    %p357 = scmp.eq.s32.totalorder %s21, 1
    %p358 = por %p356, %p357
    %p359 = scmp.ne.s32.totalorder %s351, %s354
    %p360 = scmp.eq.s32.totalorder %s21, 0
    %p361 = por %p359, %p360
    %p362 = scmp.ne.s32.totalorder %s351, %s354
    %p363 = scmp.eq.s32.totalorder %s26, 1
    %p364 = por %p362, %p363
    %p365 = scmp.ne.s32.totalorder %s354, %s355
    %p366 = scmp.eq.s32.totalorder %s26, 0
    %p367 = por %p365, %p366
    %p368 = scmp.ne.s32.totalorder %s354, %s355
    %p369 = scmp.eq.s32.totalorder %s27, 1
    %p370 = por %p368, %p369
    %p372 = scmp.ne.s32.totalorder %s355, %s371
    %p373 = scmp.eq.s32.totalorder %s27, 0
    %p374 = por %p372, %p373
    %p375 = scmp.le.s32.totalorder 1, %s21
    %p376 = scmp.lt.s32.totalorder %s21, 3
    %p377 = pnand %p375, %p376
    %p378 = pneg %p377
    // Predicated region
    $region9: #{tpu_custom_call.1} parent=5 // pred_check
      _
    $region10: #{tpu_custom_call.1} parent=5 // pred_check_branch
      %380 = sbr.rel (%p377) target = $region12
    $region11: #{tpu_custom_call.1} parent=5 // pred_region
      %s381 = ssub.s32 %s21, 1
      // Predicated region
      $region13: #{tpu_custom_call.1} parent=11 // pred_check
        %p382 = pneg %p68
      $region14: #{tpu_custom_call.1} parent=11 // pred_check_branch
        %384 = sbr.rel (%p382) target = $region16
      $region15: #{tpu_custom_call.1} parent=11 // pred_region
        _
      $region16: #{tpu_custom_call.1} parent=11 // pred_fallthru
        _
      // Predicated region
      $region17: #{tpu_custom_call.1} parent=11 // pred_check
        %p385 = pneg %p89
      $region18: #{tpu_custom_call.1} parent=11 // pred_check_branch
        %387 = sbr.rel (%p385) target = $region20
      $region19: #{tpu_custom_call.1} parent=11 // pred_region
        _
      $region20: #{tpu_custom_call.1} parent=11 // pred_fallthru
        _
      // Predicated region
      $region21: #{tpu_custom_call.1} parent=11 // pred_check
        %p388 = pneg %p110
      $region22: #{tpu_custom_call.1} parent=11 // pred_check_branch
        %390 = sbr.rel (%p388) target = $region24
      $region23: #{tpu_custom_call.1} parent=11 // pred_region
        _
      $region24: #{tpu_custom_call.1} parent=11 // pred_fallthru
        _
      // Predicated region
      $region25: #{tpu_custom_call.1} parent=11 // pred_check
        %p391 = pneg %p131
      $region26: #{tpu_custom_call.1} parent=11 // pred_check_branch
        %393 = sbr.rel (%p391) target = $region28
      $region27: #{tpu_custom_call.1} parent=11 // pred_region
        _
      $region28: #{tpu_custom_call.1} parent=11 // pred_fallthru
        _
      // Predicated region
      $region29: #{tpu_custom_call.1} parent=11 // pred_check
        %p394 = pneg %p152
      $region30: #{tpu_custom_call.1} parent=11 // pred_check_branch
        %396 = sbr.rel (%p394) target = $region32
      $region31: #{tpu_custom_call.1} parent=11 // pred_region
        _
      $region32: #{tpu_custom_call.1} parent=11 // pred_fallthru
        _
      // Predicated region
      $region33: #{tpu_custom_call.1} parent=11 // pred_check
        %p397 = pneg %p173
      $region34: #{tpu_custom_call.1} parent=11 // pred_check_branch
        %399 = sbr.rel (%p397) target = $region36
      $region35: #{tpu_custom_call.1} parent=11 // pred_region
        _
      $region36: #{tpu_custom_call.1} parent=11 // pred_fallthru
        _
      // Predicated region
      $region37: #{tpu_custom_call.1} parent=11 // pred_check
        %p400 = pneg %p194
      $region38: #{tpu_custom_call.1} parent=11 // pred_check_branch
        %402 = sbr.rel (%p400) target = $region40
      $region39: #{tpu_custom_call.1} parent=11 // pred_region
        _
      $region40: #{tpu_custom_call.1} parent=11 // pred_fallthru
        _
      // Predicated region
      $region41: #{tpu_custom_call.1} parent=11 // pred_check
        %p403 = pneg %p215
      $region42: #{tpu_custom_call.1} parent=11 // pred_check_branch
        %405 = sbr.rel (%p403) target = $region44
      $region43: #{tpu_custom_call.1} parent=11 // pred_region
        _
      $region44: #{tpu_custom_call.1} parent=11 // pred_fallthru
        _
      // Predicated region
      $region45: #{tpu_custom_call.1} parent=11 // pred_check
        %p406 = pneg %p236
      $region46: #{tpu_custom_call.1} parent=11 // pred_check_branch
        %408 = sbr.rel (%p406) target = $region48
      $region47: #{tpu_custom_call.1} parent=11 // pred_region
        _
      $region48: #{tpu_custom_call.1} parent=11 // pred_fallthru
        _
      // Predicated region
      $region49: #{tpu_custom_call.1} parent=11 // pred_check
        %p409 = pneg %p257
      $region50: #{tpu_custom_call.1} parent=11 // pred_check_branch
        %411 = sbr.rel (%p409) target = $region52
      $region51: #{tpu_custom_call.1} parent=11 // pred_region
        _
      $region52: #{tpu_custom_call.1} parent=11 // pred_fallthru
        _
      // Predicated region
      $region53: #{tpu_custom_call.1} parent=11 // pred_check
        %p412 = pneg %p278
      $region54: #{tpu_custom_call.1} parent=11 // pred_check_branch
        %414 = sbr.rel (%p412) target = $region56
      $region55: #{tpu_custom_call.1} parent=11 // pred_region
        _
      $region56: #{tpu_custom_call.1} parent=11 // pred_fallthru
        _
      // Predicated region
      $region57: #{tpu_custom_call.1} parent=11 // pred_check
        %p415 = pneg %p299
      $region58: #{tpu_custom_call.1} parent=11 // pred_check_branch
        %417 = sbr.rel (%p415) target = $region60
      $region59: #{tpu_custom_call.1} parent=11 // pred_region
        _
      $region60: #{tpu_custom_call.1} parent=11 // pred_fallthru
        _
      // Predicated region
      $region61: #{tpu_custom_call.1} parent=11 // pred_check
        %p418 = pneg %p320
      $region62: #{tpu_custom_call.1} parent=11 // pred_check_branch
        %420 = sbr.rel (%p418) target = $region64
      $region63: #{tpu_custom_call.1} parent=11 // pred_region
        _
      $region64: #{tpu_custom_call.1} parent=11 // pred_fallthru
        _
      // Predicated region
      $region65: #{tpu_custom_call.1} parent=11 // pred_check
        %p421 = pneg %p341
      $region66: #{tpu_custom_call.1} parent=11 // pred_check_branch
        %423 = sbr.rel (%p421) target = $region68
      $region67: #{tpu_custom_call.1} parent=11 // pred_region
        _
      $region68: #{tpu_custom_call.1} parent=11 // pred_fallthru
        _
    $region12: #{tpu_custom_call.1} parent=5 // pred_fallthru
      _
    %p424 = scmp.lt.s32.totalorder %s21, 2
    // Predicated region
    $region69: #{tpu_custom_call.1} parent=5 // pred_check
      %p425 = pneg %p424
    $region70: #{tpu_custom_call.1} parent=5 // pred_check_branch
      %427 = sbr.rel (%p425) target = $region72
    $region71: #{tpu_custom_call.1} parent=5 // pred_region
      // Predicated region
      $region73: #{tpu_custom_call.1} parent=71 // pred_check
        %p428 = pneg %p41
      $region74: #{tpu_custom_call.1} parent=71 // pred_check_branch
        %430 = sbr.rel (%p428) target = $region76
      $region75: #{tpu_custom_call.1} parent=71 // pred_region
        %p431 = scmp.lt.s32.totalorder %s21, 1
        %s432 = scalar_select %p431, %s21, 1
        %s433 = smul.addr %s432, 16
        %s434 = smul.addr %s433, 8
        %s435 = scalar_lea.vmem %s0, %s434
      $region76: #{tpu_custom_call.1} parent=71 // pred_fallthru
        _
    $region72: #{tpu_custom_call.1} parent=5 // pred_fallthru
      _
    %p436 = scmp.le.s32.totalorder 1, %s21
    %p437 = scmp.lt.s32.totalorder %s21, 3
    %p438 = pnand %p436, %p437
    %p439 = pneg %p438
    // Predicated region
    $region77: #{tpu_custom_call.1} parent=5 // pred_check
      _
    $region78: #{tpu_custom_call.1} parent=5 // pred_check_branch
      %441 = sbr.rel (%p438) target = $region80
    $region79: #{tpu_custom_call.1} parent=5 // pred_region
      %s442 = ssub.s32 %s21, 1
      %p443 = scmp.lt.s32.totalorder %s26, 1
      %s444 = scalar_select %p443, %s26, 1
      %s445 = smul.addr %s444, 16
      %s446 = smul.addr %s445, 8
      %s447 = scalar_lea.vmem %s0, %s446
      %p448 = pneg %p47
      %p449 = pneg %p44
      %p450 = pneg %p68
      %p451 = pneg %p65
      %p452 = pneg %p89
      %p453 = pneg %p86
      %p454 = pneg %p110
      %p455 = pneg %p107
      %p456 = pneg %p131
      %p457 = pneg %p128
      %p458 = pneg %p152
      %p459 = pneg %p149
      %p460 = pneg %p173
      %p461 = pneg %p170
      %p462 = pneg %p194
      %p463 = pneg %p191
      %p464 = pneg %p215
      %p465 = pneg %p212
      %p466 = pneg %p236
      %p467 = pneg %p233
      %p468 = pneg %p257
      %p469 = pneg %p254
      %p470 = pneg %p278
      %p471 = pneg %p275
      %p472 = pneg %p299
      %p473 = pneg %p296
      %p474 = pneg %p320
      %p475 = pneg %p317
      %p476 = pneg %p341
      %p477 = pneg %p338
      %p478 = pneg %p367
      %p479 = pneg %p364
      %p480 = scmp.lt.s32.totalorder %s26, 1
      %s481 = scalar_select %p480, %s26, 1
      %s482 = smul.addr %s481, 16
      %s483 = smul.addr %s482, 8
      %s484 = scalar_lea.vmem %s15, %s483
      %p485 = scmp.lt.s32.totalorder %s26, 1
      %s486 = scalar_select %p485, %s26, 1
      %s487 = smul.addr %s486, 16
      %s488 = smul.addr %s487, 8
      %s489 = scalar_lea.vmem %s0, %s488
      %p490 = scmp.lt.s32.totalorder %s26, 1
      %s491 = scalar_select %p490, %s26, 1
      %s492 = smul.addr %s491, 16
      %s493 = smul.addr %s492, 8
      %s494 = scalar_lea.vmem %s15, %s493
      %v496 = vld [vmem:[%s489] sm:$0xff]
      %v497 = vld [vmem:[%s489 + $0x8] sm:$0xff]
      %v498 = vld [vmem:[%s489 + $0x10] sm:$0xff]
      %v499 = vld [vmem:[%s489 + $0x18] sm:$0xff]
      %v500 = vld [vmem:[%s489 + $0x20] sm:$0xff]
      %v501 = vld [vmem:[%s489 + $0x28] sm:$0xff]
      %v502 = vld [vmem:[%s489 + $0x30] sm:$0xff]
      %v503 = vld [vmem:[%s489 + $0x38] sm:$0xff]
      %v504 = vld [vmem:[%s489 + $0x40] sm:$0xff]
      %v505 = vld [vmem:[%s489 + $0x48] sm:$0xff]
      %v506 = vld [vmem:[%s489 + $0x50] sm:$0xff]
      %v507 = vld [vmem:[%s489 + $0x58] sm:$0xff]
      %v508 = vld [vmem:[%s489 + $0x60] sm:$0xff]
      %v509 = vld [vmem:[%s489 + $0x68] sm:$0xff]
      %v510 = vld [vmem:[%s489 + $0x70] sm:$0xff]
      %v511 = vld [vmem:[%s489 + $0x78] sm:$0xff]
      %v512 = vld [vmem:[%s1] sm:$0x1]
      %v513 = vld [vmem:[%s2] sm:$0x1]
      %vm514 = vcmask 261120
      %v515 = vsel %vm514, %v496, 0.0
      %516 = vadd.xlane.f32.xlu0 %v515
      %v517 = vpop.xlane.xlu0 %516
      %v518 = vsel %vm514, %v497, 0.0
      %519 = vadd.xlane.f32.xlu0 %v518
      %v520 = vpop.xlane.xlu0 %519
      %v521 = vsel %vm514, %v498, 0.0
      %522 = vadd.xlane.f32.xlu0 %v521
      %v523 = vpop.xlane.xlu0 %522
      %v524 = vsel %vm514, %v499, 0.0
      %525 = vadd.xlane.f32.xlu0 %v524
      %v526 = vpop.xlane.xlu0 %525
      %v527 = vsel %vm514, %v500, 0.0
      %528 = vadd.xlane.f32.xlu0 %v527
      %v529 = vpop.xlane.xlu0 %528
      %v530 = vsel %vm514, %v501, 0.0
      %531 = vadd.xlane.f32.xlu0 %v530
      %v532 = vpop.xlane.xlu0 %531
      %v533 = vsel %vm514, %v502, 0.0
      %534 = vadd.xlane.f32.xlu0 %v533
      %v535 = vpop.xlane.xlu0 %534
      %v536 = vsel %vm514, %v503, 0.0
      %537 = vadd.xlane.f32.xlu0 %v536
      %v538 = vpop.xlane.xlu0 %537
      %v539 = vsel %vm514, %v504, 0.0
      %540 = vadd.xlane.f32.xlu0 %v539
      %v541 = vpop.xlane.xlu0 %540
      %v542 = vsel %vm514, %v505, 0.0
      %543 = vadd.xlane.f32.xlu0 %v542
      %v544 = vpop.xlane.xlu0 %543
      %v545 = vsel %vm514, %v506, 0.0
      %546 = vadd.xlane.f32.xlu0 %v545
      %v547 = vpop.xlane.xlu0 %546
      %v548 = vsel %vm514, %v507, 0.0
      %549 = vadd.xlane.f32.xlu0 %v548
      %v550 = vpop.xlane.xlu0 %549
      %v551 = vsel %vm514, %v508, 0.0
      %552 = vadd.xlane.f32.xlu0 %v551
      %v553 = vpop.xlane.xlu0 %552
      %v554 = vsel %vm514, %v509, 0.0
      %555 = vadd.xlane.f32.xlu0 %v554
      %v556 = vpop.xlane.xlu0 %555
      %v557 = vsel %vm514, %v510, 0.0
      %558 = vadd.xlane.f32.xlu0 %v557
      %v559 = vpop.xlane.xlu0 %558
      %v560 = vsel %vm514, %v511, 0.0
      %561 = vadd.xlane.f32.xlu0 %v560
      %v562 = vpop.xlane.xlu0 %561
      %v563 = vrcp.pop 32.0
      %v564 = vmul.f32 %v517, %v563
      %v565 = vmul.f32 %v520, %v563
      %v566 = vmul.f32 %v523, %v563
      %v567 = vmul.f32 %v526, %v563
      %v568 = vmul.f32 %v529, %v563
      %v569 = vmul.f32 %v532, %v563
      %v570 = vmul.f32 %v535, %v563
      %v571 = vmul.f32 %v538, %v563
      %v572 = vmul.f32 %v541, %v563
      %v573 = vmul.f32 %v544, %v563
      %v574 = vmul.f32 %v547, %v563
      %v575 = vmul.f32 %v550, %v563
      %v576 = vmul.f32 %v553, %v563
      %v577 = vmul.f32 %v556, %v563
      %v578 = vmul.f32 %v559, %v563
      %v579 = vmul.f32 %v562, %v563
      %v580 = vsub.f32 %v496, %v564
      %v581 = vsub.f32 %v497, %v565
      %v582 = vsub.f32 %v498, %v566
      %v583 = vsub.f32 %v499, %v567
      %v584 = vsub.f32 %v500, %v568
      %v585 = vsub.f32 %v501, %v569
      %v586 = vsub.f32 %v502, %v570
      %v587 = vsub.f32 %v503, %v571
      %v588 = vsub.f32 %v504, %v572
      %v589 = vsub.f32 %v505, %v573
      %v590 = vsub.f32 %v506, %v574
      %v591 = vsub.f32 %v507, %v575
      %v592 = vsub.f32 %v508, %v576
      %v593 = vsub.f32 %v509, %v577
      %v594 = vsub.f32 %v510, %v578
      %v595 = vsub.f32 %v511, %v579
      %v596 = vmul.f32 %v580, %v580
      %v597 = vmul.f32 %v581, %v581
      %v598 = vmul.f32 %v582, %v582
      %v599 = vmul.f32 %v583, %v583
      %v600 = vmul.f32 %v584, %v584
      %v601 = vmul.f32 %v585, %v585
      %v602 = vmul.f32 %v586, %v586
      %v603 = vmul.f32 %v587, %v587
      %v604 = vmul.f32 %v588, %v588
      %v605 = vmul.f32 %v589, %v589
      %v606 = vmul.f32 %v590, %v590
      %v607 = vmul.f32 %v591, %v591
      %v608 = vmul.f32 %v592, %v592
      %v609 = vmul.f32 %v593, %v593
      %v610 = vmul.f32 %v594, %v594
      %v611 = vmul.f32 %v595, %v595
      %v612 = vsel %vm514, %v596, 0.0
      %613 = vadd.xlane.f32.xlu0 %v612
      %v614 = vpop.xlane.xlu0 %613
      %v615 = vsel %vm514, %v597, 0.0
      %616 = vadd.xlane.f32.xlu0 %v615
      %v617 = vpop.xlane.xlu0 %616
      %v618 = vsel %vm514, %v598, 0.0
      %619 = vadd.xlane.f32.xlu0 %v618
      %v620 = vpop.xlane.xlu0 %619
      %v621 = vsel %vm514, %v599, 0.0
      %622 = vadd.xlane.f32.xlu0 %v621
      %v623 = vpop.xlane.xlu0 %622
      %v624 = vsel %vm514, %v600, 0.0
      %625 = vadd.xlane.f32.xlu0 %v624
      %v626 = vpop.xlane.xlu0 %625
      %v627 = vsel %vm514, %v601, 0.0
      %628 = vadd.xlane.f32.xlu0 %v627
      %v629 = vpop.xlane.xlu0 %628
      %v630 = vsel %vm514, %v602, 0.0
      %631 = vadd.xlane.f32.xlu0 %v630
      %v632 = vpop.xlane.xlu0 %631
      %v633 = vsel %vm514, %v603, 0.0
      %634 = vadd.xlane.f32.xlu0 %v633
      %v635 = vpop.xlane.xlu0 %634
      %v636 = vsel %vm514, %v604, 0.0
      %637 = vadd.xlane.f32.xlu0 %v636
      %v638 = vpop.xlane.xlu0 %637
      %v639 = vsel %vm514, %v605, 0.0
      %640 = vadd.xlane.f32.xlu0 %v639
      %v641 = vpop.xlane.xlu0 %640
      %v642 = vsel %vm514, %v606, 0.0
      %643 = vadd.xlane.f32.xlu0 %v642
      %v644 = vpop.xlane.xlu0 %643
      %v645 = vsel %vm514, %v607, 0.0
      %646 = vadd.xlane.f32.xlu0 %v645
      %v647 = vpop.xlane.xlu0 %646
      %v648 = vsel %vm514, %v608, 0.0
      %649 = vadd.xlane.f32.xlu0 %v648
      %v650 = vpop.xlane.xlu0 %649
      %v651 = vsel %vm514, %v609, 0.0
      %652 = vadd.xlane.f32.xlu0 %v651
      %v653 = vpop.xlane.xlu0 %652
      %v654 = vsel %vm514, %v610, 0.0
      %655 = vadd.xlane.f32.xlu0 %v654
      %v656 = vpop.xlane.xlu0 %655
      %v657 = vsel %vm514, %v611, 0.0
      %658 = vadd.xlane.f32.xlu0 %v657
      %v659 = vpop.xlane.xlu0 %658
      %v660 = vmul.f32 %v614, %v563
      %v661 = vmul.f32 %v617, %v563
      %v662 = vmul.f32 %v620, %v563
      %v663 = vmul.f32 %v623, %v563
      %v664 = vmul.f32 %v626, %v563
      %v665 = vmul.f32 %v629, %v563
      %v666 = vmul.f32 %v632, %v563
      %v667 = vmul.f32 %v635, %v563
      %v668 = vmul.f32 %v638, %v563
      %v669 = vmul.f32 %v641, %v563
      %v670 = vmul.f32 %v644, %v563
      %v671 = vmul.f32 %v647, %v563
      %v672 = vmul.f32 %v650, %v563
      %v673 = vmul.f32 %v653, %v563
      %v674 = vmul.f32 %v656, %v563
      %v675 = vmul.f32 %v659, %v563
      %v676 = vadd.f32 %v660, 1e-06
      %v677 = vadd.f32 %v661, 1e-06
      %v678 = vadd.f32 %v662, 1e-06
      %v679 = vadd.f32 %v663, 1e-06
      %v680 = vadd.f32 %v664, 1e-06
      %v681 = vadd.f32 %v665, 1e-06
      %v682 = vadd.f32 %v666, 1e-06
      %v683 = vadd.f32 %v667, 1e-06
      %v684 = vadd.f32 %v668, 1e-06
      %v685 = vadd.f32 %v669, 1e-06
      %v686 = vadd.f32 %v670, 1e-06
      %v687 = vadd.f32 %v671, 1e-06
      %v688 = vadd.f32 %v672, 1e-06
      %v689 = vadd.f32 %v673, 1e-06
      %v690 = vadd.f32 %v674, 1e-06
      %v691 = vadd.f32 %v675, 1e-06
      %v692 = vrsqrt.pop %v676
      %v693 = vrsqrt.pop %v677
      %v694 = vrsqrt.pop %v678
      %v695 = vrsqrt.pop %v679
      %v696 = vrsqrt.pop %v680
      %v697 = vrsqrt.pop %v681
      %v698 = vrsqrt.pop %v682
      %v699 = vrsqrt.pop %v683
      %v700 = vrsqrt.pop %v684
      %v701 = vrsqrt.pop %v685
      %v702 = vrsqrt.pop %v686
      %v703 = vrsqrt.pop %v687
      %v704 = vrsqrt.pop %v688
      %v705 = vrsqrt.pop %v689
      %v706 = vrsqrt.pop %v690
      %v707 = vrsqrt.pop %v691
      %v708 = vmul.f32 %v580, %v692
      %v709 = vmul.f32 %v581, %v693
      %v710 = vmul.f32 %v582, %v694
      %v711 = vmul.f32 %v583, %v695
      %v712 = vmul.f32 %v584, %v696
      %v713 = vmul.f32 %v585, %v697
      %v714 = vmul.f32 %v586, %v698
      %v715 = vmul.f32 %v587, %v699
      %v716 = vmul.f32 %v588, %v700
      %v717 = vmul.f32 %v589, %v701
      %v718 = vmul.f32 %v590, %v702
      %v719 = vmul.f32 %v591, %v703
      %v720 = vmul.f32 %v592, %v704
      %v721 = vmul.f32 %v593, %v705
      %v722 = vmul.f32 %v594, %v706
      %v723 = vmul.f32 %v595, %v707
      %v725 = vlaneseq
      %v726 = vshrl.u32 %v725, 7
      %v727 = vsub.s32 0, %v726
      %v728 = vrot.slane %v512, %v727
      %v730 = vmul.f32 %v708, %v728
      %v731 = vmul.f32 %v709, %v728
      %v732 = vmul.f32 %v710, %v728
      %v733 = vmul.f32 %v711, %v728
      %v734 = vmul.f32 %v712, %v728
      %v735 = vmul.f32 %v713, %v728
      %v736 = vmul.f32 %v714, %v728
      %v737 = vmul.f32 %v715, %v728
      %v738 = vmul.f32 %v716, %v728
      %v739 = vmul.f32 %v717, %v728
      %v740 = vmul.f32 %v718, %v728
      %v741 = vmul.f32 %v719, %v728
      %v742 = vmul.f32 %v720, %v728
      %v743 = vmul.f32 %v721, %v728
      %v744 = vmul.f32 %v722, %v728
      %v745 = vmul.f32 %v723, %v728
      %v747 = vlaneseq
      %v748 = vshrl.u32 %v747, 7
      %v749 = vsub.s32 0, %v748
      %v750 = vrot.slane %v513, %v749
      %v752 = vadd.f32 %v730, %v750
      %v753 = vadd.f32 %v731, %v750
      %v754 = vadd.f32 %v732, %v750
      %v755 = vadd.f32 %v733, %v750
      %v756 = vadd.f32 %v734, %v750
      %v757 = vadd.f32 %v735, %v750
      %v758 = vadd.f32 %v736, %v750
      %v759 = vadd.f32 %v737, %v750
      %v760 = vadd.f32 %v738, %v750
      %v761 = vadd.f32 %v739, %v750
      %v762 = vadd.f32 %v740, %v750
      %v763 = vadd.f32 %v741, %v750
      %v764 = vadd.f32 %v742, %v750
      %v765 = vadd.f32 %v743, %v750
      %v766 = vadd.f32 %v744, %v750
      %v767 = vadd.f32 %v745, %v750
      %v768 = vpack.c.bf16 %v753, %v752
      %v769 = vpack.c.bf16 %v755, %v754
      %v770 = vpack.c.bf16 %v757, %v756
      %v771 = vpack.c.bf16 %v759, %v758
      %v772 = vpack.c.bf16 %v761, %v760
      %v773 = vpack.c.bf16 %v763, %v762
      %v774 = vpack.c.bf16 %v765, %v764
      %v775 = vpack.c.bf16 %v767, %v766
      %v776 = vlaneseq
      %v777 = vand.u32 %v776, 127
      %vm778 = vcmp.lt.s32.totalorder %v777, 8
      %v779 = vsel %vm778, 0.0, -inf
      %780 = vst.msk [vmem:[#allocation2] sm:$0xff] %vm514, 0.0
      %781 = vst.msk [vmem:[#allocation2 + $0x8] sm:$0xff] %vm514, 0.0
      %782 = vst.msk [vmem:[#allocation2 + $0x10] sm:$0xff] %vm514, 0.0
      %783 = vst.msk [vmem:[#allocation2 + $0x18] sm:$0xff] %vm514, 0.0
      %784 = vst.msk [vmem:[#allocation2 + $0x20] sm:$0xff] %vm514, 0.0
      %785 = vst.msk [vmem:[#allocation2 + $0x28] sm:$0xff] %vm514, 0.0
      %786 = vst.msk [vmem:[#allocation2 + $0x30] sm:$0xff] %vm514, 0.0
      %787 = vst.msk [vmem:[#allocation2 + $0x38] sm:$0xff] %vm514, 0.0
      %788 = vst.msk [vmem:[#allocation2 + $0x40] sm:$0xff] %vm514, 0.0
      %789 = vst.msk [vmem:[#allocation2 + $0x48] sm:$0xff] %vm514, 0.0
      %790 = vst.msk [vmem:[#allocation2 + $0x50] sm:$0xff] %vm514, 0.0
      %791 = vst.msk [vmem:[#allocation2 + $0x58] sm:$0xff] %vm514, 0.0
      %792 = vst.msk [vmem:[#allocation2 + $0x60] sm:$0xff] %vm514, 0.0
      %793 = vst.msk [vmem:[#allocation2 + $0x68] sm:$0xff] %vm514, 0.0
      %794 = vst.msk [vmem:[#allocation2 + $0x70] sm:$0xff] %vm514, 0.0
      %795 = vst.msk [vmem:[#allocation2 + $0x78] sm:$0xff] %vm514, 0.0
      loop: start=0, step=1, limit=4
      $region81: #{tpu_custom_call.1} parent=79 // loop_pre_header
        _
      $region82: #{tpu_custom_call.1} parent=79 // loop_header
        %s797 = sphi 0, %s801
        %p798 = scmp.ge.s32.totalorder %s797, 4
      $region83: #{tpu_custom_call.1} parent=79 // loop_header_branch
        %800 = sbr.rel (%p798) target = $region87
      $region84: #{tpu_custom_call.1} parent=79 // loop_body
        %s802 = smul.u32 %s797, 4
        %s803 = smul.addr %s802, 4
        %s804 = scalar_lea.vmem %s3, %s803
        %v805 = vld [vmem:[%s804] sm:$0xf]
        %v806 = vld [vmem:[%s804 + $0x4] sm:$0xf]
        %v807 = vld [vmem:[%s804 + $0x8] sm:$0xf]
        %v808 = vld [vmem:[%s804 + $0xc] sm:$0xf]
        %s809 = scalar_lea.vmem %s4, %s797
        %v810 = vld [vmem:[%s809] sm:$0x1]
        %v812 = vlaneseq
        %v813 = vshrl.u32 %v812, 7
        %v814 = vsub.s32 0, %v813
        %v815 = vrot.slane %v810, %v814
        %v821 = vunpack.c.l.b16 %v805
        %v822 = vunpack.c.l.b16 %v806
        %v823 = vunpack.c.l.b16 %v807
        %v824 = vunpack.c.l.b16 %v808
        %v825 = vpack.c.b16 %v822, %v821
        %v826 = vpack.c.b16 %v824, %v823
        %v830 = vsel %vm514, %v768, 0
        %v833 = vsel %vm514, %v769, 0
        %v836 = vsel %vm514, %v770, 0
        %v839 = vsel %vm514, %v771, 0
        %v842 = vsel %vm514, %v772, 0
        %v845 = vsel %vm514, %v773, 0
        %v848 = vsel %vm514, %v774, 0
        %v851 = vsel %vm514, %v775, 0
        %853 = vmatprep.subr.bf16.mxu0 0
        %854 = vmatpush1.bf16.msra.mxu0 %v825
        %855 = vmatprep.subr.bf16.mxu0 0
        %856 = vmatpush1.bf16.msra.mxu0 %v826
        %857 = vmatprep.subr.bf16.mxu0 0
        %858 = vmatpush1.bf16.msra.mxu0 0
        %859 = vmatprep.subr.bf16.mxu0 0
        %860 = vmatpush1.bf16.msra.mxu0 0
        %861 = vmatprep.subr.bf16.mxu0 0
        %862 = vmatpush1.bf16.msra.mxu0 0
        %863 = vmatprep.subr.bf16.mxu0 0
        %864 = vmatpush1.bf16.msra.mxu0 0
        %865 = vmatprep.subr.bf16.mxu0 0
        %866 = vmatpush1.bf16.msra.mxu0 0
        %867 = vmatprep.subr.bf16.mxu0 0
        %868 = vmatpush1.bf16.msra.mxu0 0
        %869 = vmatprep.subr.bf16.mxu0 0
        %870 = vmatpush1.bf16.msra.mxu0 0
        %871 = vmatprep.subr.bf16.mxu0 0
        %872 = vmatpush1.bf16.msra.mxu0 0
        %873 = vmatprep.subr.bf16.mxu0 0
        %874 = vmatpush1.bf16.msra.mxu0 0
        %875 = vmatprep.subr.bf16.mxu0 0
        %876 = vmatpush1.bf16.msra.mxu0 0
        %877 = vmatprep.subr.bf16.mxu0 0
        %878 = vmatpush1.bf16.msra.mxu0 0
        %879 = vmatprep.subr.bf16.mxu0 0
        %880 = vmatpush1.bf16.msra.mxu0 0
        %881 = vmatprep.subr.bf16.mxu0 0
        %882 = vmatpush1.bf16.msra.mxu0 0
        %883 = vmatprep.subr.bf16.mxu0 0
        %884 = vmatpush1.bf16.msra.mxu0 0
        %885 = vmatprep.mubr.bf16.mxu0 0
        %886 = vmatmul.mubr.bf16.gmra.mrb[0].mxu0 %v830
        %v887 = vpop.f32.mrb[0].mxu0
        %v888 = vadd.f32 %v815, %v887
        %v889 = vpop.f32.mrb[0].mxu0
        %v890 = vpop.f32.mrb[0].mxu0
        %v891 = vadd.f32 %v815, %v890
        %v892 = vpop.f32.mrb[0].mxu0
        %893 = vmatprep.mubr.bf16.mxu0 0
        %894 = vmatmul.mubr.bf16.gmra.mrb[0].mxu0 %v833
        %v895 = vpop.f32.mrb[0].mxu0
        %v896 = vadd.f32 %v815, %v895
        %v897 = vpop.f32.mrb[0].mxu0
        %v898 = vpop.f32.mrb[0].mxu0
        %v899 = vadd.f32 %v815, %v898
        %v900 = vpop.f32.mrb[0].mxu0
        %901 = vmatprep.mubr.bf16.mxu0 0
        %902 = vmatmul.mubr.bf16.gmra.mrb[0].mxu0 %v836
        %v903 = vpop.f32.mrb[0].mxu0
        %v904 = vadd.f32 %v815, %v903
        %v905 = vpop.f32.mrb[0].mxu0
        %v906 = vpop.f32.mrb[0].mxu0
        %v907 = vadd.f32 %v815, %v906
        %v908 = vpop.f32.mrb[0].mxu0
        %909 = vmatprep.mubr.bf16.mxu0 0
        %910 = vmatmul.mubr.bf16.gmra.mrb[0].mxu0 %v839
        %v911 = vpop.f32.mrb[0].mxu0
        %v912 = vadd.f32 %v815, %v911
        %v913 = vpop.f32.mrb[0].mxu0
        %v914 = vpop.f32.mrb[0].mxu0
        %v915 = vadd.f32 %v815, %v914
        %v916 = vpop.f32.mrb[0].mxu0
        %917 = vmatprep.mubr.bf16.mxu0 0
        %918 = vmatmul.mubr.bf16.gmra.mrb[0].mxu0 %v842
        %v919 = vpop.f32.mrb[0].mxu0
        %v920 = vadd.f32 %v815, %v919
        %v921 = vpop.f32.mrb[0].mxu0
        %v922 = vpop.f32.mrb[0].mxu0
        %v923 = vadd.f32 %v815, %v922
        %v924 = vpop.f32.mrb[0].mxu0
        %925 = vmatprep.mubr.bf16.mxu0 0
        %926 = vmatmul.mubr.bf16.gmra.mrb[0].mxu0 %v845
        %v927 = vpop.f32.mrb[0].mxu0
        %v928 = vadd.f32 %v815, %v927
        %v929 = vpop.f32.mrb[0].mxu0
        %v930 = vpop.f32.mrb[0].mxu0
        %v931 = vadd.f32 %v815, %v930
        %v932 = vpop.f32.mrb[0].mxu0
        %933 = vmatprep.mubr.bf16.mxu0 0
        %934 = vmatmul.mubr.bf16.gmra.mrb[0].mxu0 %v848
        %v935 = vpop.f32.mrb[0].mxu0
        %v936 = vadd.f32 %v815, %v935
        %v937 = vpop.f32.mrb[0].mxu0
        %v938 = vpop.f32.mrb[0].mxu0
        %v939 = vadd.f32 %v815, %v938
        %v940 = vpop.f32.mrb[0].mxu0
        %941 = vmatprep.mubr.bf16.mxu0 0
        %942 = vmatmul.mubr.bf16.gmra.mrb[0].mxu0 %v851
        %v943 = vpop.f32.mrb[0].mxu0
        %v944 = vadd.f32 %v815, %v943
        %v945 = vpop.f32.mrb[0].mxu0
        %v946 = vpop.f32.mrb[0].mxu0
        %v947 = vadd.f32 %v815, %v946
        %v948 = vpop.f32.mrb[0].mxu0
        %949 = vdwg.mxu0
        %v950 = vpack.c.bf16 %v891, %v888
        %v951 = vpack.c.bf16 %v899, %v896
        %v952 = vpack.c.bf16 %v907, %v904
        %v953 = vpack.c.bf16 %v915, %v912
        %v954 = vpack.c.bf16 %v923, %v920
        %v955 = vpack.c.bf16 %v931, %v928
        %v956 = vpack.c.bf16 %v939, %v936
        %v957 = vpack.c.bf16 %v947, %v944
        %966 = vrot.lane.b32.xlu0 %v950, 120
        %v967 = vpop.permute.xlu0 %966
        %968 = vrot.lane.b32.xlu0 %v951, 120
        %v969 = vpop.permute.xlu0 %968
        %970 = vrot.lane.b32.xlu0 %v952, 120
        %v971 = vpop.permute.xlu0 %970
        %972 = vrot.lane.b32.xlu0 %v953, 120
        %v973 = vpop.permute.xlu0 %972
        %974 = vrot.lane.b32.xlu0 %v954, 120
        %v975 = vpop.permute.xlu0 %974
        %976 = vrot.lane.b32.xlu0 %v955, 120
        %v977 = vpop.permute.xlu0 %976
        %978 = vrot.lane.b32.xlu0 %v956, 120
        %v979 = vpop.permute.xlu0 %978
        %980 = vrot.lane.b32.xlu0 %v957, 120
        %v981 = vpop.permute.xlu0 %980
        %vm982 = vcmask 64512
        %v984 = vsel %vm982, %v950, 0
        %v987 = vsel %vm982, %v951, 0
        %v990 = vsel %vm982, %v952, 0
        %v993 = vsel %vm982, %v953, 0
        %v996 = vsel %vm982, %v954, 0
        %v999 = vsel %vm982, %v955, 0
        %v1002 = vsel %vm982, %v956, 0
        %v1005 = vsel %vm982, %v957, 0
        %v1008 = vsel %vm982, %v967, 0
        %v1011 = vsel %vm982, %v969, 0
        %v1014 = vsel %vm982, %v971, 0
        %v1017 = vsel %vm982, %v973, 0
        %v1020 = vsel %vm982, %v975, 0
        %v1023 = vsel %vm982, %v977, 0
        %v1026 = vsel %vm982, %v979, 0
        %v1029 = vsel %vm982, %v981, 0
        %1031 = vmatprep.subr.bf16.mxu0 0
        %1032 = vmatpush1.bf16.xpose.msra.mxu0 %v1008
        %1033 = vmatprep.subr.bf16.mxu0 0
        %1034 = vmatpush1.bf16.xpose.msra.mxu0 %v1011
        %1035 = vmatprep.subr.bf16.mxu0 0
        %1036 = vmatpush1.bf16.xpose.msra.mxu0 %v1014
        %1037 = vmatprep.subr.bf16.mxu0 0
        %1038 = vmatpush1.bf16.xpose.msra.mxu0 %v1017
        %1039 = vmatprep.subr.bf16.mxu0 0
        %1040 = vmatpush1.bf16.xpose.msra.mxu0 %v1020
        %1041 = vmatprep.subr.bf16.mxu0 0
        %1042 = vmatpush1.bf16.xpose.msra.mxu0 %v1023
        %1043 = vmatprep.subr.bf16.mxu0 0
        %1044 = vmatpush1.bf16.xpose.msra.mxu0 %v1026
        %1045 = vmatprep.subr.bf16.mxu0 0
        %1046 = vmatpush1.bf16.xpose.msra.mxu0 %v1029
        %1047 = vmatprep.subr.bf16.mxu0 0
        %1048 = vmatpush1.bf16.xpose.msra.mxu0 0
        %1049 = vmatprep.subr.bf16.mxu0 0
        %1050 = vmatpush1.bf16.xpose.msra.mxu0 0
        %1051 = vmatprep.subr.bf16.mxu0 0
        %1052 = vmatpush1.bf16.xpose.msra.mxu0 0
        %1053 = vmatprep.subr.bf16.mxu0 0
        %1054 = vmatpush1.bf16.xpose.msra.mxu0 0
        %1055 = vmatprep.subr.bf16.mxu0 0
        %1056 = vmatpush1.bf16.xpose.msra.mxu0 0
        %1057 = vmatprep.subr.bf16.mxu0 0
        %1058 = vmatpush1.bf16.xpose.msra.mxu0 0
        %1059 = vmatprep.subr.bf16.mxu0 0
        %1060 = vmatpush1.bf16.xpose.msra.mxu0 0
        %1061 = vmatprep.subr.bf16.mxu0 0
        %1062 = vmatpush1.bf16.xpose.msra.mxu0 0
        %1063 = vmatprep.mubr.bf16.mxu0 0
        %1064 = vmatmul.mubr.bf16.gmra.mrb[0].mxu0 %v984
        %v1065 = vpop.f32.mrb[0].mxu0
        %v1066 = vadd.f32 %v779, %v1065
        %v1067 = vpop.f32.mrb[0].mxu0
        %v1068 = vpop.f32.mrb[0].mxu0
        %v1069 = vadd.f32 %v779, %v1068
        %v1070 = vpop.f32.mrb[0].mxu0
        %1071 = vmatprep.mubr.bf16.mxu0 0
        %1072 = vmatmul.mubr.bf16.gmra.mrb[0].mxu0 %v987
        %v1073 = vpop.f32.mrb[0].mxu0
        %v1074 = vadd.f32 %v779, %v1073
        %v1075 = vpop.f32.mrb[0].mxu0
        %v1076 = vpop.f32.mrb[0].mxu0
        %v1077 = vadd.f32 %v779, %v1076
        %v1078 = vpop.f32.mrb[0].mxu0
        %1079 = vmatprep.mubr.bf16.mxu0 0
        %1080 = vmatmul.mubr.bf16.gmra.mrb[0].mxu0 %v990
        %v1081 = vpop.f32.mrb[0].mxu0
        %v1082 = vadd.f32 %v779, %v1081
        %v1083 = vpop.f32.mrb[0].mxu0
        %v1084 = vpop.f32.mrb[0].mxu0
        %v1085 = vadd.f32 %v779, %v1084
        %v1086 = vpop.f32.mrb[0].mxu0
        %1087 = vmatprep.mubr.bf16.mxu0 0
        %1088 = vmatmul.mubr.bf16.gmra.mrb[0].mxu0 %v993
        %v1089 = vpop.f32.mrb[0].mxu0
        %v1090 = vadd.f32 %v779, %v1089
        %v1091 = vpop.f32.mrb[0].mxu0
        %v1092 = vpop.f32.mrb[0].mxu0
        %v1093 = vadd.f32 %v779, %v1092
        %v1094 = vpop.f32.mrb[0].mxu0
        %1095 = vmatprep.mubr.bf16.mxu0 0
        %1096 = vmatmul.mubr.bf16.gmra.mrb[0].mxu0 %v996
        %v1097 = vpop.f32.mrb[0].mxu0
        %v1098 = vadd.f32 %v779, %v1097
        %v1099 = vpop.f32.mrb[0].mxu0
        %v1100 = vpop.f32.mrb[0].mxu0
        %v1101 = vadd.f32 %v779, %v1100
        %v1102 = vpop.f32.mrb[0].mxu0
        %1103 = vmatprep.mubr.bf16.mxu0 0
        %1104 = vmatmul.mubr.bf16.gmra.mrb[0].mxu0 %v999
        %v1105 = vpop.f32.mrb[0].mxu0
        %v1106 = vadd.f32 %v779, %v1105
        %v1107 = vpop.f32.mrb[0].mxu0
        %v1108 = vpop.f32.mrb[0].mxu0
        %v1109 = vadd.f32 %v779, %v1108
        %v1110 = vpop.f32.mrb[0].mxu0
        %1111 = vmatprep.mubr.bf16.mxu0 0
        %1112 = vmatmul.mubr.bf16.gmra.mrb[0].mxu0 %v1002
        %v1113 = vpop.f32.mrb[0].mxu0
        %v1114 = vadd.f32 %v779, %v1113
        %v1115 = vpop.f32.mrb[0].mxu0
        %v1116 = vpop.f32.mrb[0].mxu0
        %v1117 = vadd.f32 %v779, %v1116
        %v1118 = vpop.f32.mrb[0].mxu0
        %1119 = vmatprep.mubr.bf16.mxu0 0
        %1120 = vmatmul.mubr.bf16.gmra.mrb[0].mxu0 %v1005
        %v1121 = vpop.f32.mrb[0].mxu0
        %v1122 = vadd.f32 %v779, %v1121
        %v1123 = vpop.f32.mrb[0].mxu0
        %v1124 = vpop.f32.mrb[0].mxu0
        %v1125 = vadd.f32 %v779, %v1124
        %v1126 = vpop.f32.mrb[0].mxu0
        %1127 = vdwg.mxu0
        %1128 = vmax.xlane.f32.xlu0 %v1066
        %v1129 = vpop.xlane.xlu0 %1128
        %1130 = vmax.xlane.f32.xlu0 %v1069
        %v1131 = vpop.xlane.xlu0 %1130
        %1132 = vmax.xlane.f32.xlu0 %v1074
        %v1133 = vpop.xlane.xlu0 %1132
        %1134 = vmax.xlane.f32.xlu0 %v1077
        %v1135 = vpop.xlane.xlu0 %1134
        %1136 = vmax.xlane.f32.xlu0 %v1082
        %v1137 = vpop.xlane.xlu0 %1136
        %1138 = vmax.xlane.f32.xlu0 %v1085
        %v1139 = vpop.xlane.xlu0 %1138
        %1140 = vmax.xlane.f32.xlu0 %v1090
        %v1141 = vpop.xlane.xlu0 %1140
        %1142 = vmax.xlane.f32.xlu0 %v1093
        %v1143 = vpop.xlane.xlu0 %1142
        %1144 = vmax.xlane.f32.xlu0 %v1098
        %v1145 = vpop.xlane.xlu0 %1144
        %1146 = vmax.xlane.f32.xlu0 %v1101
        %v1147 = vpop.xlane.xlu0 %1146
        %1148 = vmax.xlane.f32.xlu0 %v1106
        %v1149 = vpop.xlane.xlu0 %1148
        %1150 = vmax.xlane.f32.xlu0 %v1109
        %v1151 = vpop.xlane.xlu0 %1150
        %1152 = vmax.xlane.f32.xlu0 %v1114
        %v1153 = vpop.xlane.xlu0 %1152
        %1154 = vmax.xlane.f32.xlu0 %v1117
        %v1155 = vpop.xlane.xlu0 %1154
        %1156 = vmax.xlane.f32.xlu0 %v1122
        %v1157 = vpop.xlane.xlu0 %1156
        %1158 = vmax.xlane.f32.xlu0 %v1125
        %v1159 = vpop.xlane.xlu0 %1158
        %v1160 = vsub.f32 %v1066, %v1129
        %v1161 = vsub.f32 %v1069, %v1131
        %v1162 = vsub.f32 %v1074, %v1133
        %v1163 = vsub.f32 %v1077, %v1135
        %v1164 = vsub.f32 %v1082, %v1137
        %v1165 = vsub.f32 %v1085, %v1139
        %v1166 = vsub.f32 %v1090, %v1141
        %v1167 = vsub.f32 %v1093, %v1143
        %v1168 = vsub.f32 %v1098, %v1145
        %v1169 = vsub.f32 %v1101, %v1147
        %v1170 = vsub.f32 %v1106, %v1149
        %v1171 = vsub.f32 %v1109, %v1151
        %v1172 = vsub.f32 %v1114, %v1153
        %v1173 = vsub.f32 %v1117, %v1155
        %v1174 = vsub.f32 %v1122, %v1157
        %v1175 = vsub.f32 %v1125, %v1159
        %v1176 = vmul.f32 %v1160, 1.442695
        %v1177 = vpow.pop %v1176
        %v1178 = vmul.f32 %v1161, 1.442695
        %v1179 = vpow.pop %v1178
        %v1180 = vmul.f32 %v1162, 1.442695
        %v1181 = vpow.pop %v1180
        %v1182 = vmul.f32 %v1163, 1.442695
        %v1183 = vpow.pop %v1182
        %v1184 = vmul.f32 %v1164, 1.442695
        %v1185 = vpow.pop %v1184
        %v1186 = vmul.f32 %v1165, 1.442695
        %v1187 = vpow.pop %v1186
        %v1188 = vmul.f32 %v1166, 1.442695
        %v1189 = vpow.pop %v1188
        %v1190 = vmul.f32 %v1167, 1.442695
        %v1191 = vpow.pop %v1190
        %v1192 = vmul.f32 %v1168, 1.442695
        %v1193 = vpow.pop %v1192
        %v1194 = vmul.f32 %v1169, 1.442695
        %v1195 = vpow.pop %v1194
        %v1196 = vmul.f32 %v1170, 1.442695
        %v1197 = vpow.pop %v1196
        %v1198 = vmul.f32 %v1171, 1.442695
        %v1199 = vpow.pop %v1198
        %v1200 = vmul.f32 %v1172, 1.442695
        %v1201 = vpow.pop %v1200
        %v1202 = vmul.f32 %v1173, 1.442695
        %v1203 = vpow.pop %v1202
        %v1204 = vmul.f32 %v1174, 1.442695
        %v1205 = vpow.pop %v1204
        %v1206 = vmul.f32 %v1175, 1.442695
        %v1207 = vpow.pop %v1206
        %1208 = vadd.xlane.f32.xlu0 %v1177
        %v1209 = vpop.xlane.xlu0 %1208
        %1210 = vadd.xlane.f32.xlu0 %v1179
        %v1211 = vpop.xlane.xlu0 %1210
        %1212 = vadd.xlane.f32.xlu0 %v1181
        %v1213 = vpop.xlane.xlu0 %1212
        %1214 = vadd.xlane.f32.xlu0 %v1183
        %v1215 = vpop.xlane.xlu0 %1214
        %1216 = vadd.xlane.f32.xlu0 %v1185
        %v1217 = vpop.xlane.xlu0 %1216
        %1218 = vadd.xlane.f32.xlu0 %v1187
        %v1219 = vpop.xlane.xlu0 %1218
        %1220 = vadd.xlane.f32.xlu0 %v1189
        %v1221 = vpop.xlane.xlu0 %1220
        %1222 = vadd.xlane.f32.xlu0 %v1191
        %v1223 = vpop.xlane.xlu0 %1222
        %1224 = vadd.xlane.f32.xlu0 %v1193
        %v1225 = vpop.xlane.xlu0 %1224
        %1226 = vadd.xlane.f32.xlu0 %v1195
        %v1227 = vpop.xlane.xlu0 %1226
        %1228 = vadd.xlane.f32.xlu0 %v1197
        %v1229 = vpop.xlane.xlu0 %1228
        %1230 = vadd.xlane.f32.xlu0 %v1199
        %v1231 = vpop.xlane.xlu0 %1230
        %1232 = vadd.xlane.f32.xlu0 %v1201
        %v1233 = vpop.xlane.xlu0 %1232
        %1234 = vadd.xlane.f32.xlu0 %v1203
        %v1235 = vpop.xlane.xlu0 %1234
        %1236 = vadd.xlane.f32.xlu0 %v1205
        %v1237 = vpop.xlane.xlu0 %1236
        %1238 = vadd.xlane.f32.xlu0 %v1207
        %v1239 = vpop.xlane.xlu0 %1238
        %v1240 = vrcp.pop %v1209
        %v1241 = vrcp.pop %v1211
        %v1242 = vrcp.pop %v1213
        %v1243 = vrcp.pop %v1215
        %v1244 = vrcp.pop %v1217
        %v1245 = vrcp.pop %v1219
        %v1246 = vrcp.pop %v1221
        %v1247 = vrcp.pop %v1223
        %v1248 = vrcp.pop %v1225
        %v1249 = vrcp.pop %v1227
        %v1250 = vrcp.pop %v1229
        %v1251 = vrcp.pop %v1231
        %v1252 = vrcp.pop %v1233
        %v1253 = vrcp.pop %v1235
        %v1254 = vrcp.pop %v1237
        %v1255 = vrcp.pop %v1239
        %v1256 = vmul.f32 %v1177, %v1240
        %v1257 = vmul.f32 %v1179, %v1241
        %v1258 = vmul.f32 %v1181, %v1242
        %v1259 = vmul.f32 %v1183, %v1243
        %v1260 = vmul.f32 %v1185, %v1244
        %v1261 = vmul.f32 %v1187, %v1245
        %v1262 = vmul.f32 %v1189, %v1246
        %v1263 = vmul.f32 %v1191, %v1247
        %v1264 = vmul.f32 %v1193, %v1248
        %v1265 = vmul.f32 %v1195, %v1249
        %v1266 = vmul.f32 %v1197, %v1250
        %v1267 = vmul.f32 %v1199, %v1251
        %v1268 = vmul.f32 %v1201, %v1252
        %v1269 = vmul.f32 %v1203, %v1253
        %v1270 = vmul.f32 %v1205, %v1254
        %v1271 = vmul.f32 %v1207, %v1255
        %v1272 = vpack.c.bf16 %v1257, %v1256
        %v1273 = vpack.c.bf16 %v1259, %v1258
        %v1274 = vpack.c.bf16 %v1261, %v1260
        %v1275 = vpack.c.bf16 %v1263, %v1262
        %v1276 = vpack.c.bf16 %v1265, %v1264
        %v1277 = vpack.c.bf16 %v1267, %v1266
        %v1278 = vpack.c.bf16 %v1269, %v1268
        %v1279 = vpack.c.bf16 %v1271, %v1270
        %1280 = vrot.lane.b32.xlu0 %v950, 112
        %v1281 = vpop.permute.xlu0 %1280
        %1282 = vrot.lane.b32.xlu0 %v951, 112
        %v1283 = vpop.permute.xlu0 %1282
        %1284 = vrot.lane.b32.xlu0 %v952, 112
        %v1285 = vpop.permute.xlu0 %1284
        %1286 = vrot.lane.b32.xlu0 %v953, 112
        %v1287 = vpop.permute.xlu0 %1286
        %1288 = vrot.lane.b32.xlu0 %v954, 112
        %v1289 = vpop.permute.xlu0 %1288
        %1290 = vrot.lane.b32.xlu0 %v955, 112
        %v1291 = vpop.permute.xlu0 %1290
        %1292 = vrot.lane.b32.xlu0 %v956, 112
        %v1293 = vpop.permute.xlu0 %1292
        %1294 = vrot.lane.b32.xlu0 %v957, 112
        %v1295 = vpop.permute.xlu0 %1294
        %1304 = vmatprep.subr.bf16.mxu0 0
        %1305 = vmatpush1.bf16.msra.mxu0 %v1281
        %1306 = vmatprep.subr.bf16.mxu0 0
        %1307 = vmatpush1.bf16.msra.mxu0 %v1283
        %1308 = vmatprep.subr.bf16.mxu0 0
        %1309 = vmatpush1.bf16.msra.mxu0 %v1285
        %1310 = vmatprep.subr.bf16.mxu0 0
        %1311 = vmatpush1.bf16.msra.mxu0 %v1287
        %1312 = vmatprep.subr.bf16.mxu0 0
        %1313 = vmatpush1.bf16.msra.mxu0 %v1289
        %1314 = vmatprep.subr.bf16.mxu0 0
        %1315 = vmatpush1.bf16.msra.mxu0 %v1291
        %1316 = vmatprep.subr.bf16.mxu0 0
        %1317 = vmatpush1.bf16.msra.mxu0 %v1293
        %1318 = vmatprep.subr.bf16.mxu0 0
        %1319 = vmatpush1.bf16.msra.mxu0 %v1295
        %1320 = vmatprep.subr.bf16.mxu0 0
        %1321 = vmatpush1.bf16.msra.mxu0 0
        %1322 = vmatprep.subr.bf16.mxu0 0
        %1323 = vmatpush1.bf16.msra.mxu0 0
        %1324 = vmatprep.subr.bf16.mxu0 0
        %1325 = vmatpush1.bf16.msra.mxu0 0
        %1326 = vmatprep.subr.bf16.mxu0 0
        %1327 = vmatpush1.bf16.msra.mxu0 0
        %1328 = vmatprep.subr.bf16.mxu0 0
        %1329 = vmatpush1.bf16.msra.mxu0 0
        %1330 = vmatprep.subr.bf16.mxu0 0
        %1331 = vmatpush1.bf16.msra.mxu0 0
        %1332 = vmatprep.subr.bf16.mxu0 0
        %1333 = vmatpush1.bf16.msra.mxu0 0
        %1334 = vmatprep.subr.bf16.mxu0 0
        %1335 = vmatpush1.bf16.msra.mxu0 0
        %1336 = vmatprep.mubr.bf16.mxu0 0
        %1337 = vmatmul.mubr.bf16.gmra.mrb[0].mxu0 %v1272
        %v1338 = vpop.f32.mrb[0].mxu0
        %v1339 = vadd.f32 0.0, %v1338
        %v1340 = vpop.f32.mrb[0].mxu0
        %v1341 = vpop.f32.mrb[0].mxu0
        %v1342 = vadd.f32 0.0, %v1341
        %v1343 = vpop.f32.mrb[0].mxu0
        %1344 = vmatprep.mubr.bf16.mxu0 0
        %1345 = vmatmul.mubr.bf16.gmra.mrb[0].mxu0 %v1273
        %v1346 = vpop.f32.mrb[0].mxu0
        %v1347 = vadd.f32 0.0, %v1346
        %v1348 = vpop.f32.mrb[0].mxu0
        %v1349 = vpop.f32.mrb[0].mxu0
        %v1350 = vadd.f32 0.0, %v1349
        %v1351 = vpop.f32.mrb[0].mxu0
        %1352 = vmatprep.mubr.bf16.mxu0 0
        %1353 = vmatmul.mubr.bf16.gmra.mrb[0].mxu0 %v1274
        %v1354 = vpop.f32.mrb[0].mxu0
        %v1355 = vadd.f32 0.0, %v1354
        %v1356 = vpop.f32.mrb[0].mxu0
        %v1357 = vpop.f32.mrb[0].mxu0
        %v1358 = vadd.f32 0.0, %v1357
        %v1359 = vpop.f32.mrb[0].mxu0
        %1360 = vmatprep.mubr.bf16.mxu0 0
        %1361 = vmatmul.mubr.bf16.gmra.mrb[0].mxu0 %v1275
        %v1362 = vpop.f32.mrb[0].mxu0
        %v1363 = vadd.f32 0.0, %v1362
        %v1364 = vpop.f32.mrb[0].mxu0
        %v1365 = vpop.f32.mrb[0].mxu0
        %v1366 = vadd.f32 0.0, %v1365
        %v1367 = vpop.f32.mrb[0].mxu0
        %1368 = vmatprep.mubr.bf16.mxu0 0
        %1369 = vmatmul.mubr.bf16.gmra.mrb[0].mxu0 %v1276
        %v1370 = vpop.f32.mrb[0].mxu0
        %v1371 = vadd.f32 0.0, %v1370
        %v1372 = vpop.f32.mrb[0].mxu0
        %v1373 = vpop.f32.mrb[0].mxu0
        %v1374 = vadd.f32 0.0, %v1373
        %v1375 = vpop.f32.mrb[0].mxu0
        %1376 = vmatprep.mubr.bf16.mxu0 0
        %1377 = vmatmul.mubr.bf16.gmra.mrb[0].mxu0 %v1277
        %v1378 = vpop.f32.mrb[0].mxu0
        %v1379 = vadd.f32 0.0, %v1378
        %v1380 = vpop.f32.mrb[0].mxu0
        %v1381 = vpop.f32.mrb[0].mxu0
        %v1382 = vadd.f32 0.0, %v1381
        %v1383 = vpop.f32.mrb[0].mxu0
        %1384 = vmatprep.mubr.bf16.mxu0 0
        %1385 = vmatmul.mubr.bf16.gmra.mrb[0].mxu0 %v1278
        %v1386 = vpop.f32.mrb[0].mxu0
        %v1387 = vadd.f32 0.0, %v1386
        %v1388 = vpop.f32.mrb[0].mxu0
        %v1389 = vpop.f32.mrb[0].mxu0
        %v1390 = vadd.f32 0.0, %v1389
        %v1391 = vpop.f32.mrb[0].mxu0
        %1392 = vmatprep.mubr.bf16.mxu0 0
        %1393 = vmatmul.mubr.bf16.gmra.mrb[0].mxu0 %v1279
        %v1394 = vpop.f32.mrb[0].mxu0
        %v1395 = vadd.f32 0.0, %v1394
        %v1396 = vpop.f32.mrb[0].mxu0
        %v1397 = vpop.f32.mrb[0].mxu0
        %v1398 = vadd.f32 0.0, %v1397
        %v1399 = vpop.f32.mrb[0].mxu0
        %1400 = vdwg.mxu0
        %v1401 = vld [vmem:[#allocation2] sm:$0xff]
        %v1402 = vld [vmem:[#allocation2 + $0x8] sm:$0xff]
        %v1403 = vld [vmem:[#allocation2 + $0x10] sm:$0xff]
        %v1404 = vld [vmem:[#allocation2 + $0x18] sm:$0xff]
        %v1405 = vld [vmem:[#allocation2 + $0x20] sm:$0xff]
        %v1406 = vld [vmem:[#allocation2 + $0x28] sm:$0xff]
        %v1407 = vld [vmem:[#allocation2 + $0x30] sm:$0xff]
        %v1408 = vld [vmem:[#allocation2 + $0x38] sm:$0xff]
        %v1409 = vld [vmem:[#allocation2 + $0x40] sm:$0xff]
        %v1410 = vld [vmem:[#allocation2 + $0x48] sm:$0xff]
        %v1411 = vld [vmem:[#allocation2 + $0x50] sm:$0xff]
        %v1412 = vld [vmem:[#allocation2 + $0x58] sm:$0xff]
        %v1413 = vld [vmem:[#allocation2 + $0x60] sm:$0xff]
        %v1414 = vld [vmem:[#allocation2 + $0x68] sm:$0xff]
        %v1415 = vld [vmem:[#allocation2 + $0x70] sm:$0xff]
        %v1416 = vld [vmem:[#allocation2 + $0x78] sm:$0xff]
        %v1417 = vpack.c.bf16 %v1342, %v1339
        %v1418 = vpack.c.bf16 %v1350, %v1347
        %v1419 = vpack.c.bf16 %v1358, %v1355
        %v1420 = vpack.c.bf16 %v1366, %v1363
        %v1421 = vpack.c.bf16 %v1374, %v1371
        %v1422 = vpack.c.bf16 %v1382, %v1379
        %v1423 = vpack.c.bf16 %v1390, %v1387
        %v1424 = vpack.c.bf16 %v1398, %v1395
        %s1425 = smul.addr %s797, 4
        %s1426 = scalar_lea.vmem %s5, %s1425
        %v1427 = vld [vmem:[%s1426] sm:$0xf]
        %v1429 = vsel %vm982, %v1417, 0
        %v1432 = vsel %vm982, %v1418, 0
        %v1435 = vsel %vm982, %v1419, 0
        %v1438 = vsel %vm982, %v1420, 0
        %v1441 = vsel %vm982, %v1421, 0
        %v1444 = vsel %vm982, %v1422, 0
        %v1447 = vsel %vm982, %v1423, 0
        %v1450 = vsel %vm982, %v1424, 0
        %vm1452 = vcmask 1043456
        %v1454 = vsel %vm1452, %v1427, 0
        %1456 = vmatprep.subr.bf16.mxu0 0
        %1457 = vmatpush1.bf16.msra.mxu0 %v1454
        %1458 = vmatprep.subr.bf16.mxu0 0
        %1459 = vmatpush1.bf16.msra.mxu0 0
        %1460 = vmatprep.subr.bf16.mxu0 0
        %1461 = vmatpush1.bf16.msra.mxu0 0
        %1462 = vmatprep.subr.bf16.mxu0 0
        %1463 = vmatpush1.bf16.msra.mxu0 0
        %1464 = vmatprep.subr.bf16.mxu0 0
        %1465 = vmatpush1.bf16.msra.mxu0 0
        %1466 = vmatprep.subr.bf16.mxu0 0
        %1467 = vmatpush1.bf16.msra.mxu0 0
        %1468 = vmatprep.subr.bf16.mxu0 0
        %1469 = vmatpush1.bf16.msra.mxu0 0
        %1470 = vmatprep.subr.bf16.mxu0 0
        %1471 = vmatpush1.bf16.msra.mxu0 0
        %1472 = vmatprep.subr.bf16.mxu0 0
        %1473 = vmatpush1.bf16.msra.mxu0 0
        %1474 = vmatprep.subr.bf16.mxu0 0
        %1475 = vmatpush1.bf16.msra.mxu0 0
        %1476 = vmatprep.subr.bf16.mxu0 0
        %1477 = vmatpush1.bf16.msra.mxu0 0
        %1478 = vmatprep.subr.bf16.mxu0 0
        %1479 = vmatpush1.bf16.msra.mxu0 0
        %1480 = vmatprep.subr.bf16.mxu0 0
        %1481 = vmatpush1.bf16.msra.mxu0 0
        %1482 = vmatprep.subr.bf16.mxu0 0
        %1483 = vmatpush1.bf16.msra.mxu0 0
        %1484 = vmatprep.subr.bf16.mxu0 0
        %1485 = vmatpush1.bf16.msra.mxu0 0
        %1486 = vmatprep.subr.bf16.mxu0 0
        %1487 = vmatpush1.bf16.msra.mxu0 0
        %1488 = vmatprep.mubr.bf16.mxu0 0
        %1489 = vmatmul.mubr.bf16.gmra.mrb[0].mxu0 %v1429
        %v1490 = vpop.f32.mrb[0].mxu0
        %v1491 = vadd.f32 0.0, %v1490
        %v1492 = vpop.f32.mrb[0].mxu0
        %v1493 = vpop.f32.mrb[0].mxu0
        %v1494 = vadd.f32 0.0, %v1493
        %v1495 = vpop.f32.mrb[0].mxu0
        %1496 = vmatprep.mubr.bf16.mxu0 0
        %1497 = vmatmul.mubr.bf16.gmra.mrb[0].mxu0 %v1432
        %v1498 = vpop.f32.mrb[0].mxu0
        %v1499 = vadd.f32 0.0, %v1498
        %v1500 = vpop.f32.mrb[0].mxu0
        %v1501 = vpop.f32.mrb[0].mxu0
        %v1502 = vadd.f32 0.0, %v1501
        %v1503 = vpop.f32.mrb[0].mxu0
        %1504 = vmatprep.mubr.bf16.mxu0 0
        %1505 = vmatmul.mubr.bf16.gmra.mrb[0].mxu0 %v1435
        %v1506 = vpop.f32.mrb[0].mxu0
        %v1507 = vadd.f32 0.0, %v1506
        %v1508 = vpop.f32.mrb[0].mxu0
        %v1509 = vpop.f32.mrb[0].mxu0
        %v1510 = vadd.f32 0.0, %v1509
        %v1511 = vpop.f32.mrb[0].mxu0
        %1512 = vmatprep.mubr.bf16.mxu0 0
        %1513 = vmatmul.mubr.bf16.gmra.mrb[0].mxu0 %v1438
        %v1514 = vpop.f32.mrb[0].mxu0
        %v1515 = vadd.f32 0.0, %v1514
        %v1516 = vpop.f32.mrb[0].mxu0
        %v1517 = vpop.f32.mrb[0].mxu0
        %v1518 = vadd.f32 0.0, %v1517
        %v1519 = vpop.f32.mrb[0].mxu0
        %1520 = vmatprep.mubr.bf16.mxu0 0
        %1521 = vmatmul.mubr.bf16.gmra.mrb[0].mxu0 %v1441
        %v1522 = vpop.f32.mrb[0].mxu0
        %v1523 = vadd.f32 0.0, %v1522
        %v1524 = vpop.f32.mrb[0].mxu0
        %v1525 = vpop.f32.mrb[0].mxu0
        %v1526 = vadd.f32 0.0, %v1525
        %v1527 = vpop.f32.mrb[0].mxu0
        %1528 = vmatprep.mubr.bf16.mxu0 0
        %1529 = vmatmul.mubr.bf16.gmra.mrb[0].mxu0 %v1444
        %v1530 = vpop.f32.mrb[0].mxu0
        %v1531 = vadd.f32 0.0, %v1530
        %v1532 = vpop.f32.mrb[0].mxu0
        %v1533 = vpop.f32.mrb[0].mxu0
        %v1534 = vadd.f32 0.0, %v1533
        %v1535 = vpop.f32.mrb[0].mxu0
        %1536 = vmatprep.mubr.bf16.mxu0 0
        %1537 = vmatmul.mubr.bf16.gmra.mrb[0].mxu0 %v1447
        %v1538 = vpop.f32.mrb[0].mxu0
        %v1539 = vadd.f32 0.0, %v1538
        %v1540 = vpop.f32.mrb[0].mxu0
        %v1541 = vpop.f32.mrb[0].mxu0
        %v1542 = vadd.f32 0.0, %v1541
        %v1543 = vpop.f32.mrb[0].mxu0
        %1544 = vmatprep.mubr.bf16.mxu0 0
        %1545 = vmatmul.mubr.bf16.gmra.mrb[0].mxu0 %v1450
        %v1546 = vpop.f32.mrb[0].mxu0
        %v1547 = vadd.f32 0.0, %v1546
        %v1548 = vpop.f32.mrb[0].mxu0
        %v1549 = vpop.f32.mrb[0].mxu0
        %v1550 = vadd.f32 0.0, %v1549
        %v1551 = vpop.f32.mrb[0].mxu0
        %1552 = vdwg.mxu0
        %v1553 = vadd.f32 %v1401, %v1491
        %v1554 = vadd.f32 %v1402, %v1494
        %v1555 = vadd.f32 %v1403, %v1499
        %v1556 = vadd.f32 %v1404, %v1502
        %v1557 = vadd.f32 %v1405, %v1507
        %v1558 = vadd.f32 %v1406, %v1510
        %v1559 = vadd.f32 %v1407, %v1515
        %v1560 = vadd.f32 %v1408, %v1518
        %v1561 = vadd.f32 %v1409, %v1523
        %v1562 = vadd.f32 %v1410, %v1526
        %v1563 = vadd.f32 %v1411, %v1531
        %v1564 = vadd.f32 %v1412, %v1534
        %v1565 = vadd.f32 %v1413, %v1539
        %v1566 = vadd.f32 %v1414, %v1542
        %v1567 = vadd.f32 %v1415, %v1547
        %v1568 = vadd.f32 %v1416, %v1550
        %1569 = vst.msk [vmem:[#allocation2] sm:$0xff] %vm514, %v1553
        %1570 = vst.msk [vmem:[#allocation2 + $0x8] sm:$0xff] %vm514, %v1554
        %1571 = vst.msk [vmem:[#allocation2 + $0x10] sm:$0xff] %vm514, %v1555
        %1572 = vst.msk [vmem:[#allocation2 + $0x18] sm:$0xff] %vm514, %v1556
        %1573 = vst.msk [vmem:[#allocation2 + $0x20] sm:$0xff] %vm514, %v1557
        %1574 = vst.msk [vmem:[#allocation2 + $0x28] sm:$0xff] %vm514, %v1558
        %1575 = vst.msk [vmem:[#allocation2 + $0x30] sm:$0xff] %vm514, %v1559
        %1576 = vst.msk [vmem:[#allocation2 + $0x38] sm:$0xff] %vm514, %v1560
        %1577 = vst.msk [vmem:[#allocation2 + $0x40] sm:$0xff] %vm514, %v1561
        %1578 = vst.msk [vmem:[#allocation2 + $0x48] sm:$0xff] %vm514, %v1562
        %1579 = vst.msk [vmem:[#allocation2 + $0x50] sm:$0xff] %vm514, %v1563
        %1580 = vst.msk [vmem:[#allocation2 + $0x58] sm:$0xff] %vm514, %v1564
        %1581 = vst.msk [vmem:[#allocation2 + $0x60] sm:$0xff] %vm514, %v1565
        %1582 = vst.msk [vmem:[#allocation2 + $0x68] sm:$0xff] %vm514, %v1566
        %1583 = vst.msk [vmem:[#allocation2 + $0x70] sm:$0xff] %vm514, %v1567
        %1584 = vst.msk [vmem:[#allocation2 + $0x78] sm:$0xff] %vm514, %v1568
      $region85: #{tpu_custom_call.1} parent=79 // loop_footer
        %s801 = sadd.s32 1, %s797
      $region86: #{tpu_custom_call.1} parent=79 // loop_footer_branch
        %796 = sbr.rel target = $region82
      $region87: #{tpu_custom_call.1} parent=79 // loop_exit
        _
      %v1585 = vld [vmem:[#allocation2] sm:$0xff]
      %v1586 = vld [vmem:[#allocation2 + $0x8] sm:$0xff]
      %v1587 = vld [vmem:[#allocation2 + $0x10] sm:$0xff]
      %v1588 = vld [vmem:[#allocation2 + $0x18] sm:$0xff]
      %v1589 = vld [vmem:[#allocation2 + $0x20] sm:$0xff]
      %v1590 = vld [vmem:[#allocation2 + $0x28] sm:$0xff]
      %v1591 = vld [vmem:[#allocation2 + $0x30] sm:$0xff]
      %v1592 = vld [vmem:[#allocation2 + $0x38] sm:$0xff]
      %v1593 = vld [vmem:[#allocation2 + $0x40] sm:$0xff]
      %v1594 = vld [vmem:[#allocation2 + $0x48] sm:$0xff]
      %v1595 = vld [vmem:[#allocation2 + $0x50] sm:$0xff]
      %v1596 = vld [vmem:[#allocation2 + $0x58] sm:$0xff]
      %v1597 = vld [vmem:[#allocation2 + $0x60] sm:$0xff]
      %v1598 = vld [vmem:[#allocation2 + $0x68] sm:$0xff]
      %v1599 = vld [vmem:[#allocation2 + $0x70] sm:$0xff]
      %v1600 = vld [vmem:[#allocation2 + $0x78] sm:$0xff]
      %v1601 = vadd.f32 %v496, %v1585
      %v1602 = vadd.f32 %v497, %v1586
      %v1603 = vadd.f32 %v498, %v1587
      %v1604 = vadd.f32 %v499, %v1588
      %v1605 = vadd.f32 %v500, %v1589
      %v1606 = vadd.f32 %v501, %v1590
      %v1607 = vadd.f32 %v502, %v1591
      %v1608 = vadd.f32 %v503, %v1592
      %v1609 = vadd.f32 %v504, %v1593
      %v1610 = vadd.f32 %v505, %v1594
      %v1611 = vadd.f32 %v506, %v1595
      %v1612 = vadd.f32 %v507, %v1596
      %v1613 = vadd.f32 %v508, %v1597
      %v1614 = vadd.f32 %v509, %v1598
      %v1615 = vadd.f32 %v510, %v1599
      %v1616 = vadd.f32 %v511, %v1600
      %v1617 = vld [vmem:[%s6] sm:$0x1]
      %v1619 = vlaneseq
      %v1620 = vshrl.u32 %v1619, 7
      %v1621 = vsub.s32 0, %v1620
      %v1622 = vrot.slane %v1617, %v1621
      %v1624 = vadd.f32 %v1601, %v1622
      %v1625 = vadd.f32 %v1602, %v1622
      %v1626 = vadd.f32 %v1603, %v1622
      %v1627 = vadd.f32 %v1604, %v1622
      %v1628 = vadd.f32 %v1605, %v1622
      %v1629 = vadd.f32 %v1606, %v1622
      %v1630 = vadd.f32 %v1607, %v1622
      %v1631 = vadd.f32 %v1608, %v1622
      %v1632 = vadd.f32 %v1609, %v1622
      %v1633 = vadd.f32 %v1610, %v1622
      %v1634 = vadd.f32 %v1611, %v1622
      %v1635 = vadd.f32 %v1612, %v1622
      %v1636 = vadd.f32 %v1613, %v1622
      %v1637 = vadd.f32 %v1614, %v1622
      %v1638 = vadd.f32 %v1615, %v1622
      %v1639 = vadd.f32 %v1616, %v1622
      %v1640 = vld [vmem:[%s7] sm:$0x1]
      %v1641 = vld [vmem:[%s8] sm:$0x1]
      %v1642 = vsel %vm514, %v1624, 0.0
      %1643 = vadd.xlane.f32.xlu0 %v1642
      %v1644 = vpop.xlane.xlu0 %1643
      %v1645 = vsel %vm514, %v1625, 0.0
      %1646 = vadd.xlane.f32.xlu0 %v1645
      %v1647 = vpop.xlane.xlu0 %1646
      %v1648 = vsel %vm514, %v1626, 0.0
      %1649 = vadd.xlane.f32.xlu0 %v1648
      %v1650 = vpop.xlane.xlu0 %1649
      %v1651 = vsel %vm514, %v1627, 0.0
      %1652 = vadd.xlane.f32.xlu0 %v1651
      %v1653 = vpop.xlane.xlu0 %1652
      %v1654 = vsel %vm514, %v1628, 0.0
      %1655 = vadd.xlane.f32.xlu0 %v1654
      %v1656 = vpop.xlane.xlu0 %1655
      %v1657 = vsel %vm514, %v1629, 0.0
      %1658 = vadd.xlane.f32.xlu0 %v1657
      %v1659 = vpop.xlane.xlu0 %1658
      %v1660 = vsel %vm514, %v1630, 0.0
      %1661 = vadd.xlane.f32.xlu0 %v1660
      %v1662 = vpop.xlane.xlu0 %1661
      %v1663 = vsel %vm514, %v1631, 0.0
      %1664 = vadd.xlane.f32.xlu0 %v1663
      %v1665 = vpop.xlane.xlu0 %1664
      %v1666 = vsel %vm514, %v1632, 0.0
      %1667 = vadd.xlane.f32.xlu0 %v1666
      %v1668 = vpop.xlane.xlu0 %1667
      %v1669 = vsel %vm514, %v1633, 0.0
      %1670 = vadd.xlane.f32.xlu0 %v1669
      %v1671 = vpop.xlane.xlu0 %1670
      %v1672 = vsel %vm514, %v1634, 0.0
      %1673 = vadd.xlane.f32.xlu0 %v1672
      %v1674 = vpop.xlane.xlu0 %1673
      %v1675 = vsel %vm514, %v1635, 0.0
      %1676 = vadd.xlane.f32.xlu0 %v1675
      %v1677 = vpop.xlane.xlu0 %1676
      %v1678 = vsel %vm514, %v1636, 0.0
      %1679 = vadd.xlane.f32.xlu0 %v1678
      %v1680 = vpop.xlane.xlu0 %1679
      %v1681 = vsel %vm514, %v1637, 0.0
      %1682 = vadd.xlane.f32.xlu0 %v1681
      %v1683 = vpop.xlane.xlu0 %1682
      %v1684 = vsel %vm514, %v1638, 0.0
      %1685 = vadd.xlane.f32.xlu0 %v1684
      %v1686 = vpop.xlane.xlu0 %1685
      %v1687 = vsel %vm514, %v1639, 0.0
      %1688 = vadd.xlane.f32.xlu0 %v1687
      %v1689 = vpop.xlane.xlu0 %1688
      %v1690 = vmul.f32 %v1644, %v563
      %v1691 = vmul.f32 %v1647, %v563
      %v1692 = vmul.f32 %v1650, %v563
      %v1693 = vmul.f32 %v1653, %v563
      %v1694 = vmul.f32 %v1656, %v563
      %v1695 = vmul.f32 %v1659, %v563
      %v1696 = vmul.f32 %v1662, %v563
      %v1697 = vmul.f32 %v1665, %v563
      %v1698 = vmul.f32 %v1668, %v563
      %v1699 = vmul.f32 %v1671, %v563
      %v1700 = vmul.f32 %v1674, %v563
      %v1701 = vmul.f32 %v1677, %v563
      %v1702 = vmul.f32 %v1680, %v563
      %v1703 = vmul.f32 %v1683, %v563
      %v1704 = vmul.f32 %v1686, %v563
      %v1705 = vmul.f32 %v1689, %v563
      %v1706 = vsub.f32 %v1624, %v1690
      %v1707 = vsub.f32 %v1625, %v1691
      %v1708 = vsub.f32 %v1626, %v1692
      %v1709 = vsub.f32 %v1627, %v1693
      %v1710 = vsub.f32 %v1628, %v1694
      %v1711 = vsub.f32 %v1629, %v1695
      %v1712 = vsub.f32 %v1630, %v1696
      %v1713 = vsub.f32 %v1631, %v1697
      %v1714 = vsub.f32 %v1632, %v1698
      %v1715 = vsub.f32 %v1633, %v1699
      %v1716 = vsub.f32 %v1634, %v1700
      %v1717 = vsub.f32 %v1635, %v1701
      %v1718 = vsub.f32 %v1636, %v1702
      %v1719 = vsub.f32 %v1637, %v1703
      %v1720 = vsub.f32 %v1638, %v1704
      %v1721 = vsub.f32 %v1639, %v1705
      %v1722 = vmul.f32 %v1706, %v1706
      %v1723 = vmul.f32 %v1707, %v1707
      %v1724 = vmul.f32 %v1708, %v1708
      %v1725 = vmul.f32 %v1709, %v1709
      %v1726 = vmul.f32 %v1710, %v1710
      %v1727 = vmul.f32 %v1711, %v1711
      %v1728 = vmul.f32 %v1712, %v1712
      %v1729 = vmul.f32 %v1713, %v1713
      %v1730 = vmul.f32 %v1714, %v1714
      %v1731 = vmul.f32 %v1715, %v1715
      %v1732 = vmul.f32 %v1716, %v1716
      %v1733 = vmul.f32 %v1717, %v1717
      %v1734 = vmul.f32 %v1718, %v1718
      %v1735 = vmul.f32 %v1719, %v1719
      %v1736 = vmul.f32 %v1720, %v1720
      %v1737 = vmul.f32 %v1721, %v1721
      %v1738 = vsel %vm514, %v1722, 0.0
      %1739 = vadd.xlane.f32.xlu0 %v1738
      %v1740 = vpop.xlane.xlu0 %1739
      %v1741 = vsel %vm514, %v1723, 0.0
      %1742 = vadd.xlane.f32.xlu0 %v1741
      %v1743 = vpop.xlane.xlu0 %1742
      %v1744 = vsel %vm514, %v1724, 0.0
      %1745 = vadd.xlane.f32.xlu0 %v1744
      %v1746 = vpop.xlane.xlu0 %1745
      %v1747 = vsel %vm514, %v1725, 0.0
      %1748 = vadd.xlane.f32.xlu0 %v1747
      %v1749 = vpop.xlane.xlu0 %1748
      %v1750 = vsel %vm514, %v1726, 0.0
      %1751 = vadd.xlane.f32.xlu0 %v1750
      %v1752 = vpop.xlane.xlu0 %1751
      %v1753 = vsel %vm514, %v1727, 0.0
      %1754 = vadd.xlane.f32.xlu0 %v1753
      %v1755 = vpop.xlane.xlu0 %1754
      %v1756 = vsel %vm514, %v1728, 0.0
      %1757 = vadd.xlane.f32.xlu0 %v1756
      %v1758 = vpop.xlane.xlu0 %1757
      %v1759 = vsel %vm514, %v1729, 0.0
      %1760 = vadd.xlane.f32.xlu0 %v1759
      %v1761 = vpop.xlane.xlu0 %1760
      %v1762 = vsel %vm514, %v1730, 0.0
      %1763 = vadd.xlane.f32.xlu0 %v1762
      %v1764 = vpop.xlane.xlu0 %1763
      %v1765 = vsel %vm514, %v1731, 0.0
      %1766 = vadd.xlane.f32.xlu0 %v1765
      %v1767 = vpop.xlane.xlu0 %1766
      %v1768 = vsel %vm514, %v1732, 0.0
      %1769 = vadd.xlane.f32.xlu0 %v1768
      %v1770 = vpop.xlane.xlu0 %1769
      %v1771 = vsel %vm514, %v1733, 0.0
      %1772 = vadd.xlane.f32.xlu0 %v1771
      %v1773 = vpop.xlane.xlu0 %1772
      %v1774 = vsel %vm514, %v1734, 0.0
      %1775 = vadd.xlane.f32.xlu0 %v1774
      %v1776 = vpop.xlane.xlu0 %1775
      %v1777 = vsel %vm514, %v1735, 0.0
      %1778 = vadd.xlane.f32.xlu0 %v1777
      %v1779 = vpop.xlane.xlu0 %1778
      %v1780 = vsel %vm514, %v1736, 0.0
      %1781 = vadd.xlane.f32.xlu0 %v1780
      %v1782 = vpop.xlane.xlu0 %1781
      %v1783 = vsel %vm514, %v1737, 0.0
      %1784 = vadd.xlane.f32.xlu0 %v1783
      %v1785 = vpop.xlane.xlu0 %1784
      %v1786 = vmul.f32 %v1740, %v563
      %v1787 = vmul.f32 %v1743, %v563
      %v1788 = vmul.f32 %v1746, %v563
      %v1789 = vmul.f32 %v1749, %v563
      %v1790 = vmul.f32 %v1752, %v563
      %v1791 = vmul.f32 %v1755, %v563
      %v1792 = vmul.f32 %v1758, %v563
      %v1793 = vmul.f32 %v1761, %v563
      %v1794 = vmul.f32 %v1764, %v563
      %v1795 = vmul.f32 %v1767, %v563
      %v1796 = vmul.f32 %v1770, %v563
      %v1797 = vmul.f32 %v1773, %v563
      %v1798 = vmul.f32 %v1776, %v563
      %v1799 = vmul.f32 %v1779, %v563
      %v1800 = vmul.f32 %v1782, %v563
      %v1801 = vmul.f32 %v1785, %v563
      %v1802 = vadd.f32 %v1786, 1e-06
      %v1803 = vadd.f32 %v1787, 1e-06
      %v1804 = vadd.f32 %v1788, 1e-06
      %v1805 = vadd.f32 %v1789, 1e-06
      %v1806 = vadd.f32 %v1790, 1e-06
      %v1807 = vadd.f32 %v1791, 1e-06
      %v1808 = vadd.f32 %v1792, 1e-06
      %v1809 = vadd.f32 %v1793, 1e-06
      %v1810 = vadd.f32 %v1794, 1e-06
      %v1811 = vadd.f32 %v1795, 1e-06
      %v1812 = vadd.f32 %v1796, 1e-06
      %v1813 = vadd.f32 %v1797, 1e-06
      %v1814 = vadd.f32 %v1798, 1e-06
      %v1815 = vadd.f32 %v1799, 1e-06
      %v1816 = vadd.f32 %v1800, 1e-06
      %v1817 = vadd.f32 %v1801, 1e-06
      %v1818 = vrsqrt.pop %v1802
      %v1819 = vrsqrt.pop %v1803
      %v1820 = vrsqrt.pop %v1804
      %v1821 = vrsqrt.pop %v1805
      %v1822 = vrsqrt.pop %v1806
      %v1823 = vrsqrt.pop %v1807
      %v1824 = vrsqrt.pop %v1808
      %v1825 = vrsqrt.pop %v1809
      %v1826 = vrsqrt.pop %v1810
      %v1827 = vrsqrt.pop %v1811
      %v1828 = vrsqrt.pop %v1812
      %v1829 = vrsqrt.pop %v1813
      %v1830 = vrsqrt.pop %v1814
      %v1831 = vrsqrt.pop %v1815
      %v1832 = vrsqrt.pop %v1816
      %v1833 = vrsqrt.pop %v1817
      %v1834 = vmul.f32 %v1706, %v1818
      %v1835 = vmul.f32 %v1707, %v1819
      %v1836 = vmul.f32 %v1708, %v1820
      %v1837 = vmul.f32 %v1709, %v1821
      %v1838 = vmul.f32 %v1710, %v1822
      %v1839 = vmul.f32 %v1711, %v1823
      %v1840 = vmul.f32 %v1712, %v1824
      %v1841 = vmul.f32 %v1713, %v1825
      %v1842 = vmul.f32 %v1714, %v1826
      %v1843 = vmul.f32 %v1715, %v1827
      %v1844 = vmul.f32 %v1716, %v1828
      %v1845 = vmul.f32 %v1717, %v1829
      %v1846 = vmul.f32 %v1718, %v1830
      %v1847 = vmul.f32 %v1719, %v1831
      %v1848 = vmul.f32 %v1720, %v1832
      %v1849 = vmul.f32 %v1721, %v1833
      %v1851 = vlaneseq
      %v1852 = vshrl.u32 %v1851, 7
      %v1853 = vsub.s32 0, %v1852
      %v1854 = vrot.slane %v1640, %v1853
      %v1856 = vmul.f32 %v1834, %v1854
      %v1857 = vmul.f32 %v1835, %v1854
      %v1858 = vmul.f32 %v1836, %v1854
      %v1859 = vmul.f32 %v1837, %v1854
      %v1860 = vmul.f32 %v1838, %v1854
      %v1861 = vmul.f32 %v1839, %v1854
      %v1862 = vmul.f32 %v1840, %v1854
      %v1863 = vmul.f32 %v1841, %v1854
      %v1864 = vmul.f32 %v1842, %v1854
      %v1865 = vmul.f32 %v1843, %v1854
      %v1866 = vmul.f32 %v1844, %v1854
      %v1867 = vmul.f32 %v1845, %v1854
      %v1868 = vmul.f32 %v1846, %v1854
      %v1869 = vmul.f32 %v1847, %v1854
      %v1870 = vmul.f32 %v1848, %v1854
      %v1871 = vmul.f32 %v1849, %v1854
      %v1873 = vlaneseq
      %v1874 = vshrl.u32 %v1873, 7
      %v1875 = vsub.s32 0, %v1874
      %v1876 = vrot.slane %v1641, %v1875
      %v1878 = vadd.f32 %v1856, %v1876
      %v1879 = vadd.f32 %v1857, %v1876
      %v1880 = vadd.f32 %v1858, %v1876
      %v1881 = vadd.f32 %v1859, %v1876
      %v1882 = vadd.f32 %v1860, %v1876
      %v1883 = vadd.f32 %v1861, %v1876
      %v1884 = vadd.f32 %v1862, %v1876
      %v1885 = vadd.f32 %v1863, %v1876
      %v1886 = vadd.f32 %v1864, %v1876
      %v1887 = vadd.f32 %v1865, %v1876
      %v1888 = vadd.f32 %v1866, %v1876
      %v1889 = vadd.f32 %v1867, %v1876
      %v1890 = vadd.f32 %v1868, %v1876
      %v1891 = vadd.f32 %v1869, %v1876
      %v1892 = vadd.f32 %v1870, %v1876
      %v1893 = vadd.f32 %v1871, %v1876
      %v1894 = vpack.c.bf16 %v1879, %v1878
      %v1895 = vpack.c.bf16 %v1881, %v1880
      %v1896 = vpack.c.bf16 %v1883, %v1882
      %v1897 = vpack.c.bf16 %v1885, %v1884
      %v1898 = vpack.c.bf16 %v1887, %v1886
      %v1899 = vpack.c.bf16 %v1889, %v1888
      %v1900 = vpack.c.bf16 %v1891, %v1890
      %v1901 = vpack.c.bf16 %v1893, %v1892
      %v1902 = vld [vmem:[%s9] sm:$0xf]
      %v1903 = vld [vmem:[%s9 + $0x4] sm:$0xf]
      %v1904 = vld [vmem:[%s9 + $0x8] sm:$0xf]
      %v1905 = vld [vmem:[%s9 + $0xc] sm:$0xf]
      %v1906 = vld [vmem:[%s10] sm:$0x1]
      %v1908 = vlaneseq
      %v1909 = vshrl.u32 %v1908, 7
      %v1910 = vsub.s32 0, %v1909
      %v1911 = vrot.slane %v1906, %v1910
      %v1917 = vunpack.c.l.b16 %v1902
      %v1918 = vunpack.c.l.b16 %v1903
      %v1919 = vunpack.c.l.b16 %v1904
      %v1920 = vunpack.c.l.b16 %v1905
      %v1921 = vpack.c.b16 %v1918, %v1917
      %v1922 = vpack.c.b16 %v1920, %v1919
      %v1926 = vsel %vm514, %v1894, 0
      %v1929 = vsel %vm514, %v1895, 0
      %v1932 = vsel %vm514, %v1896, 0
      %v1935 = vsel %vm514, %v1897, 0
      %v1938 = vsel %vm514, %v1898, 0
      %v1941 = vsel %vm514, %v1899, 0
      %v1944 = vsel %vm514, %v1900, 0
      %v1947 = vsel %vm514, %v1901, 0
      %1949 = vmatprep.subr.bf16.mxu0 0
      %1950 = vmatpush1.bf16.msra.mxu0 %v1921
      %1951 = vmatprep.subr.bf16.mxu0 0
      %1952 = vmatpush1.bf16.msra.mxu0 %v1922
      %1953 = vmatprep.subr.bf16.mxu0 0
      %1954 = vmatpush1.bf16.msra.mxu0 0
      %1955 = vmatprep.subr.bf16.mxu0 0
      %1956 = vmatpush1.bf16.msra.mxu0 0
      %1957 = vmatprep.subr.bf16.mxu0 0
      %1958 = vmatpush1.bf16.msra.mxu0 0
      %1959 = vmatprep.subr.bf16.mxu0 0
      %1960 = vmatpush1.bf16.msra.mxu0 0
      %1961 = vmatprep.subr.bf16.mxu0 0
      %1962 = vmatpush1.bf16.msra.mxu0 0
      %1963 = vmatprep.subr.bf16.mxu0 0
      %1964 = vmatpush1.bf16.msra.mxu0 0
      %1965 = vmatprep.subr.bf16.mxu0 0
      %1966 = vmatpush1.bf16.msra.mxu0 0
      %1967 = vmatprep.subr.bf16.mxu0 0
      %1968 = vmatpush1.bf16.msra.mxu0 0
      %1969 = vmatprep.subr.bf16.mxu0 0
      %1970 = vmatpush1.bf16.msra.mxu0 0
      %1971 = vmatprep.subr.bf16.mxu0 0
      %1972 = vmatpush1.bf16.msra.mxu0 0
      %1973 = vmatprep.subr.bf16.mxu0 0
      %1974 = vmatpush1.bf16.msra.mxu0 0
      %1975 = vmatprep.subr.bf16.mxu0 0
      %1976 = vmatpush1.bf16.msra.mxu0 0
      %1977 = vmatprep.subr.bf16.mxu0 0
      %1978 = vmatpush1.bf16.msra.mxu0 0
      %1979 = vmatprep.subr.bf16.mxu0 0
      %1980 = vmatpush1.bf16.msra.mxu0 0
      %1981 = vmatprep.mubr.bf16.mxu0 0
      %1982 = vmatmul.mubr.bf16.gmra.mrb[0].mxu0 %v1926
      %v1983 = vpop.f32.mrb[0].mxu0
      %v1984 = vadd.f32 %v1911, %v1983
      %v1985 = vpop.f32.mrb[0].mxu0
      %v1986 = vpop.f32.mrb[0].mxu0
      %v1987 = vadd.f32 %v1911, %v1986
      %v1988 = vpop.f32.mrb[0].mxu0
      %1989 = vmatprep.mubr.bf16.mxu0 0
      %1990 = vmatmul.mubr.bf16.gmra.mrb[0].mxu0 %v1929
      %v1991 = vpop.f32.mrb[0].mxu0
      %v1992 = vadd.f32 %v1911, %v1991
      %v1993 = vpop.f32.mrb[0].mxu0
      %v1994 = vpop.f32.mrb[0].mxu0
      %v1995 = vadd.f32 %v1911, %v1994
      %v1996 = vpop.f32.mrb[0].mxu0
      %1997 = vmatprep.mubr.bf16.mxu0 0
      %1998 = vmatmul.mubr.bf16.gmra.mrb[0].mxu0 %v1932
      %v1999 = vpop.f32.mrb[0].mxu0
      %v2000 = vadd.f32 %v1911, %v1999
      %v2001 = vpop.f32.mrb[0].mxu0
      %v2002 = vpop.f32.mrb[0].mxu0
      %v2003 = vadd.f32 %v1911, %v2002
      %v2004 = vpop.f32.mrb[0].mxu0
      %2005 = vmatprep.mubr.bf16.mxu0 0
      %2006 = vmatmul.mubr.bf16.gmra.mrb[0].mxu0 %v1935
      %v2007 = vpop.f32.mrb[0].mxu0
      %v2008 = vadd.f32 %v1911, %v2007
      %v2009 = vpop.f32.mrb[0].mxu0
      %v2010 = vpop.f32.mrb[0].mxu0
      %v2011 = vadd.f32 %v1911, %v2010
      %v2012 = vpop.f32.mrb[0].mxu0
      %2013 = vmatprep.mubr.bf16.mxu0 0
      %2014 = vmatmul.mubr.bf16.gmra.mrb[0].mxu0 %v1938
      %v2015 = vpop.f32.mrb[0].mxu0
      %v2016 = vadd.f32 %v1911, %v2015
      %v2017 = vpop.f32.mrb[0].mxu0
      %v2018 = vpop.f32.mrb[0].mxu0
      %v2019 = vadd.f32 %v1911, %v2018
      %v2020 = vpop.f32.mrb[0].mxu0
      %2021 = vmatprep.mubr.bf16.mxu0 0
      %2022 = vmatmul.mubr.bf16.gmra.mrb[0].mxu0 %v1941
      %v2023 = vpop.f32.mrb[0].mxu0
      %v2024 = vadd.f32 %v1911, %v2023
      %v2025 = vpop.f32.mrb[0].mxu0
      %v2026 = vpop.f32.mrb[0].mxu0
      %v2027 = vadd.f32 %v1911, %v2026
      %v2028 = vpop.f32.mrb[0].mxu0
      %2029 = vmatprep.mubr.bf16.mxu0 0
      %2030 = vmatmul.mubr.bf16.gmra.mrb[0].mxu0 %v1944
      %v2031 = vpop.f32.mrb[0].mxu0
      %v2032 = vadd.f32 %v1911, %v2031
      %v2033 = vpop.f32.mrb[0].mxu0
      %v2034 = vpop.f32.mrb[0].mxu0
      %v2035 = vadd.f32 %v1911, %v2034
      %v2036 = vpop.f32.mrb[0].mxu0
      %2037 = vmatprep.mubr.bf16.mxu0 0
      %2038 = vmatmul.mubr.bf16.gmra.mrb[0].mxu0 %v1947
      %v2039 = vpop.f32.mrb[0].mxu0
      %v2040 = vadd.f32 %v1911, %v2039
      %v2041 = vpop.f32.mrb[0].mxu0
      %v2042 = vpop.f32.mrb[0].mxu0
      %v2043 = vadd.f32 %v1911, %v2042
      %v2044 = vpop.f32.mrb[0].mxu0
      %2045 = vdwg.mxu0
      %v2046 = vmul.f32 %v1984, %v1984
      %v2047 = vmul.f32 %v1987, %v1987
      %v2048 = vmul.f32 %v1992, %v1992
      %v2049 = vmul.f32 %v1995, %v1995
      %v2050 = vmul.f32 %v2000, %v2000
      %v2051 = vmul.f32 %v2003, %v2003
      %v2052 = vmul.f32 %v2008, %v2008
      %v2053 = vmul.f32 %v2011, %v2011
      %v2054 = vmul.f32 %v2016, %v2016
      %v2055 = vmul.f32 %v2019, %v2019
      %v2056 = vmul.f32 %v2024, %v2024
      %v2057 = vmul.f32 %v2027, %v2027
      %v2058 = vmul.f32 %v2032, %v2032
      %v2059 = vmul.f32 %v2035, %v2035
      %v2060 = vmul.f32 %v2040, %v2040
      %v2061 = vmul.f32 %v2043, %v2043
      %v2062 = vmul.f32 %v1984, %v2046
      %v2063 = vmul.f32 %v1987, %v2047
      %v2064 = vmul.f32 %v1992, %v2048
      %v2065 = vmul.f32 %v1995, %v2049
      %v2066 = vmul.f32 %v2000, %v2050
      %v2067 = vmul.f32 %v2003, %v2051
      %v2068 = vmul.f32 %v2008, %v2052
      %v2069 = vmul.f32 %v2011, %v2053
      %v2070 = vmul.f32 %v2016, %v2054
      %v2071 = vmul.f32 %v2019, %v2055
      %v2072 = vmul.f32 %v2024, %v2056
      %v2073 = vmul.f32 %v2027, %v2057
      %v2074 = vmul.f32 %v2032, %v2058
      %v2075 = vmul.f32 %v2035, %v2059
      %v2076 = vmul.f32 %v2040, %v2060
      %v2077 = vmul.f32 %v2043, %v2061
      %v2078 = vmul.f32 %v2062, 0.044715
      %v2079 = vmul.f32 %v2063, 0.044715
      %v2080 = vmul.f32 %v2064, 0.044715
      %v2081 = vmul.f32 %v2065, 0.044715
      %v2082 = vmul.f32 %v2066, 0.044715
      %v2083 = vmul.f32 %v2067, 0.044715
      %v2084 = vmul.f32 %v2068, 0.044715
      %v2085 = vmul.f32 %v2069, 0.044715
      %v2086 = vmul.f32 %v2070, 0.044715
      %v2087 = vmul.f32 %v2071, 0.044715
      %v2088 = vmul.f32 %v2072, 0.044715
      %v2089 = vmul.f32 %v2073, 0.044715
      %v2090 = vmul.f32 %v2074, 0.044715
      %v2091 = vmul.f32 %v2075, 0.044715
      %v2092 = vmul.f32 %v2076, 0.044715
      %v2093 = vmul.f32 %v2077, 0.044715
      %v2094 = vadd.f32 %v1984, %v2078
      %v2095 = vadd.f32 %v1987, %v2079
      %v2096 = vadd.f32 %v1992, %v2080
      %v2097 = vadd.f32 %v1995, %v2081
      %v2098 = vadd.f32 %v2000, %v2082
      %v2099 = vadd.f32 %v2003, %v2083
      %v2100 = vadd.f32 %v2008, %v2084
      %v2101 = vadd.f32 %v2011, %v2085
      %v2102 = vadd.f32 %v2016, %v2086
      %v2103 = vadd.f32 %v2019, %v2087
      %v2104 = vadd.f32 %v2024, %v2088
      %v2105 = vadd.f32 %v2027, %v2089
      %v2106 = vadd.f32 %v2032, %v2090
      %v2107 = vadd.f32 %v2035, %v2091
      %v2108 = vadd.f32 %v2040, %v2092
      %v2109 = vadd.f32 %v2043, %v2093
      %v2110 = vmul.f32 %v2094, 0.7978846
      %v2111 = vmul.f32 %v2095, 0.7978846
      %v2112 = vmul.f32 %v2096, 0.7978846
      %v2113 = vmul.f32 %v2097, 0.7978846
      %v2114 = vmul.f32 %v2098, 0.7978846
      %v2115 = vmul.f32 %v2099, 0.7978846
      %v2116 = vmul.f32 %v2100, 0.7978846
      %v2117 = vmul.f32 %v2101, 0.7978846
      %v2118 = vmul.f32 %v2102, 0.7978846
      %v2119 = vmul.f32 %v2103, 0.7978846
      %v2120 = vmul.f32 %v2104, 0.7978846
      %v2121 = vmul.f32 %v2105, 0.7978846
      %v2122 = vmul.f32 %v2106, 0.7978846
      %v2123 = vmul.f32 %v2107, 0.7978846
      %v2124 = vmul.f32 %v2108, 0.7978846
      %v2125 = vmul.f32 %v2109, 0.7978846
      %v2126 = vtanh.pop %v2110
      %v2127 = vtanh.pop %v2111
      %v2128 = vtanh.pop %v2112
      %v2129 = vtanh.pop %v2113
      %v2130 = vtanh.pop %v2114
      %v2131 = vtanh.pop %v2115
      %v2132 = vtanh.pop %v2116
      %v2133 = vtanh.pop %v2117
      %v2134 = vtanh.pop %v2118
      %v2135 = vtanh.pop %v2119
      %v2136 = vtanh.pop %v2120
      %v2137 = vtanh.pop %v2121
      %v2138 = vtanh.pop %v2122
      %v2139 = vtanh.pop %v2123
      %v2140 = vtanh.pop %v2124
      %v2141 = vtanh.pop %v2125
      %v2142 = vadd.f32 %v2126, 1.0
      %v2143 = vadd.f32 %v2127, 1.0
      %v2144 = vadd.f32 %v2128, 1.0
      %v2145 = vadd.f32 %v2129, 1.0
      %v2146 = vadd.f32 %v2130, 1.0
      %v2147 = vadd.f32 %v2131, 1.0
      %v2148 = vadd.f32 %v2132, 1.0
      %v2149 = vadd.f32 %v2133, 1.0
      %v2150 = vadd.f32 %v2134, 1.0
      %v2151 = vadd.f32 %v2135, 1.0
      %v2152 = vadd.f32 %v2136, 1.0
      %v2153 = vadd.f32 %v2137, 1.0
      %v2154 = vadd.f32 %v2138, 1.0
      %v2155 = vadd.f32 %v2139, 1.0
      %v2156 = vadd.f32 %v2140, 1.0
      %v2157 = vadd.f32 %v2141, 1.0
      %v2158 = vmul.f32 %v2142, 0.5
      %v2159 = vmul.f32 %v2143, 0.5
      %v2160 = vmul.f32 %v2144, 0.5
      %v2161 = vmul.f32 %v2145, 0.5
      %v2162 = vmul.f32 %v2146, 0.5
      %v2163 = vmul.f32 %v2147, 0.5
      %v2164 = vmul.f32 %v2148, 0.5
      %v2165 = vmul.f32 %v2149, 0.5
      %v2166 = vmul.f32 %v2150, 0.5
      %v2167 = vmul.f32 %v2151, 0.5
      %v2168 = vmul.f32 %v2152, 0.5
      %v2169 = vmul.f32 %v2153, 0.5
      %v2170 = vmul.f32 %v2154, 0.5
      %v2171 = vmul.f32 %v2155, 0.5
      %v2172 = vmul.f32 %v2156, 0.5
      %v2173 = vmul.f32 %v2157, 0.5
      %v2174 = vmul.f32 %v1984, %v2158
      %v2175 = vmul.f32 %v1987, %v2159
      %v2176 = vmul.f32 %v1992, %v2160
      %v2177 = vmul.f32 %v1995, %v2161
      %v2178 = vmul.f32 %v2000, %v2162
      %v2179 = vmul.f32 %v2003, %v2163
      %v2180 = vmul.f32 %v2008, %v2164
      %v2181 = vmul.f32 %v2011, %v2165
      %v2182 = vmul.f32 %v2016, %v2166
      %v2183 = vmul.f32 %v2019, %v2167
      %v2184 = vmul.f32 %v2024, %v2168
      %v2185 = vmul.f32 %v2027, %v2169
      %v2186 = vmul.f32 %v2032, %v2170
      %v2187 = vmul.f32 %v2035, %v2171
      %v2188 = vmul.f32 %v2040, %v2172
      %v2189 = vmul.f32 %v2043, %v2173
      %v2190 = vpack.c.bf16 %v2175, %v2174
      %v2191 = vpack.c.bf16 %v2177, %v2176
      %v2192 = vpack.c.bf16 %v2179, %v2178
      %v2193 = vpack.c.bf16 %v2181, %v2180
      %v2194 = vpack.c.bf16 %v2183, %v2182
      %v2195 = vpack.c.bf16 %v2185, %v2184
      %v2196 = vpack.c.bf16 %v2187, %v2186
      %v2197 = vpack.c.bf16 %v2189, %v2188
      %v2198 = vld [vmem:[%s11] sm:$0xf]
      %v2199 = vld [vmem:[%s11 + $0x4] sm:$0xf]
      %v2200 = vld [vmem:[%s11 + $0x8] sm:$0xf]
      %v2201 = vld [vmem:[%s11 + $0xc] sm:$0xf]
      %v2202 = vld [vmem:[%s11 + $0x10] sm:$0xf]
      %v2203 = vld [vmem:[%s11 + $0x14] sm:$0xf]
      %v2204 = vld [vmem:[%s11 + $0x18] sm:$0xf]
      %v2205 = vld [vmem:[%s11 + $0x1c] sm:$0xf]
      %v2206 = vld [vmem:[%s11 + $0x20] sm:$0xf]
      %v2207 = vld [vmem:[%s11 + $0x24] sm:$0xf]
      %v2208 = vld [vmem:[%s11 + $0x28] sm:$0xf]
      %v2209 = vld [vmem:[%s11 + $0x2c] sm:$0xf]
      %v2210 = vld [vmem:[%s11 + $0x30] sm:$0xf]
      %v2211 = vld [vmem:[%s11 + $0x34] sm:$0xf]
      %v2212 = vld [vmem:[%s11 + $0x38] sm:$0xf]
      %v2213 = vld [vmem:[%s11 + $0x3c] sm:$0xf]
      %v2230 = vunpack.c.l.b16 %v2198
      %v2231 = vunpack.c.l.b16 %v2199
      %v2232 = vunpack.c.l.b16 %v2200
      %v2233 = vunpack.c.l.b16 %v2201
      %v2234 = vunpack.c.l.b16 %v2202
      %v2235 = vunpack.c.l.b16 %v2203
      %v2236 = vunpack.c.l.b16 %v2204
      %v2237 = vunpack.c.l.b16 %v2205
      %v2238 = vunpack.c.l.b16 %v2206
      %v2239 = vunpack.c.l.b16 %v2207
      %v2240 = vunpack.c.l.b16 %v2208
      %v2241 = vunpack.c.l.b16 %v2209
      %v2242 = vunpack.c.l.b16 %v2210
      %v2243 = vunpack.c.l.b16 %v2211
      %v2244 = vunpack.c.l.b16 %v2212
      %v2245 = vunpack.c.l.b16 %v2213
      %v2246 = vpack.c.b16 %v2231, %v2230
      %v2247 = vpack.c.b16 %v2233, %v2232
      %v2248 = vpack.c.b16 %v2235, %v2234
      %v2249 = vpack.c.b16 %v2237, %v2236
      %v2250 = vpack.c.b16 %v2239, %v2238
      %v2251 = vpack.c.b16 %v2241, %v2240
      %v2252 = vpack.c.b16 %v2243, %v2242
      %v2253 = vpack.c.b16 %v2245, %v2244
      %2262 = vmatprep.subr.bf16.mxu0 0
      %2263 = vmatpush1.bf16.msra.mxu0 %v2246
      %2264 = vmatprep.subr.bf16.mxu0 0
      %2265 = vmatpush1.bf16.msra.mxu0 %v2247
      %2266 = vmatprep.subr.bf16.mxu0 0
      %2267 = vmatpush1.bf16.msra.mxu0 %v2248
      %2268 = vmatprep.subr.bf16.mxu0 0
      %2269 = vmatpush1.bf16.msra.mxu0 %v2249
      %2270 = vmatprep.subr.bf16.mxu0 0
      %2271 = vmatpush1.bf16.msra.mxu0 %v2250
      %2272 = vmatprep.subr.bf16.mxu0 0
      %2273 = vmatpush1.bf16.msra.mxu0 %v2251
      %2274 = vmatprep.subr.bf16.mxu0 0
      %2275 = vmatpush1.bf16.msra.mxu0 %v2252
      %2276 = vmatprep.subr.bf16.mxu0 0
      %2277 = vmatpush1.bf16.msra.mxu0 %v2253
      %2278 = vmatprep.subr.bf16.mxu0 0
      %2279 = vmatpush1.bf16.msra.mxu0 0
      %2280 = vmatprep.subr.bf16.mxu0 0
      %2281 = vmatpush1.bf16.msra.mxu0 0
      %2282 = vmatprep.subr.bf16.mxu0 0
      %2283 = vmatpush1.bf16.msra.mxu0 0
      %2284 = vmatprep.subr.bf16.mxu0 0
      %2285 = vmatpush1.bf16.msra.mxu0 0
      %2286 = vmatprep.subr.bf16.mxu0 0
      %2287 = vmatpush1.bf16.msra.mxu0 0
      %2288 = vmatprep.subr.bf16.mxu0 0
      %2289 = vmatpush1.bf16.msra.mxu0 0
      %2290 = vmatprep.subr.bf16.mxu0 0
      %2291 = vmatpush1.bf16.msra.mxu0 0
      %2292 = vmatprep.subr.bf16.mxu0 0
      %2293 = vmatpush1.bf16.msra.mxu0 0
      %2294 = vmatprep.mubr.bf16.mxu0 0
      %2295 = vmatmul.mubr.bf16.gmra.mrb[0].mxu0 %v2190
      %v2296 = vpop.f32.mrb[0].mxu0
      %v2297 = vadd.f32 0.0, %v2296
      %v2298 = vpop.f32.mrb[0].mxu0
      %v2299 = vpop.f32.mrb[0].mxu0
      %v2300 = vadd.f32 0.0, %v2299
      %v2301 = vpop.f32.mrb[0].mxu0
      %2302 = vmatprep.mubr.bf16.mxu0 0
      %2303 = vmatmul.mubr.bf16.gmra.mrb[0].mxu0 %v2191
      %v2304 = vpop.f32.mrb[0].mxu0
      %v2305 = vadd.f32 0.0, %v2304
      %v2306 = vpop.f32.mrb[0].mxu0
      %v2307 = vpop.f32.mrb[0].mxu0
      %v2308 = vadd.f32 0.0, %v2307
      %v2309 = vpop.f32.mrb[0].mxu0
      %2310 = vmatprep.mubr.bf16.mxu0 0
      %2311 = vmatmul.mubr.bf16.gmra.mrb[0].mxu0 %v2192
      %v2312 = vpop.f32.mrb[0].mxu0
      %v2313 = vadd.f32 0.0, %v2312
      %v2314 = vpop.f32.mrb[0].mxu0
      %v2315 = vpop.f32.mrb[0].mxu0
      %v2316 = vadd.f32 0.0, %v2315
      %v2317 = vpop.f32.mrb[0].mxu0
      %2318 = vmatprep.mubr.bf16.mxu0 0
      %2319 = vmatmul.mubr.bf16.gmra.mrb[0].mxu0 %v2193
      %v2320 = vpop.f32.mrb[0].mxu0
      %v2321 = vadd.f32 0.0, %v2320
      %v2322 = vpop.f32.mrb[0].mxu0
      %v2323 = vpop.f32.mrb[0].mxu0
      %v2324 = vadd.f32 0.0, %v2323
      %v2325 = vpop.f32.mrb[0].mxu0
      %2326 = vmatprep.mubr.bf16.mxu0 0
      %2327 = vmatmul.mubr.bf16.gmra.mrb[0].mxu0 %v2194
      %v2328 = vpop.f32.mrb[0].mxu0
      %v2329 = vadd.f32 0.0, %v2328
      %v2330 = vpop.f32.mrb[0].mxu0
      %v2331 = vpop.f32.mrb[0].mxu0
      %v2332 = vadd.f32 0.0, %v2331
      %v2333 = vpop.f32.mrb[0].mxu0
      %2334 = vmatprep.mubr.bf16.mxu0 0
      %2335 = vmatmul.mubr.bf16.gmra.mrb[0].mxu0 %v2195
      %v2336 = vpop.f32.mrb[0].mxu0
      %v2337 = vadd.f32 0.0, %v2336
      %v2338 = vpop.f32.mrb[0].mxu0
      %v2339 = vpop.f32.mrb[0].mxu0
      %v2340 = vadd.f32 0.0, %v2339
      %v2341 = vpop.f32.mrb[0].mxu0
      %2342 = vmatprep.mubr.bf16.mxu0 0
      %2343 = vmatmul.mubr.bf16.gmra.mrb[0].mxu0 %v2196
      %v2344 = vpop.f32.mrb[0].mxu0
      %v2345 = vadd.f32 0.0, %v2344
      %v2346 = vpop.f32.mrb[0].mxu0
      %v2347 = vpop.f32.mrb[0].mxu0
      %v2348 = vadd.f32 0.0, %v2347
      %v2349 = vpop.f32.mrb[0].mxu0
      %2350 = vmatprep.mubr.bf16.mxu0 0
      %2351 = vmatmul.mubr.bf16.gmra.mrb[0].mxu0 %v2197
      %v2352 = vpop.f32.mrb[0].mxu0
      %v2353 = vadd.f32 0.0, %v2352
      %v2354 = vpop.f32.mrb[0].mxu0
      %v2355 = vpop.f32.mrb[0].mxu0
      %v2356 = vadd.f32 0.0, %v2355
      %v2357 = vpop.f32.mrb[0].mxu0
      %2358 = vdwg.mxu0
      %v2359 = vadd.f32 %v1624, %v2297
      %v2360 = vadd.f32 %v1625, %v2300
      %v2361 = vadd.f32 %v1626, %v2305
      %v2362 = vadd.f32 %v1627, %v2308
      %v2363 = vadd.f32 %v1628, %v2313
      %v2364 = vadd.f32 %v1629, %v2316
      %v2365 = vadd.f32 %v1630, %v2321
      %v2366 = vadd.f32 %v1631, %v2324
      %v2367 = vadd.f32 %v1632, %v2329
      %v2368 = vadd.f32 %v1633, %v2332
      %v2369 = vadd.f32 %v1634, %v2337
      %v2370 = vadd.f32 %v1635, %v2340
      %v2371 = vadd.f32 %v1636, %v2345
      %v2372 = vadd.f32 %v1637, %v2348
      %v2373 = vadd.f32 %v1638, %v2353
      %v2374 = vadd.f32 %v1639, %v2356
      %v2375 = vld [vmem:[%s12] sm:$0x1]
      %v2377 = vlaneseq
      %v2378 = vshrl.u32 %v2377, 7
      %v2379 = vsub.s32 0, %v2378
      %v2380 = vrot.slane %v2375, %v2379
      %v2382 = vadd.f32 %v2359, %v2380
      %v2383 = vadd.f32 %v2360, %v2380
      %v2384 = vadd.f32 %v2361, %v2380
      %v2385 = vadd.f32 %v2362, %v2380
      %v2386 = vadd.f32 %v2363, %v2380
      %v2387 = vadd.f32 %v2364, %v2380
      %v2388 = vadd.f32 %v2365, %v2380
      %v2389 = vadd.f32 %v2366, %v2380
      %v2390 = vadd.f32 %v2367, %v2380
      %v2391 = vadd.f32 %v2368, %v2380
      %v2392 = vadd.f32 %v2369, %v2380
      %v2393 = vadd.f32 %v2370, %v2380
      %v2394 = vadd.f32 %v2371, %v2380
      %v2395 = vadd.f32 %v2372, %v2380
      %v2396 = vadd.f32 %v2373, %v2380
      %v2397 = vadd.f32 %v2374, %v2380
      %2398 = vst.msk [vmem:[%s494] sm:$0xff] %vm514, %v2382
      %2399 = vst.msk [vmem:[%s494 + $0x8] sm:$0xff] %vm514, %v2383
      %2400 = vst.msk [vmem:[%s494 + $0x10] sm:$0xff] %vm514, %v2384
      %2401 = vst.msk [vmem:[%s494 + $0x18] sm:$0xff] %vm514, %v2385
      %2402 = vst.msk [vmem:[%s494 + $0x20] sm:$0xff] %vm514, %v2386
      %2403 = vst.msk [vmem:[%s494 + $0x28] sm:$0xff] %vm514, %v2387
      %2404 = vst.msk [vmem:[%s494 + $0x30] sm:$0xff] %vm514, %v2388
      %2405 = vst.msk [vmem:[%s494 + $0x38] sm:$0xff] %vm514, %v2389
      %2406 = vst.msk [vmem:[%s494 + $0x40] sm:$0xff] %vm514, %v2390
      %2407 = vst.msk [vmem:[%s494 + $0x48] sm:$0xff] %vm514, %v2391
      %2408 = vst.msk [vmem:[%s494 + $0x50] sm:$0xff] %vm514, %v2392
      %2409 = vst.msk [vmem:[%s494 + $0x58] sm:$0xff] %vm514, %v2393
      %2410 = vst.msk [vmem:[%s494 + $0x60] sm:$0xff] %vm514, %v2394
      %2411 = vst.msk [vmem:[%s494 + $0x68] sm:$0xff] %vm514, %v2395
      %2412 = vst.msk [vmem:[%s494 + $0x70] sm:$0xff] %vm514, %v2396
      %2413 = vst.msk [vmem:[%s494 + $0x78] sm:$0xff] %vm514, %v2397
      %p2414 = scmp.lt.s32.totalorder %s26, 1
      %s2415 = scalar_select %p2414, %s26, 1
      %s2416 = smul.addr %s2415, 16
      %s2417 = smul.addr %s2416, 8
      %s2418 = scalar_lea.vmem %s15, %s2417
      // Predicated region
      $region88: #{tpu_custom_call.1} parent=79 // pred_check
        %p2419 = pneg %p364
      $region89: #{tpu_custom_call.1} parent=79 // pred_check_branch
        %2421 = sbr.rel (%p2419) target = $region91
      $region90: #{tpu_custom_call.1} parent=79 // pred_region
        _
      $region91: #{tpu_custom_call.1} parent=79 // pred_fallthru
        _
    $region80: #{tpu_custom_call.1} parent=5 // pred_fallthru
      _
    %p2422 = scmp.le.s32.totalorder 2, %s21
    // Predicated region
    $region92: #{tpu_custom_call.1} parent=5 // pred_check
      %p2423 = pneg %p2422
    $region93: #{tpu_custom_call.1} parent=5 // pred_check_branch
      %2425 = sbr.rel (%p2423) target = $region95
    $region94: #{tpu_custom_call.1} parent=5 // pred_region
      %s2426 = ssub.s32 %s21, 2
      // Predicated region
      $region96: #{tpu_custom_call.1} parent=94 // pred_check
        %p2427 = pneg %p370
      $region97: #{tpu_custom_call.1} parent=94 // pred_check_branch
        %2429 = sbr.rel (%p2427) target = $region99
      $region98: #{tpu_custom_call.1} parent=94 // pred_region
        %p2430 = scmp.lt.s32.totalorder %s27, 1
        %s2431 = scalar_select %p2430, %s27, 1
        %s2432 = smul.addr %s2431, 16
        %s2433 = smul.addr %s2432, 8
        %s2434 = scalar_lea.vmem %s15, %s2433
      $region99: #{tpu_custom_call.1} parent=94 // pred_fallthru
        _
    $region95: #{tpu_custom_call.1} parent=5 // pred_fallthru
      _
  $region6: #{tpu_custom_call.1} parent=0 // loop_footer
    %s25 = sadd.s32 1, %s21
  $region7: #{tpu_custom_call.1} parent=0 // loop_footer_branch
    %20 = sbr.rel target = $region3
  $region8: #{tpu_custom_call.1} parent=0 // loop_exit
    _

</llo_original>
